<compile_context>
chip_gen: v6e
topology: v6e:2x2x1
jax: 0.10.0
libtpu: 0.0.40
codegen_flags: <defaults>
</compile_context>

<pallas_src>
import jax
import jax.numpy as jnp
from jax import lax
from jax.experimental import pallas as pl
from jax.experimental.pallas import tpu as pltpu


def _lstm_fc_kernel(emb_ref, w_ih0_ref, w_hh0_ref, b0_ref, w_up_ref, b_up_ref,
                    fc_w_ref, fc_b_ref, out_ref, h_sc, c_sc, gx0_sc):
    """One (batch-tile, time-tile) grid step.

    emb_ref:   (Tt*Bt, E)  time-major-flattened embedded inputs for this tile
    w_ih0_ref: (E, 4H)     layer-0 input weights          (gate order i|f|o|g)
    w_hh0_ref: (H, 4H)     layer-0 recurrent weights
    b0_ref:    (1, 4H)     layer-0 combined bias (b_ih + b_hh)
    w_up_ref:  (max(L-1,1), 2H, 4H)  layers>=1 fused [W_ih; W_hh]
    b_up_ref:  (max(L-1,1), 1, 4H)   layers>=1 combined bias
    fc_w_ref:  (H, C); fc_b_ref: (1, C)
    out_ref:   (Bt, C)
    h_sc/c_sc: (L, Bt, H)  hidden / cell state, persistent across time tiles
    gx0_sc:    (Tt*Bt, 4H) precomputed layer-0 input projection
    """
    L, Bt, H = h_sc.shape
    H4 = 4 * H
    Tt = emb_ref.shape[0] // Bt

    t_blk = pl.program_id(1)

    # zero-initialized (h0, c0) at the first time tile (nn.LSTM default)
    @pl.when(t_blk == 0)
    def _():
        h_sc[...] = jnp.zeros_like(h_sc)
        c_sc[...] = jnp.zeros_like(c_sc)

    # hoisted per-tile weight loads & bias broadcasts (not per timestep)
    w_hh0 = w_hh0_ref[...]
    w_up = [w_up_ref[l] for l in range(L - 1)]
    b_up = [jnp.broadcast_to(b_up_ref[l], (Bt, H4)) for l in range(L - 1)]

    # layer-0 input projection for the whole time tile: ONE pipelined matmul
    # (removes Tt tiny matmuls from the serial recurrence path)
    gx0_sc[...] = (jnp.dot(emb_ref[...], w_ih0_ref[...],
                           preferred_element_type=jnp.float32) + b0_ref[...])

    def _cell(gates, c_prev):
        # fused gate layout [i | f | o | g]: one 3H-wide sigmoid + one tanh
        ifo = jax.nn.sigmoid(gates[:, :3 * H])
        g = jnp.tanh(gates[:, 3 * H:])
        i, f, o = ifo[:, :H], ifo[:, H:2 * H], ifo[:, 2 * H:]
        c_new = f * c_prev + i * g
        return o * jnp.tanh(c_new), c_new

    @pl.loop(0, Tt, unroll=(Tt <= 32))
    def _(t):
        # layer 0: only the recurrent matmul sits on the serial critical path
        gates = (gx0_sc[pl.ds(t * Bt, Bt), :]
                 + jnp.dot(h_sc[0], w_hh0, preferred_element_type=jnp.float32))
        h_new, c_new = _cell(gates, c_sc[0])
        h_sc[0] = h_new
        c_sc[0] = c_new
        x = h_new
        # layers >= 1: single fused [x, h_prev] @ [W_ih; W_hh] matmul per layer
        for l in range(1, L):
            xh = jnp.concatenate([x, h_sc[l]], axis=-1)            # (Bt, 2H)
            gates = (jnp.dot(xh, w_up[l - 1],
                             preferred_element_type=jnp.float32) + b_up[l - 1])
            h_new, c_new = _cell(gates, c_sc[l])
            h_sc[l] = h_new
            c_sc[l] = c_new
            x = h_new
        # TODO(synk): nn.LSTM inter-layer dropout is train-mode only; identity here (eval semantics).

    # final fc on the top-layer hidden state of the LAST timestep
    @pl.when(t_blk == pl.num_programs(1) - 1)
    def _():
        out_ref[...] = (jnp.dot(h_sc[L - 1], fc_w_ref[...],
                                preferred_element_type=jnp.float32)
                        + fc_b_ref[...])


def dna_classifier_forward(tokens, params, *, b_tile=None, t_tile=None):
    """tokens: (B, T) int32 -> logits (B, num_classes) f32.

    params holds PyTorch-layout weights (see init_params); this wrapper does
    the weight-prep (transpose, gate reorder, bias combine, layer fusion) and
    the embedding gather, then runs the recurrence in a single Pallas kernel.
    """
    emb_table = params["embedding"]
    w_ih, w_hh = params["w_ih"], params["w_hh"]
    b_ih, b_hh = params["b_ih"], params["b_hh"]
    fc_w, fc_b = params["fc_w"], params["fc_b"]

    B, T = tokens.shape
    E = emb_table.shape[1]
    L = len(w_ih)
    H4, H = w_hh[0].shape
    C = fc_w.shape[0]

    b_tile = B if b_tile is None else b_tile
    t_tile = T if t_tile is None else t_tile
    assert B % b_tile == 0 and T % t_tile == 0
    nb, nt = B // b_tile, T // t_tile
    blk = t_tile * b_tile

    # gate reorder: PyTorch [i|f|g|o] -> kernel [i|f|o|g] (contiguous sigmoid)
    perm = jnp.concatenate([jnp.arange(0, 2 * H), jnp.arange(3 * H, 4 * H),
                            jnp.arange(2 * H, 3 * H)])

    # layer 0 kept separate so embedding_dim != hidden_dim is handled exactly
    w_ih0 = w_ih[0].T[:, perm]                               # (E, 4H)
    w_hh0 = w_hh[0].T[:, perm]                               # (H, 4H)
    b0 = (b_ih[0] + b_hh[0])[perm][None, :]                  # (1, 4H)

    if L > 1:
        w_up = jnp.stack(
            [jnp.concatenate([w_ih[l].T, w_hh[l].T], axis=0)[:, perm]
             for l in range(1, L)])                          # (L-1, 2H, 4H)
        b_up = jnp.stack(
            [((b_ih[l] + b_hh[l])[perm])[None, :] for l in range(1, L)])
    else:  # dummy (never read by the kernel when L == 1)
        w_up = jnp.zeros((1, 2 * H, H4), jnp.float32)
        b_up = jnp.zeros((1, 1, H4), jnp.float32)
    n_up = w_up.shape[0]

    fc_w_k = fc_w.T                                          # (H, C)
    fc_b_k = fc_b[None, :]                                   # (1, C)

    # embedding lookup (glue) + per-batch-tile time-major flattening so the
    # kernel's layer-0 projection is one lane-dense 2-D matmul (no in-kernel
    # reshape/transpose needed).
    # TODO(synk): for very long sequences, gather in-kernel from SMEM tokens to
    # avoid this HBM round trip; bf16 weight cast would further help v6e/v7x.
    emb = jnp.take(emb_table, tokens, axis=0)                # (B, T, E)
    emb4 = (emb.reshape(nb, b_tile, T, E)
               .transpose(0, 2, 1, 3)                        # (nb, T, b_tile, E)
               .reshape(nb, T * b_tile, E))

    return pl.pallas_call(
        _lstm_fc_kernel,
        out_shape=jax.ShapeDtypeStruct((B, C), jnp.float32),
        grid=(nb, nt),
        in_specs=[
            pl.BlockSpec((None, blk, E), lambda b, t: (b, t, 0)),      # emb
            pl.BlockSpec((E, H4), lambda b, t: (0, 0)),                # w_ih0
            pl.BlockSpec((H, H4), lambda b, t: (0, 0)),                # w_hh0
            pl.BlockSpec((1, H4), lambda b, t: (0, 0)),                # b0
            pl.BlockSpec((n_up, 2 * H, H4), lambda b, t: (0, 0, 0)),   # w_up
            pl.BlockSpec((n_up, 1, H4), lambda b, t: (0, 0, 0)),       # b_up
            pl.BlockSpec((H, C), lambda b, t: (0, 0)),                 # fc_w
            pl.BlockSpec((1, C), lambda b, t: (0, 0)),                 # fc_b
        ],
        out_specs=pl.BlockSpec((b_tile, C), lambda b, t: (b, 0)),
        scratch_shapes=[
            pltpu.VMEM((L, b_tile, H), jnp.float32),   # h state
            pltpu.VMEM((L, b_tile, H), jnp.float32),   # c state
            pltpu.VMEM((blk, H4), jnp.float32),        # layer-0 input proj
        ],
        compiler_params=pltpu.CompilerParams(
            dimension_semantics=("parallel", "arbitrary")),
    )(emb4, w_ih0, w_hh0, b0, w_up, b_up, fc_w_k, fc_b_k)


def init_params(key, vocab_size, embedding_dim, hidden_dim, num_layers,
                num_classes):
    """PyTorch-layout parameters: nn.Embedding / nn.LSTM / nn.Linear."""
    E, H, L, C = embedding_dim, hidden_dim, num_layers, num_classes
    keys = jax.random.split(key, 3 + 4 * L)
    bound = 1.0 / jnp.sqrt(jnp.float32(H))
    emb_table = jax.random.normal(keys[0], (vocab_size, E), jnp.float32)
    w_ih, w_hh, b_ih, b_hh = [], [], [], []
    for l in range(L):
        in_dim = E if l == 0 else H
        kk = keys[3 + 4 * l: 3 + 4 * (l + 1)]
        w_ih.append(jax.random.uniform(kk[0], (4 * H, in_dim), jnp.float32,
                                       -bound, bound))
        w_hh.append(jax.random.uniform(kk[1], (4 * H, H), jnp.float32,
                                       -bound, bound))
        b_ih.append(jax.random.uniform(kk[2], (4 * H,), jnp.float32,
                                       -bound, bound))
        b_hh.append(jax.random.uniform(kk[3], (4 * H,), jnp.float32,
                                       -bound, bound))
    fc_w = jax.random.uniform(keys[1], (C, H), jnp.float32, -bound, bound)
    fc_b = jax.random.uniform(keys[2], (C,), jnp.float32, -bound, bound)
    return dict(embedding=emb_table, w_ih=w_ih, w_hh=w_hh, b_ih=b_ih,
                b_hh=b_hh, fc_w=fc_w, fc_b=fc_b)


def ref_forward(tokens, params):
    """Pure-JAX reference faithful to nn.Embedding -> nn.LSTM -> nn.Linear."""
    emb_table = params["embedding"]
    w_ih, w_hh = params["w_ih"], params["w_hh"]
    b_ih, b_hh = params["b_ih"], params["b_hh"]
    fc_w, fc_b = params["fc_w"], params["fc_b"]
    L = len(w_ih)
    H = w_hh[0].shape[1]

    x = jnp.take(emb_table, tokens, axis=0)            # (B, T, E)
    B = x.shape[0]
    xs = jnp.transpose(x, (1, 0, 2))                   # (T, B, E)
    h0 = jnp.zeros((L, B, H), jnp.float32)
    c0 = jnp.zeros((L, B, H), jnp.float32)

    def step(carry, x_t):
        h, c = carry
        inp = x_t
        new_h, new_c = [], []
        for l in range(L):
            gates = inp @ w_ih[l].T + h[l] @ w_hh[l].T + b_ih[l] + b_hh[l]
            i = jax.nn.sigmoid(gates[:, :H])
            f = jax.nn.sigmoid(gates[:, H:2 * H])
            g = jnp.tanh(gates[:, 2 * H:3 * H])
            o = jax.nn.sigmoid(gates[:, 3 * H:])
            cn = f * c[l] + i * g
            hn = o * jnp.tanh(cn)
            new_h.append(hn)
            new_c.append(cn)
            inp = hn
        return (jnp.stack(new_h), jnp.stack(new_c)), None

    (h, _), _ = lax.scan(step, (h0, c0), xs)
    return h[-1] @ fc_w.T + fc_b


if __name__ == "__main__":
    # small shapes consistent with the module (E != H to exercise layer-0 path)
    vocab_size, embedding_dim, hidden_dim = 16, 16, 32
    num_layers, num_classes = 2, 4
    B, T = 2, 8

    key = jax.random.PRNGKey(0)
    k_params, k_tok = jax.random.split(key)
    params = init_params(k_params, vocab_size, embedding_dim, hidden_dim,
                         num_layers, num_classes)
    tokens = jax.random.randint(k_tok, (B, T), 0, vocab_size, jnp.int32)

    out = dna_classifier_forward(tokens, params)
    out = jax.block_until_ready(out)

    ref = ref_forward(tokens, params)
    assert out.shape == (B, num_classes)
    assert jnp.allclose(out, ref, atol=2e-5, rtol=2e-5), (out, ref)
    print("KERNEL_OK")
</pallas_src>

<mosaic_0001>
module attributes {stable_mosaic.version = 11 : i64} {
  func.func @_lstm_fc_kernel(%arg0: i32, %arg1: i32, %arg2: memref<1x16x16xf32, #tpu.memory_space<vmem>>, %arg3: memref<16x128xf32, #tpu.memory_space<vmem>>, %arg4: memref<32x128xf32, #tpu.memory_space<vmem>>, %arg5: memref<1x128xf32, #tpu.memory_space<vmem>>, %arg6: memref<1x64x128xf32, #tpu.memory_space<vmem>>, %arg7: memref<1x1x128xf32, #tpu.memory_space<vmem>>, %arg8: memref<32x4xf32, #tpu.memory_space<vmem>>, %arg9: memref<1x4xf32, #tpu.memory_space<vmem>>, %arg10: memref<2x4xf32, #tpu.memory_space<vmem>>, %arg11: memref<2x2x32xf32, #tpu.memory_space<vmem>>, %arg12: memref<2x2x32xf32, #tpu.memory_space<vmem>>, %arg13: memref<16x128xf32, #tpu.memory_space<vmem>>) attributes {dimension_semantics = [#tpu.dimension_semantics<parallel>, #tpu.dimension_semantics<arbitrary>], iteration_bounds = array<i64: 1, 1>, scalar_prefetch = 0 : i64, scratch_operands = 3 : i64, tpu.core_type = #tpu.core_type<tc>, window_params = [{transform_indices = @transform_0, window_bounds = array<i64: 1, 16, 16>}, {pipeline_mode = #tpu.pipeline_mode<synchronous>, transform_indices = @transform_1, window_bounds = array<i64: 16, 128>}, {pipeline_mode = #tpu.pipeline_mode<synchronous>, transform_indices = @transform_2, window_bounds = array<i64: 32, 128>}, {pipeline_mode = #tpu.pipeline_mode<synchronous>, transform_indices = @transform_3, window_bounds = array<i64: 1, 128>}, {pipeline_mode = #tpu.pipeline_mode<synchronous>, transform_indices = @transform_4, window_bounds = array<i64: 1, 64, 128>}, {pipeline_mode = #tpu.pipeline_mode<synchronous>, transform_indices = @transform_5, window_bounds = array<i64: 1, 1, 128>}, {pipeline_mode = #tpu.pipeline_mode<synchronous>, transform_indices = @transform_6, window_bounds = array<i64: 32, 4>}, {pipeline_mode = #tpu.pipeline_mode<synchronous>, transform_indices = @transform_7, window_bounds = array<i64: 1, 4>}, {transform_indices = @transform_8, window_bounds = array<i64: 2, 4>}]} {
    %c0_i32 = arith.constant 0 : i32
    %0 = arith.cmpi eq, %arg1, %c0_i32 : i32
    %1 = arith.extui %0 : i1 to i32
    %c0_i32_0 = arith.constant 0 : i32
    %2 = arith.cmpi ne, %1, %c0_i32_0 : i32
    scf.if %2 {
      %cst_275 = arith.constant 0.000000e+00 : f32
      %517 = vector.broadcast %cst_275 : f32 to vector<2x2x32xf32>
      %c0_276 = arith.constant 0 : index
      %c0_277 = arith.constant 0 : index
      %c0_278 = arith.constant 0 : index
      %518 = vector.load %arg11[%c0_276, %c0_277, %c0_278] : memref<2x2x32xf32, #tpu.memory_space<vmem>>, vector<2x2x32xf32>
      tpu.vector_store %arg11[%c0_276, %c0_277, %c0_278], %517 {strides = array<i32>} : memref<2x2x32xf32, #tpu.memory_space<vmem>>, vector<2x2x32xf32>,
      %cst_279 = arith.constant 0.000000e+00 : f32
      %519 = vector.broadcast %cst_279 : f32 to vector<2x2x32xf32>
      %c0_280 = arith.constant 0 : index
      %c0_281 = arith.constant 0 : index
      %c0_282 = arith.constant 0 : index
      %520 = vector.load %arg12[%c0_280, %c0_281, %c0_282] : memref<2x2x32xf32, #tpu.memory_space<vmem>>, vector<2x2x32xf32>
      tpu.vector_store %arg12[%c0_280, %c0_281, %c0_282], %519 {strides = array<i32>} : memref<2x2x32xf32, #tpu.memory_space<vmem>>, vector<2x2x32xf32>,
    } else {
    }
    %c0 = arith.constant 0 : index
    %c0_1 = arith.constant 0 : index
    %3 = vector.load %arg4[%c0, %c0_1] : memref<32x128xf32, #tpu.memory_space<vmem>>, vector<32x128xf32>
    %c0_2 = arith.constant 0 : index
    %c0_3 = arith.constant 0 : index
    %c0_4 = arith.constant 0 : index
    %4 = vector.load %arg6[%c0_2, %c0_3, %c0_4] : memref<1x64x128xf32, #tpu.memory_space<vmem>>, vector<1x64x128xf32>
    %5 = vector.shape_cast %4 : vector<1x64x128xf32> to vector<64x128xf32>
    %c0_5 = arith.constant 0 : index
    %c0_6 = arith.constant 0 : index
    %c0_7 = arith.constant 0 : index
    %6 = vector.load %arg7[%c0_5, %c0_6, %c0_7] : memref<1x1x128xf32, #tpu.memory_space<vmem>>, vector<1x1x128xf32>
    %7 = vector.shape_cast %6 : vector<1x1x128xf32> to vector<1x128xf32>
    %8 = vector.shape_cast %7 : vector<1x128xf32> to vector<1x128xf32>
    %9 = vector.broadcast %8 : vector<1x128xf32> to vector<2x128xf32>
    %c0_8 = arith.constant 0 : index
    %c0_9 = arith.constant 0 : index
    %c0_10 = arith.constant 0 : index
    %10 = vector.load %arg2[%c0_8, %c0_9, %c0_10] : memref<1x16x16xf32, #tpu.memory_space<vmem>>, vector<1x16x16xf32>
    %11 = vector.shape_cast %10 : vector<1x16x16xf32> to vector<16x16xf32>
    %c0_11 = arith.constant 0 : index
    %c0_12 = arith.constant 0 : index
    %12 = vector.load %arg3[%c0_11, %c0_12] : memref<16x128xf32, #tpu.memory_space<vmem>>, vector<16x128xf32>
    %cst = arith.constant dense<0.000000e+00> : vector<16x128xf32>
    %13 = tpu.matmul %11, %12, %cst {dimension_numbers = #tpu.dot_dimension_numbers<[1], [0], [0], [1], [0, 0, 1, 1], [], []>} : vector<16x16xf32>, vector<16x128xf32>, vector<16x128xf32> -> vector<16x128xf32>
    %c0_13 = arith.constant 0 : index
    %c0_14 = arith.constant 0 : index
    %14 = vector.load %arg5[%c0_13, %c0_14] : memref<1x128xf32, #tpu.memory_space<vmem>>, vector<1x128xf32>
    %15 = vector.broadcast %14 : vector<1x128xf32> to vector<16x128xf32>
    %16 = arith.addf %13, %15 : vector<16x128xf32>
    %c0_15 = arith.constant 0 : index
    %c0_16 = arith.constant 0 : index
    %17 = vector.load %arg13[%c0_15, %c0_16] : memref<16x128xf32, #tpu.memory_space<vmem>>, vector<16x128xf32>
    tpu.vector_store %arg13[%c0_15, %c0_16], %16 {strides = array<i32>} : memref<16x128xf32, #tpu.memory_space<vmem>>, vector<16x128xf32>,
    %c0_i32_17 = arith.constant 0 : i32
    %c1_i32 = arith.constant 1 : i32
    %18 = arith.muli %c0_i32_17, %c1_i32 : i32
    %c0_i32_18 = arith.constant 0 : i32
    %19 = arith.addi %c0_i32_18, %18 : i32
    %c2_i32 = arith.constant 2 : i32
    %20 = arith.muli %19, %c2_i32 : i32
    %21 = arith.index_cast %20 : i32 to index
    %c0_19 = arith.constant 0 : index
    %22 = vector.load %arg13[%21, %c0_19] : memref<16x128xf32, #tpu.memory_space<vmem>>, vector<2x128xf32>
    %c0_20 = arith.constant 0 : index
    %c0_21 = arith.constant 0 : index
    %c0_22 = arith.constant 0 : index
    %23 = vector.load %arg11[%c0_20, %c0_21, %c0_22] : memref<2x2x32xf32, #tpu.memory_space<vmem>>, vector<1x2x32xf32>
    %24 = vector.shape_cast %23 : vector<1x2x32xf32> to vector<2x32xf32>
    %cst_23 = arith.constant dense<0.000000e+00> : vector<2x128xf32>
    %25 = tpu.matmul %24, %3, %cst_23 {dimension_numbers = #tpu.dot_dimension_numbers<[1], [0], [0], [1], [0, 0, 1, 1], [], []>} : vector<2x32xf32>, vector<32x128xf32>, vector<2x128xf32> -> vector<2x128xf32>
    %26 = arith.addf %22, %25 : vector<2x128xf32>
    %c0_24 = arith.constant 0 : index
    %c0_25 = arith.constant 0 : index
    %c0_26 = arith.constant 0 : index
    %27 = vector.load %arg12[%c0_24, %c0_25, %c0_26] : memref<2x2x32xf32, #tpu.memory_space<vmem>>, vector<1x2x32xf32>
    %28 = vector.shape_cast %27 : vector<1x2x32xf32> to vector<2x32xf32>
    %29 = vector.extract_strided_slice %26 {offsets = [0, 0], sizes = [2, 96], strides = [1, 1]} : vector<2x128xf32> to vector<2x96xf32>
    %30 = arith.negf %29 : vector<2x96xf32>
    %31 = math.exp %30 : vector<2x96xf32>
    %cst_27 = arith.constant 1.000000e+00 : f32
    %32 = vector.broadcast %cst_27 : f32 to vector<2x96xf32>
    %33 = arith.addf %32, %31 : vector<2x96xf32>
    %34 = arith.divf %32, %33 : vector<2x96xf32>
    %35 = vector.extract_strided_slice %26 {offsets = [0, 96], sizes = [2, 32], strides = [1, 1]} : vector<2x128xf32> to vector<2x32xf32>
    %36 = math.tanh %35 : vector<2x32xf32>
    %37 = vector.extract_strided_slice %34 {offsets = [0, 0], sizes = [2, 32], strides = [1, 1]} : vector<2x96xf32> to vector<2x32xf32>
    %38 = vector.extract_strided_slice %34 {offsets = [0, 32], sizes = [2, 32], strides = [1, 1]} : vector<2x96xf32> to vector<2x32xf32>
    %39 = vector.extract_strided_slice %34 {offsets = [0, 64], sizes = [2, 32], strides = [1, 1]} : vector<2x96xf32> to vector<2x32xf32>
    %40 = arith.mulf %38, %28 : vector<2x32xf32>
    %41 = arith.mulf %37, %36 : vector<2x32xf32>
    %42 = arith.addf %40, %41 : vector<2x32xf32>
    %43 = math.tanh %42 : vector<2x32xf32>
    %44 = arith.mulf %39, %43 : vector<2x32xf32>
    %c0_28 = arith.constant 0 : index
    %c0_29 = arith.constant 0 : index
    %c0_30 = arith.constant 0 : index
    %45 = vector.load %arg11[%c0_28, %c0_29, %c0_30] : memref<2x2x32xf32, #tpu.memory_space<vmem>>, vector<1x2x32xf32>
    %46 = vector.shape_cast %45 : vector<1x2x32xf32> to vector<2x32xf32>
    %47 = vector.shape_cast %44 : vector<2x32xf32> to vector<1x2x32xf32>
    tpu.vector_store %arg11[%c0_28, %c0_29, %c0_30], %47 {strides = array<i32>} : memref<2x2x32xf32, #tpu.memory_space<vmem>>, vector<1x2x32xf32>,
    %c0_31 = arith.constant 0 : index
    %c0_32 = arith.constant 0 : index
    %c0_33 = arith.constant 0 : index
    %48 = vector.load %arg12[%c0_31, %c0_32, %c0_33] : memref<2x2x32xf32, #tpu.memory_space<vmem>>, vector<1x2x32xf32>
    %49 = vector.shape_cast %48 : vector<1x2x32xf32> to vector<2x32xf32>
    %50 = vector.shape_cast %42 : vector<2x32xf32> to vector<1x2x32xf32>
    tpu.vector_store %arg12[%c0_31, %c0_32, %c0_33], %50 {strides = array<i32>} : memref<2x2x32xf32, #tpu.memory_space<vmem>>, vector<1x2x32xf32>,
    %c1 = arith.constant 1 : index
    %c0_34 = arith.constant 0 : index
    %c0_35 = arith.constant 0 : index
    %51 = vector.load %arg11[%c1, %c0_34, %c0_35] : memref<2x2x32xf32, #tpu.memory_space<vmem>>, vector<1x2x32xf32>
    %52 = vector.shape_cast %51 : vector<1x2x32xf32> to vector<2x32xf32>
    %53 = tpu.concatenate %44, %52 in 1 : vector<2x32xf32>, vector<2x32xf32> -> vector<2x64xf32>
    %cst_36 = arith.constant dense<0.000000e+00> : vector<2x128xf32>
    %54 = tpu.matmul %53, %5, %cst_36 {dimension_numbers = #tpu.dot_dimension_numbers<[1], [0], [0], [1], [0, 0, 1, 1], [], []>} : vector<2x64xf32>, vector<64x128xf32>, vector<2x128xf32> -> vector<2x128xf32>
    %55 = arith.addf %54, %9 : vector<2x128xf32>
    %c1_37 = arith.constant 1 : index
    %c0_38 = arith.constant 0 : index
    %c0_39 = arith.constant 0 : index
    %56 = vector.load %arg12[%c1_37, %c0_38, %c0_39] : memref<2x2x32xf32, #tpu.memory_space<vmem>>, vector<1x2x32xf32>
    %57 = vector.shape_cast %56 : vector<1x2x32xf32> to vector<2x32xf32>
    %58 = vector.extract_strided_slice %55 {offsets = [0, 0], sizes = [2, 96], strides = [1, 1]} : vector<2x128xf32> to vector<2x96xf32>
    %59 = arith.negf %58 : vector<2x96xf32>
    %60 = math.exp %59 : vector<2x96xf32>
    %cst_40 = arith.constant 1.000000e+00 : f32
    %61 = vector.broadcast %cst_40 : f32 to vector<2x96xf32>
    %62 = arith.addf %61, %60 : vector<2x96xf32>
    %63 = arith.divf %61, %62 : vector<2x96xf32>
    %64 = vector.extract_strided_slice %55 {offsets = [0, 96], sizes = [2, 32], strides = [1, 1]} : vector<2x128xf32> to vector<2x32xf32>
    %65 = math.tanh %64 : vector<2x32xf32>
    %66 = vector.extract_strided_slice %63 {offsets = [0, 0], sizes = [2, 32], strides = [1, 1]} : vector<2x96xf32> to vector<2x32xf32>
    %67 = vector.extract_strided_slice %63 {offsets = [0, 32], sizes = [2, 32], strides = [1, 1]} : vector<2x96xf32> to vector<2x32xf32>
    %68 = vector.extract_strided_slice %63 {offsets = [0, 64], sizes = [2, 32], strides = [1, 1]} : vector<2x96xf32> to vector<2x32xf32>
    %69 = arith.mulf %67, %57 : vector<2x32xf32>
    %70 = arith.mulf %66, %65 : vector<2x32xf32>
    %71 = arith.addf %69, %70 : vector<2x32xf32>
    %72 = math.tanh %71 : vector<2x32xf32>
    %73 = arith.mulf %68, %72 : vector<2x32xf32>
    %c1_41 = arith.constant 1 : index
    %c0_42 = arith.constant 0 : index
    %c0_43 = arith.constant 0 : index
    %74 = vector.load %arg11[%c1_41, %c0_42, %c0_43] : memref<2x2x32xf32, #tpu.memory_space<vmem>>, vector<1x2x32xf32>
    %75 = vector.shape_cast %74 : vector<1x2x32xf32> to vector<2x32xf32>
    %76 = vector.shape_cast %73 : vector<2x32xf32> to vector<1x2x32xf32>
    tpu.vector_store %arg11[%c1_41, %c0_42, %c0_43], %76 {strides = array<i32>} : memref<2x2x32xf32, #tpu.memory_space<vmem>>, vector<1x2x32xf32>,
    %c1_44 = arith.constant 1 : index
    %c0_45 = arith.constant 0 : index
    %c0_46 = arith.constant 0 : index
    %77 = vector.load %arg12[%c1_44, %c0_45, %c0_46] : memref<2x2x32xf32, #tpu.memory_space<vmem>>, vector<1x2x32xf32>
    %78 = vector.shape_cast %77 : vector<1x2x32xf32> to vector<2x32xf32>
    %79 = vector.shape_cast %71 : vector<2x32xf32> to vector<1x2x32xf32>
    tpu.vector_store %arg12[%c1_44, %c0_45, %c0_46], %79 {strides = array<i32>} : memref<2x2x32xf32, #tpu.memory_space<vmem>>, vector<1x2x32xf32>,
    %c1_i32_47 = arith.constant 1 : i32
    %c1_i32_48 = arith.constant 1 : i32
    %80 = arith.muli %c1_i32_47, %c1_i32_48 : i32
    %c0_i32_49 = arith.constant 0 : i32
    %81 = arith.addi %c0_i32_49, %80 : i32
    %c2_i32_50 = arith.constant 2 : i32
    %82 = arith.muli %81, %c2_i32_50 : i32
    %83 = arith.index_cast %82 : i32 to index
    %c0_51 = arith.constant 0 : index
    %84 = vector.load %arg13[%83, %c0_51] : memref<16x128xf32, #tpu.memory_space<vmem>>, vector<2x128xf32>
    %c0_52 = arith.constant 0 : index
    %c0_53 = arith.constant 0 : index
    %c0_54 = arith.constant 0 : index
    %85 = vector.load %arg11[%c0_52, %c0_53, %c0_54] : memref<2x2x32xf32, #tpu.memory_space<vmem>>, vector<1x2x32xf32>
    %86 = vector.shape_cast %85 : vector<1x2x32xf32> to vector<2x32xf32>
    %cst_55 = arith.constant dense<0.000000e+00> : vector<2x128xf32>
    %87 = tpu.matmul %86, %3, %cst_55 {dimension_numbers = #tpu.dot_dimension_numbers<[1], [0], [0], [1], [0, 0, 1, 1], [], []>} : vector<2x32xf32>, vector<32x128xf32>, vector<2x128xf32> -> vector<2x128xf32>
    %88 = arith.addf %84, %87 : vector<2x128xf32>
    %c0_56 = arith.constant 0 : index
    %c0_57 = arith.constant 0 : index
    %c0_58 = arith.constant 0 : index
    %89 = vector.load %arg12[%c0_56, %c0_57, %c0_58] : memref<2x2x32xf32, #tpu.memory_space<vmem>>, vector<1x2x32xf32>
    %90 = vector.shape_cast %89 : vector<1x2x32xf32> to vector<2x32xf32>
    %91 = vector.extract_strided_slice %88 {offsets = [0, 0], sizes = [2, 96], strides = [1, 1]} : vector<2x128xf32> to vector<2x96xf32>
    %92 = arith.negf %91 : vector<2x96xf32>
    %93 = math.exp %92 : vector<2x96xf32>
    %cst_59 = arith.constant 1.000000e+00 : f32
    %94 = vector.broadcast %cst_59 : f32 to vector<2x96xf32>
    %95 = arith.addf %94, %93 : vector<2x96xf32>
    %96 = arith.divf %94, %95 : vector<2x96xf32>
    %97 = vector.extract_strided_slice %88 {offsets = [0, 96], sizes = [2, 32], strides = [1, 1]} : vector<2x128xf32> to vector<2x32xf32>
    %98 = math.tanh %97 : vector<2x32xf32>
    %99 = vector.extract_strided_slice %96 {offsets = [0, 0], sizes = [2, 32], strides = [1, 1]} : vector<2x96xf32> to vector<2x32xf32>
    %100 = vector.extract_strided_slice %96 {offsets = [0, 32], sizes = [2, 32], strides = [1, 1]} : vector<2x96xf32> to vector<2x32xf32>
    %101 = vector.extract_strided_slice %96 {offsets = [0, 64], sizes = [2, 32], strides = [1, 1]} : vector<2x96xf32> to vector<2x32xf32>
    %102 = arith.mulf %100, %90 : vector<2x32xf32>
    %103 = arith.mulf %99, %98 : vector<2x32xf32>
    %104 = arith.addf %102, %103 : vector<2x32xf32>
    %105 = math.tanh %104 : vector<2x32xf32>
    %106 = arith.mulf %101, %105 : vector<2x32xf32>
    %c0_60 = arith.constant 0 : index
    %c0_61 = arith.constant 0 : index
    %c0_62 = arith.constant 0 : index
    %107 = vector.load %arg11[%c0_60, %c0_61, %c0_62] : memref<2x2x32xf32, #tpu.memory_space<vmem>>, vector<1x2x32xf32>
    %108 = vector.shape_cast %107 : vector<1x2x32xf32> to vector<2x32xf32>
    %109 = vector.shape_cast %106 : vector<2x32xf32> to vector<1x2x32xf32>
    tpu.vector_store %arg11[%c0_60, %c0_61, %c0_62], %109 {strides = array<i32>} : memref<2x2x32xf32, #tpu.memory_space<vmem>>, vector<1x2x32xf32>,
    %c0_63 = arith.constant 0 : index
    %c0_64 = arith.constant 0 : index
    %c0_65 = arith.constant 0 : index
    %110 = vector.load %arg12[%c0_63, %c0_64, %c0_65] : memref<2x2x32xf32, #tpu.memory_space<vmem>>, vector<1x2x32xf32>
    %111 = vector.shape_cast %110 : vector<1x2x32xf32> to vector<2x32xf32>
    %112 = vector.shape_cast %104 : vector<2x32xf32> to vector<1x2x32xf32>
    tpu.vector_store %arg12[%c0_63, %c0_64, %c0_65], %112 {strides = array<i32>} : memref<2x2x32xf32, #tpu.memory_space<vmem>>, vector<1x2x32xf32>,
    %c1_66 = arith.constant 1 : index
    %c0_67 = arith.constant 0 : index
    %c0_68 = arith.constant 0 : index
    %113 = vector.load %arg11[%c1_66, %c0_67, %c0_68] : memref<2x2x32xf32, #tpu.memory_space<vmem>>, vector<1x2x32xf32>
    %114 = vector.shape_cast %113 : vector<1x2x32xf32> to vector<2x32xf32>
    %115 = tpu.concatenate %106, %114 in 1 : vector<2x32xf32>, vector<2x32xf32> -> vector<2x64xf32>
    %cst_69 = arith.constant dense<0.000000e+00> : vector<2x128xf32>
    %116 = tpu.matmul %115, %5, %cst_69 {dimension_numbers = #tpu.dot_dimension_numbers<[1], [0], [0], [1], [0, 0, 1, 1], [], []>} : vector<2x64xf32>, vector<64x128xf32>, vector<2x128xf32> -> vector<2x128xf32>
    %117 = arith.addf %116, %9 : vector<2x128xf32>
    %c1_70 = arith.constant 1 : index
    %c0_71 = arith.constant 0 : index
    %c0_72 = arith.constant 0 : index
    %118 = vector.load %arg12[%c1_70, %c0_71, %c0_72] : memref<2x2x32xf32, #tpu.memory_space<vmem>>, vector<1x2x32xf32>
    %119 = vector.shape_cast %118 : vector<1x2x32xf32> to vector<2x32xf32>
    %120 = vector.extract_strided_slice %117 {offsets = [0, 0], sizes = [2, 96], strides = [1, 1]} : vector<2x128xf32> to vector<2x96xf32>
    %121 = arith.negf %120 : vector<2x96xf32>
    %122 = math.exp %121 : vector<2x96xf32>
    %cst_73 = arith.constant 1.000000e+00 : f32
    %123 = vector.broadcast %cst_73 : f32 to vector<2x96xf32>
    %124 = arith.addf %123, %122 : vector<2x96xf32>
    %125 = arith.divf %123, %124 : vector<2x96xf32>
    %126 = vector.extract_strided_slice %117 {offsets = [0, 96], sizes = [2, 32], strides = [1, 1]} : vector<2x128xf32> to vector<2x32xf32>
    %127 = math.tanh %126 : vector<2x32xf32>
    %128 = vector.extract_strided_slice %125 {offsets = [0, 0], sizes = [2, 32], strides = [1, 1]} : vector<2x96xf32> to vector<2x32xf32>
    %129 = vector.extract_strided_slice %125 {offsets = [0, 32], sizes = [2, 32], strides = [1, 1]} : vector<2x96xf32> to vector<2x32xf32>
    %130 = vector.extract_strided_slice %125 {offsets = [0, 64], sizes = [2, 32], strides = [1, 1]} : vector<2x96xf32> to vector<2x32xf32>
    %131 = arith.mulf %129, %119 : vector<2x32xf32>
    %132 = arith.mulf %128, %127 : vector<2x32xf32>
    %133 = arith.addf %131, %132 : vector<2x32xf32>
    %134 = math.tanh %133 : vector<2x32xf32>
    %135 = arith.mulf %130, %134 : vector<2x32xf32>
    %c1_74 = arith.constant 1 : index
    %c0_75 = arith.constant 0 : index
    %c0_76 = arith.constant 0 : index
    %136 = vector.load %arg11[%c1_74, %c0_75, %c0_76] : memref<2x2x32xf32, #tpu.memory_space<vmem>>, vector<1x2x32xf32>
    %137 = vector.shape_cast %136 : vector<1x2x32xf32> to vector<2x32xf32>
    %138 = vector.shape_cast %135 : vector<2x32xf32> to vector<1x2x32xf32>
    tpu.vector_store %arg11[%c1_74, %c0_75, %c0_76], %138 {strides = array<i32>} : memref<2x2x32xf32, #tpu.memory_space<vmem>>, vector<1x2x32xf32>,
    %c1_77 = arith.constant 1 : index
    %c0_78 = arith.constant 0 : index
    %c0_79 = arith.constant 0 : index
    %139 = vector.load %arg12[%c1_77, %c0_78, %c0_79] : memref<2x2x32xf32, #tpu.memory_space<vmem>>, vector<1x2x32xf32>
    %140 = vector.shape_cast %139 : vector<1x2x32xf32> to vector<2x32xf32>
    %141 = vector.shape_cast %133 : vector<2x32xf32> to vector<1x2x32xf32>
    tpu.vector_store %arg12[%c1_77, %c0_78, %c0_79], %141 {strides = array<i32>} : memref<2x2x32xf32, #tpu.memory_space<vmem>>, vector<1x2x32xf32>,
    %c2_i32_80 = arith.constant 2 : i32
    %c1_i32_81 = arith.constant 1 : i32
    %142 = arith.muli %c2_i32_80, %c1_i32_81 : i32
    %c0_i32_82 = arith.constant 0 : i32
    %143 = arith.addi %c0_i32_82, %142 : i32
    %c2_i32_83 = arith.constant 2 : i32
    %144 = arith.muli %143, %c2_i32_83 : i32
    %145 = arith.index_cast %144 : i32 to index
    %c0_84 = arith.constant 0 : index
    %146 = vector.load %arg13[%145, %c0_84] : memref<16x128xf32, #tpu.memory_space<vmem>>, vector<2x128xf32>
    %c0_85 = arith.constant 0 : index
    %c0_86 = arith.constant 0 : index
    %c0_87 = arith.constant 0 : index
    %147 = vector.load %arg11[%c0_85, %c0_86, %c0_87] : memref<2x2x32xf32, #tpu.memory_space<vmem>>, vector<1x2x32xf32>
    %148 = vector.shape_cast %147 : vector<1x2x32xf32> to vector<2x32xf32>
    %cst_88 = arith.constant dense<0.000000e+00> : vector<2x128xf32>
    %149 = tpu.matmul %148, %3, %cst_88 {dimension_numbers = #tpu.dot_dimension_numbers<[1], [0], [0], [1], [0, 0, 1, 1], [], []>} : vector<2x32xf32>, vector<32x128xf32>, vector<2x128xf32> -> vector<2x128xf32>
    %150 = arith.addf %146, %149 : vector<2x128xf32>
    %c0_89 = arith.constant 0 : index
    %c0_90 = arith.constant 0 : index
    %c0_91 = arith.constant 0 : index
    %151 = vector.load %arg12[%c0_89, %c0_90, %c0_91] : memref<2x2x32xf32, #tpu.memory_space<vmem>>, vector<1x2x32xf32>
    %152 = vector.shape_cast %151 : vector<1x2x32xf32> to vector<2x32xf32>
    %153 = vector.extract_strided_slice %150 {offsets = [0, 0], sizes = [2, 96], strides = [1, 1]} : vector<2x128xf32> to vector<2x96xf32>
    %154 = arith.negf %153 : vector<2x96xf32>
    %155 = math.exp %154 : vector<2x96xf32>
    %cst_92 = arith.constant 1.000000e+00 : f32
    %156 = vector.broadcast %cst_92 : f32 to vector<2x96xf32>
    %157 = arith.addf %156, %155 : vector<2x96xf32>
    %158 = arith.divf %156, %157 : vector<2x96xf32>
    %159 = vector.extract_strided_slice %150 {offsets = [0, 96], sizes = [2, 32], strides = [1, 1]} : vector<2x128xf32> to vector<2x32xf32>
    %160 = math.tanh %159 : vector<2x32xf32>
    %161 = vector.extract_strided_slice %158 {offsets = [0, 0], sizes = [2, 32], strides = [1, 1]} : vector<2x96xf32> to vector<2x32xf32>
    %162 = vector.extract_strided_slice %158 {offsets = [0, 32], sizes = [2, 32], strides = [1, 1]} : vector<2x96xf32> to vector<2x32xf32>
    %163 = vector.extract_strided_slice %158 {offsets = [0, 64], sizes = [2, 32], strides = [1, 1]} : vector<2x96xf32> to vector<2x32xf32>
    %164 = arith.mulf %162, %152 : vector<2x32xf32>
    %165 = arith.mulf %161, %160 : vector<2x32xf32>
    %166 = arith.addf %164, %165 : vector<2x32xf32>
    %167 = math.tanh %166 : vector<2x32xf32>
    %168 = arith.mulf %163, %167 : vector<2x32xf32>
    %c0_93 = arith.constant 0 : index
    %c0_94 = arith.constant 0 : index
    %c0_95 = arith.constant 0 : index
    %169 = vector.load %arg11[%c0_93, %c0_94, %c0_95] : memref<2x2x32xf32, #tpu.memory_space<vmem>>, vector<1x2x32xf32>
    %170 = vector.shape_cast %169 : vector<1x2x32xf32> to vector<2x32xf32>
    %171 = vector.shape_cast %168 : vector<2x32xf32> to vector<1x2x32xf32>
    tpu.vector_store %arg11[%c0_93, %c0_94, %c0_95], %171 {strides = array<i32>} : memref<2x2x32xf32, #tpu.memory_space<vmem>>, vector<1x2x32xf32>,
    %c0_96 = arith.constant 0 : index
    %c0_97 = arith.constant 0 : index
    %c0_98 = arith.constant 0 : index
    %172 = vector.load %arg12[%c0_96, %c0_97, %c0_98] : memref<2x2x32xf32, #tpu.memory_space<vmem>>, vector<1x2x32xf32>
    %173 = vector.shape_cast %172 : vector<1x2x32xf32> to vector<2x32xf32>
    %174 = vector.shape_cast %166 : vector<2x32xf32> to vector<1x2x32xf32>
    tpu.vector_store %arg12[%c0_96, %c0_97, %c0_98], %174 {strides = array<i32>} : memref<2x2x32xf32, #tpu.memory_space<vmem>>, vector<1x2x32xf32>,
    %c1_99 = arith.constant 1 : index
    %c0_100 = arith.constant 0 : index
    %c0_101 = arith.constant 0 : index
    %175 = vector.load %arg11[%c1_99, %c0_100, %c0_101] : memref<2x2x32xf32, #tpu.memory_space<vmem>>, vector<1x2x32xf32>
    %176 = vector.shape_cast %175 : vector<1x2x32xf32> to vector<2x32xf32>
    %177 = tpu.concatenate %168, %176 in 1 : vector<2x32xf32>, vector<2x32xf32> -> vector<2x64xf32>
    %cst_102 = arith.constant dense<0.000000e+00> : vector<2x128xf32>
    %178 = tpu.matmul %177, %5, %cst_102 {dimension_numbers = #tpu.dot_dimension_numbers<[1], [0], [0], [1], [0, 0, 1, 1], [], []>} : vector<2x64xf32>, vector<64x128xf32>, vector<2x128xf32> -> vector<2x128xf32>
    %179 = arith.addf %178, %9 : vector<2x128xf32>
    %c1_103 = arith.constant 1 : index
    %c0_104 = arith.constant 0 : index
    %c0_105 = arith.constant 0 : index
    %180 = vector.load %arg12[%c1_103, %c0_104, %c0_105] : memref<2x2x32xf32, #tpu.memory_space<vmem>>, vector<1x2x32xf32>
    %181 = vector.shape_cast %180 : vector<1x2x32xf32> to vector<2x32xf32>
    %182 = vector.extract_strided_slice %179 {offsets = [0, 0], sizes = [2, 96], strides = [1, 1]} : vector<2x128xf32> to vector<2x96xf32>
    %183 = arith.negf %182 : vector<2x96xf32>
    %184 = math.exp %183 : vector<2x96xf32>
    %cst_106 = arith.constant 1.000000e+00 : f32
    %185 = vector.broadcast %cst_106 : f32 to vector<2x96xf32>
    %186 = arith.addf %185, %184 : vector<2x96xf32>
    %187 = arith.divf %185, %186 : vector<2x96xf32>
    %188 = vector.extract_strided_slice %179 {offsets = [0, 96], sizes = [2, 32], strides = [1, 1]} : vector<2x128xf32> to vector<2x32xf32>
    %189 = math.tanh %188 : vector<2x32xf32>
    %190 = vector.extract_strided_slice %187 {offsets = [0, 0], sizes = [2, 32], strides = [1, 1]} : vector<2x96xf32> to vector<2x32xf32>
    %191 = vector.extract_strided_slice %187 {offsets = [0, 32], sizes = [2, 32], strides = [1, 1]} : vector<2x96xf32> to vector<2x32xf32>
    %192 = vector.extract_strided_slice %187 {offsets = [0, 64], sizes = [2, 32], strides = [1, 1]} : vector<2x96xf32> to vector<2x32xf32>
    %193 = arith.mulf %191, %181 : vector<2x32xf32>
    %194 = arith.mulf %190, %189 : vector<2x32xf32>
    %195 = arith.addf %193, %194 : vector<2x32xf32>
    %196 = math.tanh %195 : vector<2x32xf32>
    %197 = arith.mulf %192, %196 : vector<2x32xf32>
    %c1_107 = arith.constant 1 : index
    %c0_108 = arith.constant 0 : index
    %c0_109 = arith.constant 0 : index
    %198 = vector.load %arg11[%c1_107, %c0_108, %c0_109] : memref<2x2x32xf32, #tpu.memory_space<vmem>>, vector<1x2x32xf32>
    %199 = vector.shape_cast %198 : vector<1x2x32xf32> to vector<2x32xf32>
    %200 = vector.shape_cast %197 : vector<2x32xf32> to vector<1x2x32xf32>
    tpu.vector_store %arg11[%c1_107, %c0_108, %c0_109], %200 {strides = array<i32>} : memref<2x2x32xf32, #tpu.memory_space<vmem>>, vector<1x2x32xf32>,
    %c1_110 = arith.constant 1 : index
    %c0_111 = arith.constant 0 : index
    %c0_112 = arith.constant 0 : index
    %201 = vector.load %arg12[%c1_110, %c0_111, %c0_112] : memref<2x2x32xf32, #tpu.memory_space<vmem>>, vector<1x2x32xf32>
    %202 = vector.shape_cast %201 : vector<1x2x32xf32> to vector<2x32xf32>
    %203 = vector.shape_cast %195 : vector<2x32xf32> to vector<1x2x32xf32>
    tpu.vector_store %arg12[%c1_110, %c0_111, %c0_112], %203 {strides = array<i32>} : memref<2x2x32xf32, #tpu.memory_space<vmem>>, vector<1x2x32xf32>,
    %c3_i32 = arith.constant 3 : i32
    %c1_i32_113 = arith.constant 1 : i32
    %204 = arith.muli %c3_i32, %c1_i32_113 : i32
    %c0_i32_114 = arith.constant 0 : i32
    %205 = arith.addi %c0_i32_114, %204 : i32
    %c2_i32_115 = arith.constant 2 : i32
    %206 = arith.muli %205, %c2_i32_115 : i32
    %207 = arith.index_cast %206 : i32 to index
    %c0_116 = arith.constant 0 : index
    %208 = vector.load %arg13[%207, %c0_116] : memref<16x128xf32, #tpu.memory_space<vmem>>, vector<2x128xf32>
    %c0_117 = arith.constant 0 : index
    %c0_118 = arith.constant 0 : index
    %c0_119 = arith.constant 0 : index
    %209 = vector.load %arg11[%c0_117, %c0_118, %c0_119] : memref<2x2x32xf32, #tpu.memory_space<vmem>>, vector<1x2x32xf32>
    %210 = vector.shape_cast %209 : vector<1x2x32xf32> to vector<2x32xf32>
    %cst_120 = arith.constant dense<0.000000e+00> : vector<2x128xf32>
    %211 = tpu.matmul %210, %3, %cst_120 {dimension_numbers = #tpu.dot_dimension_numbers<[1], [0], [0], [1], [0, 0, 1, 1], [], []>} : vector<2x32xf32>, vector<32x128xf32>, vector<2x128xf32> -> vector<2x128xf32>
    %212 = arith.addf %208, %211 : vector<2x128xf32>
    %c0_121 = arith.constant 0 : index
    %c0_122 = arith.constant 0 : index
    %c0_123 = arith.constant 0 : index
    %213 = vector.load %arg12[%c0_121, %c0_122, %c0_123] : memref<2x2x32xf32, #tpu.memory_space<vmem>>, vector<1x2x32xf32>
    %214 = vector.shape_cast %213 : vector<1x2x32xf32> to vector<2x32xf32>
    %215 = vector.extract_strided_slice %212 {offsets = [0, 0], sizes = [2, 96], strides = [1, 1]} : vector<2x128xf32> to vector<2x96xf32>
    %216 = arith.negf %215 : vector<2x96xf32>
    %217 = math.exp %216 : vector<2x96xf32>
    %cst_124 = arith.constant 1.000000e+00 : f32
    %218 = vector.broadcast %cst_124 : f32 to vector<2x96xf32>
    %219 = arith.addf %218, %217 : vector<2x96xf32>
    %220 = arith.divf %218, %219 : vector<2x96xf32>
    %221 = vector.extract_strided_slice %212 {offsets = [0, 96], sizes = [2, 32], strides = [1, 1]} : vector<2x128xf32> to vector<2x32xf32>
    %222 = math.tanh %221 : vector<2x32xf32>
    %223 = vector.extract_strided_slice %220 {offsets = [0, 0], sizes = [2, 32], strides = [1, 1]} : vector<2x96xf32> to vector<2x32xf32>
    %224 = vector.extract_strided_slice %220 {offsets = [0, 32], sizes = [2, 32], strides = [1, 1]} : vector<2x96xf32> to vector<2x32xf32>
    %225 = vector.extract_strided_slice %220 {offsets = [0, 64], sizes = [2, 32], strides = [1, 1]} : vector<2x96xf32> to vector<2x32xf32>
    %226 = arith.mulf %224, %214 : vector<2x32xf32>
    %227 = arith.mulf %223, %222 : vector<2x32xf32>
    %228 = arith.addf %226, %227 : vector<2x32xf32>
    %229 = math.tanh %228 : vector<2x32xf32>
    %230 = arith.mulf %225, %229 : vector<2x32xf32>
    %c0_125 = arith.constant 0 : index
    %c0_126 = arith.constant 0 : index
    %c0_127 = arith.constant 0 : index
    %231 = vector.load %arg11[%c0_125, %c0_126, %c0_127] : memref<2x2x32xf32, #tpu.memory_space<vmem>>, vector<1x2x32xf32>
    %232 = vector.shape_cast %231 : vector<1x2x32xf32> to vector<2x32xf32>
    %233 = vector.shape_cast %230 : vector<2x32xf32> to vector<1x2x32xf32>
    tpu.vector_store %arg11[%c0_125, %c0_126, %c0_127], %233 {strides = array<i32>} : memref<2x2x32xf32, #tpu.memory_space<vmem>>, vector<1x2x32xf32>,
    %c0_128 = arith.constant 0 : index
    %c0_129 = arith.constant 0 : index
    %c0_130 = arith.constant 0 : index
    %234 = vector.load %arg12[%c0_128, %c0_129, %c0_130] : memref<2x2x32xf32, #tpu.memory_space<vmem>>, vector<1x2x32xf32>
    %235 = vector.shape_cast %234 : vector<1x2x32xf32> to vector<2x32xf32>
    %236 = vector.shape_cast %228 : vector<2x32xf32> to vector<1x2x32xf32>
    tpu.vector_store %arg12[%c0_128, %c0_129, %c0_130], %236 {strides = array<i32>} : memref<2x2x32xf32, #tpu.memory_space<vmem>>, vector<1x2x32xf32>,
    %c1_131 = arith.constant 1 : index
    %c0_132 = arith.constant 0 : index
    %c0_133 = arith.constant 0 : index
    %237 = vector.load %arg11[%c1_131, %c0_132, %c0_133] : memref<2x2x32xf32, #tpu.memory_space<vmem>>, vector<1x2x32xf32>
    %238 = vector.shape_cast %237 : vector<1x2x32xf32> to vector<2x32xf32>
    %239 = tpu.concatenate %230, %238 in 1 : vector<2x32xf32>, vector<2x32xf32> -> vector<2x64xf32>
    %cst_134 = arith.constant dense<0.000000e+00> : vector<2x128xf32>
    %240 = tpu.matmul %239, %5, %cst_134 {dimension_numbers = #tpu.dot_dimension_numbers<[1], [0], [0], [1], [0, 0, 1, 1], [], []>} : vector<2x64xf32>, vector<64x128xf32>, vector<2x128xf32> -> vector<2x128xf32>
    %241 = arith.addf %240, %9 : vector<2x128xf32>
    %c1_135 = arith.constant 1 : index
    %c0_136 = arith.constant 0 : index
    %c0_137 = arith.constant 0 : index
    %242 = vector.load %arg12[%c1_135, %c0_136, %c0_137] : memref<2x2x32xf32, #tpu.memory_space<vmem>>, vector<1x2x32xf32>
    %243 = vector.shape_cast %242 : vector<1x2x32xf32> to vector<2x32xf32>
    %244 = vector.extract_strided_slice %241 {offsets = [0, 0], sizes = [2, 96], strides = [1, 1]} : vector<2x128xf32> to vector<2x96xf32>
    %245 = arith.negf %244 : vector<2x96xf32>
    %246 = math.exp %245 : vector<2x96xf32>
    %cst_138 = arith.constant 1.000000e+00 : f32
    %247 = vector.broadcast %cst_138 : f32 to vector<2x96xf32>
    %248 = arith.addf %247, %246 : vector<2x96xf32>
    %249 = arith.divf %247, %248 : vector<2x96xf32>
    %250 = vector.extract_strided_slice %241 {offsets = [0, 96], sizes = [2, 32], strides = [1, 1]} : vector<2x128xf32> to vector<2x32xf32>
    %251 = math.tanh %250 : vector<2x32xf32>
    %252 = vector.extract_strided_slice %249 {offsets = [0, 0], sizes = [2, 32], strides = [1, 1]} : vector<2x96xf32> to vector<2x32xf32>
    %253 = vector.extract_strided_slice %249 {offsets = [0, 32], sizes = [2, 32], strides = [1, 1]} : vector<2x96xf32> to vector<2x32xf32>
    %254 = vector.extract_strided_slice %249 {offsets = [0, 64], sizes = [2, 32], strides = [1, 1]} : vector<2x96xf32> to vector<2x32xf32>
    %255 = arith.mulf %253, %243 : vector<2x32xf32>
    %256 = arith.mulf %252, %251 : vector<2x32xf32>
    %257 = arith.addf %255, %256 : vector<2x32xf32>
    %258 = math.tanh %257 : vector<2x32xf32>
    %259 = arith.mulf %254, %258 : vector<2x32xf32>
    %c1_139 = arith.constant 1 : index
    %c0_140 = arith.constant 0 : index
    %c0_141 = arith.constant 0 : index
    %260 = vector.load %arg11[%c1_139, %c0_140, %c0_141] : memref<2x2x32xf32, #tpu.memory_space<vmem>>, vector<1x2x32xf32>
    %261 = vector.shape_cast %260 : vector<1x2x32xf32> to vector<2x32xf32>
    %262 = vector.shape_cast %259 : vector<2x32xf32> to vector<1x2x32xf32>
    tpu.vector_store %arg11[%c1_139, %c0_140, %c0_141], %262 {strides = array<i32>} : memref<2x2x32xf32, #tpu.memory_space<vmem>>, vector<1x2x32xf32>,
    %c1_142 = arith.constant 1 : index
    %c0_143 = arith.constant 0 : index
    %c0_144 = arith.constant 0 : index
    %263 = vector.load %arg12[%c1_142, %c0_143, %c0_144] : memref<2x2x32xf32, #tpu.memory_space<vmem>>, vector<1x2x32xf32>
    %264 = vector.shape_cast %263 : vector<1x2x32xf32> to vector<2x32xf32>
    %265 = vector.shape_cast %257 : vector<2x32xf32> to vector<1x2x32xf32>
    tpu.vector_store %arg12[%c1_142, %c0_143, %c0_144], %265 {strides = array<i32>} : memref<2x2x32xf32, #tpu.memory_space<vmem>>, vector<1x2x32xf32>,
    %c4_i32 = arith.constant 4 : i32
    %c1_i32_145 = arith.constant 1 : i32
    %266 = arith.muli %c4_i32, %c1_i32_145 : i32
    %c0_i32_146 = arith.constant 0 : i32
    %267 = arith.addi %c0_i32_146, %266 : i32
    %c2_i32_147 = arith.constant 2 : i32
    %268 = arith.muli %267, %c2_i32_147 : i32
    %269 = arith.index_cast %268 : i32 to index
    %c0_148 = arith.constant 0 : index
    %270 = vector.load %arg13[%269, %c0_148] : memref<16x128xf32, #tpu.memory_space<vmem>>, vector<2x128xf32>
    %c0_149 = arith.constant 0 : index
    %c0_150 = arith.constant 0 : index
    %c0_151 = arith.constant 0 : index
    %271 = vector.load %arg11[%c0_149, %c0_150, %c0_151] : memref<2x2x32xf32, #tpu.memory_space<vmem>>, vector<1x2x32xf32>
    %272 = vector.shape_cast %271 : vector<1x2x32xf32> to vector<2x32xf32>
    %cst_152 = arith.constant dense<0.000000e+00> : vector<2x128xf32>
    %273 = tpu.matmul %272, %3, %cst_152 {dimension_numbers = #tpu.dot_dimension_numbers<[1], [0], [0], [1], [0, 0, 1, 1], [], []>} : vector<2x32xf32>, vector<32x128xf32>, vector<2x128xf32> -> vector<2x128xf32>
    %274 = arith.addf %270, %273 : vector<2x128xf32>
    %c0_153 = arith.constant 0 : index
    %c0_154 = arith.constant 0 : index
    %c0_155 = arith.constant 0 : index
    %275 = vector.load %arg12[%c0_153, %c0_154, %c0_155] : memref<2x2x32xf32, #tpu.memory_space<vmem>>, vector<1x2x32xf32>
    %276 = vector.shape_cast %275 : vector<1x2x32xf32> to vector<2x32xf32>
    %277 = vector.extract_strided_slice %274 {offsets = [0, 0], sizes = [2, 96], strides = [1, 1]} : vector<2x128xf32> to vector<2x96xf32>
    %278 = arith.negf %277 : vector<2x96xf32>
    %279 = math.exp %278 : vector<2x96xf32>
    %cst_156 = arith.constant 1.000000e+00 : f32
    %280 = vector.broadcast %cst_156 : f32 to vector<2x96xf32>
    %281 = arith.addf %280, %279 : vector<2x96xf32>
    %282 = arith.divf %280, %281 : vector<2x96xf32>
    %283 = vector.extract_strided_slice %274 {offsets = [0, 96], sizes = [2, 32], strides = [1, 1]} : vector<2x128xf32> to vector<2x32xf32>
    %284 = math.tanh %283 : vector<2x32xf32>
    %285 = vector.extract_strided_slice %282 {offsets = [0, 0], sizes = [2, 32], strides = [1, 1]} : vector<2x96xf32> to vector<2x32xf32>
    %286 = vector.extract_strided_slice %282 {offsets = [0, 32], sizes = [2, 32], strides = [1, 1]} : vector<2x96xf32> to vector<2x32xf32>
    %287 = vector.extract_strided_slice %282 {offsets = [0, 64], sizes = [2, 32], strides = [1, 1]} : vector<2x96xf32> to vector<2x32xf32>
    %288 = arith.mulf %286, %276 : vector<2x32xf32>
    %289 = arith.mulf %285, %284 : vector<2x32xf32>
    %290 = arith.addf %288, %289 : vector<2x32xf32>
    %291 = math.tanh %290 : vector<2x32xf32>
    %292 = arith.mulf %287, %291 : vector<2x32xf32>
    %c0_157 = arith.constant 0 : index
    %c0_158 = arith.constant 0 : index
    %c0_159 = arith.constant 0 : index
    %293 = vector.load %arg11[%c0_157, %c0_158, %c0_159] : memref<2x2x32xf32, #tpu.memory_space<vmem>>, vector<1x2x32xf32>
    %294 = vector.shape_cast %293 : vector<1x2x32xf32> to vector<2x32xf32>
    %295 = vector.shape_cast %292 : vector<2x32xf32> to vector<1x2x32xf32>
    tpu.vector_store %arg11[%c0_157, %c0_158, %c0_159], %295 {strides = array<i32>} : memref<2x2x32xf32, #tpu.memory_space<vmem>>, vector<1x2x32xf32>,
    %c0_160 = arith.constant 0 : index
    %c0_161 = arith.constant 0 : index
    %c0_162 = arith.constant 0 : index
    %296 = vector.load %arg12[%c0_160, %c0_161, %c0_162] : memref<2x2x32xf32, #tpu.memory_space<vmem>>, vector<1x2x32xf32>
    %297 = vector.shape_cast %296 : vector<1x2x32xf32> to vector<2x32xf32>
    %298 = vector.shape_cast %290 : vector<2x32xf32> to vector<1x2x32xf32>
    tpu.vector_store %arg12[%c0_160, %c0_161, %c0_162], %298 {strides = array<i32>} : memref<2x2x32xf32, #tpu.memory_space<vmem>>, vector<1x2x32xf32>,
    %c1_163 = arith.constant 1 : index
    %c0_164 = arith.constant 0 : index
    %c0_165 = arith.constant 0 : index
    %299 = vector.load %arg11[%c1_163, %c0_164, %c0_165] : memref<2x2x32xf32, #tpu.memory_space<vmem>>, vector<1x2x32xf32>
    %300 = vector.shape_cast %299 : vector<1x2x32xf32> to vector<2x32xf32>
    %301 = tpu.concatenate %292, %300 in 1 : vector<2x32xf32>, vector<2x32xf32> -> vector<2x64xf32>
    %cst_166 = arith.constant dense<0.000000e+00> : vector<2x128xf32>
    %302 = tpu.matmul %301, %5, %cst_166 {dimension_numbers = #tpu.dot_dimension_numbers<[1], [0], [0], [1], [0, 0, 1, 1], [], []>} : vector<2x64xf32>, vector<64x128xf32>, vector<2x128xf32> -> vector<2x128xf32>
    %303 = arith.addf %302, %9 : vector<2x128xf32>
    %c1_167 = arith.constant 1 : index
    %c0_168 = arith.constant 0 : index
    %c0_169 = arith.constant 0 : index
    %304 = vector.load %arg12[%c1_167, %c0_168, %c0_169] : memref<2x2x32xf32, #tpu.memory_space<vmem>>, vector<1x2x32xf32>
    %305 = vector.shape_cast %304 : vector<1x2x32xf32> to vector<2x32xf32>
    %306 = vector.extract_strided_slice %303 {offsets = [0, 0], sizes = [2, 96], strides = [1, 1]} : vector<2x128xf32> to vector<2x96xf32>
    %307 = arith.negf %306 : vector<2x96xf32>
    %308 = math.exp %307 : vector<2x96xf32>
    %cst_170 = arith.constant 1.000000e+00 : f32
    %309 = vector.broadcast %cst_170 : f32 to vector<2x96xf32>
    %310 = arith.addf %309, %308 : vector<2x96xf32>
    %311 = arith.divf %309, %310 : vector<2x96xf32>
    %312 = vector.extract_strided_slice %303 {offsets = [0, 96], sizes = [2, 32], strides = [1, 1]} : vector<2x128xf32> to vector<2x32xf32>
    %313 = math.tanh %312 : vector<2x32xf32>
    %314 = vector.extract_strided_slice %311 {offsets = [0, 0], sizes = [2, 32], strides = [1, 1]} : vector<2x96xf32> to vector<2x32xf32>
    %315 = vector.extract_strided_slice %311 {offsets = [0, 32], sizes = [2, 32], strides = [1, 1]} : vector<2x96xf32> to vector<2x32xf32>
    %316 = vector.extract_strided_slice %311 {offsets = [0, 64], sizes = [2, 32], strides = [1, 1]} : vector<2x96xf32> to vector<2x32xf32>
    %317 = arith.mulf %315, %305 : vector<2x32xf32>
    %318 = arith.mulf %314, %313 : vector<2x32xf32>
    %319 = arith.addf %317, %318 : vector<2x32xf32>
    %320 = math.tanh %319 : vector<2x32xf32>
    %321 = arith.mulf %316, %320 : vector<2x32xf32>
    %c1_171 = arith.constant 1 : index
    %c0_172 = arith.constant 0 : index
    %c0_173 = arith.constant 0 : index
    %322 = vector.load %arg11[%c1_171, %c0_172, %c0_173] : memref<2x2x32xf32, #tpu.memory_space<vmem>>, vector<1x2x32xf32>
    %323 = vector.shape_cast %322 : vector<1x2x32xf32> to vector<2x32xf32>
    %324 = vector.shape_cast %321 : vector<2x32xf32> to vector<1x2x32xf32>
    tpu.vector_store %arg11[%c1_171, %c0_172, %c0_173], %324 {strides = array<i32>} : memref<2x2x32xf32, #tpu.memory_space<vmem>>, vector<1x2x32xf32>,
    %c1_174 = arith.constant 1 : index
    %c0_175 = arith.constant 0 : index
    %c0_176 = arith.constant 0 : index
    %325 = vector.load %arg12[%c1_174, %c0_175, %c0_176] : memref<2x2x32xf32, #tpu.memory_space<vmem>>, vector<1x2x32xf32>
    %326 = vector.shape_cast %325 : vector<1x2x32xf32> to vector<2x32xf32>
    %327 = vector.shape_cast %319 : vector<2x32xf32> to vector<1x2x32xf32>
    tpu.vector_store %arg12[%c1_174, %c0_175, %c0_176], %327 {strides = array<i32>} : memref<2x2x32xf32, #tpu.memory_space<vmem>>, vector<1x2x32xf32>,
    %c5_i32 = arith.constant 5 : i32
    %c1_i32_177 = arith.constant 1 : i32
    %328 = arith.muli %c5_i32, %c1_i32_177 : i32
    %c0_i32_178 = arith.constant 0 : i32
    %329 = arith.addi %c0_i32_178, %328 : i32
    %c2_i32_179 = arith.constant 2 : i32
    %330 = arith.muli %329, %c2_i32_179 : i32
    %331 = arith.index_cast %330 : i32 to index
    %c0_180 = arith.constant 0 : index
    %332 = vector.load %arg13[%331, %c0_180] : memref<16x128xf32, #tpu.memory_space<vmem>>, vector<2x128xf32>
    %c0_181 = arith.constant 0 : index
    %c0_182 = arith.constant 0 : index
    %c0_183 = arith.constant 0 : index
    %333 = vector.load %arg11[%c0_181, %c0_182, %c0_183] : memref<2x2x32xf32, #tpu.memory_space<vmem>>, vector<1x2x32xf32>
    %334 = vector.shape_cast %333 : vector<1x2x32xf32> to vector<2x32xf32>
    %cst_184 = arith.constant dense<0.000000e+00> : vector<2x128xf32>
    %335 = tpu.matmul %334, %3, %cst_184 {dimension_numbers = #tpu.dot_dimension_numbers<[1], [0], [0], [1], [0, 0, 1, 1], [], []>} : vector<2x32xf32>, vector<32x128xf32>, vector<2x128xf32> -> vector<2x128xf32>
    %336 = arith.addf %332, %335 : vector<2x128xf32>
    %c0_185 = arith.constant 0 : index
    %c0_186 = arith.constant 0 : index
    %c0_187 = arith.constant 0 : index
    %337 = vector.load %arg12[%c0_185, %c0_186, %c0_187] : memref<2x2x32xf32, #tpu.memory_space<vmem>>, vector<1x2x32xf32>
    %338 = vector.shape_cast %337 : vector<1x2x32xf32> to vector<2x32xf32>
    %339 = vector.extract_strided_slice %336 {offsets = [0, 0], sizes = [2, 96], strides = [1, 1]} : vector<2x128xf32> to vector<2x96xf32>
    %340 = arith.negf %339 : vector<2x96xf32>
    %341 = math.exp %340 : vector<2x96xf32>
    %cst_188 = arith.constant 1.000000e+00 : f32
    %342 = vector.broadcast %cst_188 : f32 to vector<2x96xf32>
    %343 = arith.addf %342, %341 : vector<2x96xf32>
    %344 = arith.divf %342, %343 : vector<2x96xf32>
    %345 = vector.extract_strided_slice %336 {offsets = [0, 96], sizes = [2, 32], strides = [1, 1]} : vector<2x128xf32> to vector<2x32xf32>
    %346 = math.tanh %345 : vector<2x32xf32>
    %347 = vector.extract_strided_slice %344 {offsets = [0, 0], sizes = [2, 32], strides = [1, 1]} : vector<2x96xf32> to vector<2x32xf32>
    %348 = vector.extract_strided_slice %344 {offsets = [0, 32], sizes = [2, 32], strides = [1, 1]} : vector<2x96xf32> to vector<2x32xf32>
    %349 = vector.extract_strided_slice %344 {offsets = [0, 64], sizes = [2, 32], strides = [1, 1]} : vector<2x96xf32> to vector<2x32xf32>
    %350 = arith.mulf %348, %338 : vector<2x32xf32>
    %351 = arith.mulf %347, %346 : vector<2x32xf32>
    %352 = arith.addf %350, %351 : vector<2x32xf32>
    %353 = math.tanh %352 : vector<2x32xf32>
    %354 = arith.mulf %349, %353 : vector<2x32xf32>
    %c0_189 = arith.constant 0 : index
    %c0_190 = arith.constant 0 : index
    %c0_191 = arith.constant 0 : index
    %355 = vector.load %arg11[%c0_189, %c0_190, %c0_191] : memref<2x2x32xf32, #tpu.memory_space<vmem>>, vector<1x2x32xf32>
    %356 = vector.shape_cast %355 : vector<1x2x32xf32> to vector<2x32xf32>
    %357 = vector.shape_cast %354 : vector<2x32xf32> to vector<1x2x32xf32>
    tpu.vector_store %arg11[%c0_189, %c0_190, %c0_191], %357 {strides = array<i32>} : memref<2x2x32xf32, #tpu.memory_space<vmem>>, vector<1x2x32xf32>,
    %c0_192 = arith.constant 0 : index
    %c0_193 = arith.constant 0 : index
    %c0_194 = arith.constant 0 : index
    %358 = vector.load %arg12[%c0_192, %c0_193, %c0_194] : memref<2x2x32xf32, #tpu.memory_space<vmem>>, vector<1x2x32xf32>
    %359 = vector.shape_cast %358 : vector<1x2x32xf32> to vector<2x32xf32>
    %360 = vector.shape_cast %352 : vector<2x32xf32> to vector<1x2x32xf32>
    tpu.vector_store %arg12[%c0_192, %c0_193, %c0_194], %360 {strides = array<i32>} : memref<2x2x32xf32, #tpu.memory_space<vmem>>, vector<1x2x32xf32>,
    %c1_195 = arith.constant 1 : index
    %c0_196 = arith.constant 0 : index
    %c0_197 = arith.constant 0 : index
    %361 = vector.load %arg11[%c1_195, %c0_196, %c0_197] : memref<2x2x32xf32, #tpu.memory_space<vmem>>, vector<1x2x32xf32>
    %362 = vector.shape_cast %361 : vector<1x2x32xf32> to vector<2x32xf32>
    %363 = tpu.concatenate %354, %362 in 1 : vector<2x32xf32>, vector<2x32xf32> -> vector<2x64xf32>
    %cst_198 = arith.constant dense<0.000000e+00> : vector<2x128xf32>
    %364 = tpu.matmul %363, %5, %cst_198 {dimension_numbers = #tpu.dot_dimension_numbers<[1], [0], [0], [1], [0, 0, 1, 1], [], []>} : vector<2x64xf32>, vector<64x128xf32>, vector<2x128xf32> -> vector<2x128xf32>
    %365 = arith.addf %364, %9 : vector<2x128xf32>
    %c1_199 = arith.constant 1 : index
    %c0_200 = arith.constant 0 : index
    %c0_201 = arith.constant 0 : index
    %366 = vector.load %arg12[%c1_199, %c0_200, %c0_201] : memref<2x2x32xf32, #tpu.memory_space<vmem>>, vector<1x2x32xf32>
    %367 = vector.shape_cast %366 : vector<1x2x32xf32> to vector<2x32xf32>
    %368 = vector.extract_strided_slice %365 {offsets = [0, 0], sizes = [2, 96], strides = [1, 1]} : vector<2x128xf32> to vector<2x96xf32>
    %369 = arith.negf %368 : vector<2x96xf32>
    %370 = math.exp %369 : vector<2x96xf32>
    %cst_202 = arith.constant 1.000000e+00 : f32
    %371 = vector.broadcast %cst_202 : f32 to vector<2x96xf32>
    %372 = arith.addf %371, %370 : vector<2x96xf32>
    %373 = arith.divf %371, %372 : vector<2x96xf32>
    %374 = vector.extract_strided_slice %365 {offsets = [0, 96], sizes = [2, 32], strides = [1, 1]} : vector<2x128xf32> to vector<2x32xf32>
    %375 = math.tanh %374 : vector<2x32xf32>
    %376 = vector.extract_strided_slice %373 {offsets = [0, 0], sizes = [2, 32], strides = [1, 1]} : vector<2x96xf32> to vector<2x32xf32>
    %377 = vector.extract_strided_slice %373 {offsets = [0, 32], sizes = [2, 32], strides = [1, 1]} : vector<2x96xf32> to vector<2x32xf32>
    %378 = vector.extract_strided_slice %373 {offsets = [0, 64], sizes = [2, 32], strides = [1, 1]} : vector<2x96xf32> to vector<2x32xf32>
    %379 = arith.mulf %377, %367 : vector<2x32xf32>
    %380 = arith.mulf %376, %375 : vector<2x32xf32>
    %381 = arith.addf %379, %380 : vector<2x32xf32>
    %382 = math.tanh %381 : vector<2x32xf32>
    %383 = arith.mulf %378, %382 : vector<2x32xf32>
    %c1_203 = arith.constant 1 : index
    %c0_204 = arith.constant 0 : index
    %c0_205 = arith.constant 0 : index
    %384 = vector.load %arg11[%c1_203, %c0_204, %c0_205] : memref<2x2x32xf32, #tpu.memory_space<vmem>>, vector<1x2x32xf32>
    %385 = vector.shape_cast %384 : vector<1x2x32xf32> to vector<2x32xf32>
    %386 = vector.shape_cast %383 : vector<2x32xf32> to vector<1x2x32xf32>
    tpu.vector_store %arg11[%c1_203, %c0_204, %c0_205], %386 {strides = array<i32>} : memref<2x2x32xf32, #tpu.memory_space<vmem>>, vector<1x2x32xf32>,
    %c1_206 = arith.constant 1 : index
    %c0_207 = arith.constant 0 : index
    %c0_208 = arith.constant 0 : index
    %387 = vector.load %arg12[%c1_206, %c0_207, %c0_208] : memref<2x2x32xf32, #tpu.memory_space<vmem>>, vector<1x2x32xf32>
    %388 = vector.shape_cast %387 : vector<1x2x32xf32> to vector<2x32xf32>
    %389 = vector.shape_cast %381 : vector<2x32xf32> to vector<1x2x32xf32>
    tpu.vector_store %arg12[%c1_206, %c0_207, %c0_208], %389 {strides = array<i32>} : memref<2x2x32xf32, #tpu.memory_space<vmem>>, vector<1x2x32xf32>,
    %c6_i32 = arith.constant 6 : i32
    %c1_i32_209 = arith.constant 1 : i32
    %390 = arith.muli %c6_i32, %c1_i32_209 : i32
    %c0_i32_210 = arith.constant 0 : i32
    %391 = arith.addi %c0_i32_210, %390 : i32
    %c2_i32_211 = arith.constant 2 : i32
    %392 = arith.muli %391, %c2_i32_211 : i32
    %393 = arith.index_cast %392 : i32 to index
    %c0_212 = arith.constant 0 : index
    %394 = vector.load %arg13[%393, %c0_212] : memref<16x128xf32, #tpu.memory_space<vmem>>, vector<2x128xf32>
    %c0_213 = arith.constant 0 : index
    %c0_214 = arith.constant 0 : index
    %c0_215 = arith.constant 0 : index
    %395 = vector.load %arg11[%c0_213, %c0_214, %c0_215] : memref<2x2x32xf32, #tpu.memory_space<vmem>>, vector<1x2x32xf32>
    %396 = vector.shape_cast %395 : vector<1x2x32xf32> to vector<2x32xf32>
    %cst_216 = arith.constant dense<0.000000e+00> : vector<2x128xf32>
    %397 = tpu.matmul %396, %3, %cst_216 {dimension_numbers = #tpu.dot_dimension_numbers<[1], [0], [0], [1], [0, 0, 1, 1], [], []>} : vector<2x32xf32>, vector<32x128xf32>, vector<2x128xf32> -> vector<2x128xf32>
    %398 = arith.addf %394, %397 : vector<2x128xf32>
    %c0_217 = arith.constant 0 : index
    %c0_218 = arith.constant 0 : index
    %c0_219 = arith.constant 0 : index
    %399 = vector.load %arg12[%c0_217, %c0_218, %c0_219] : memref<2x2x32xf32, #tpu.memory_space<vmem>>, vector<1x2x32xf32>
    %400 = vector.shape_cast %399 : vector<1x2x32xf32> to vector<2x32xf32>
    %401 = vector.extract_strided_slice %398 {offsets = [0, 0], sizes = [2, 96], strides = [1, 1]} : vector<2x128xf32> to vector<2x96xf32>
    %402 = arith.negf %401 : vector<2x96xf32>
    %403 = math.exp %402 : vector<2x96xf32>
    %cst_220 = arith.constant 1.000000e+00 : f32
    %404 = vector.broadcast %cst_220 : f32 to vector<2x96xf32>
    %405 = arith.addf %404, %403 : vector<2x96xf32>
    %406 = arith.divf %404, %405 : vector<2x96xf32>
    %407 = vector.extract_strided_slice %398 {offsets = [0, 96], sizes = [2, 32], strides = [1, 1]} : vector<2x128xf32> to vector<2x32xf32>
    %408 = math.tanh %407 : vector<2x32xf32>
    %409 = vector.extract_strided_slice %406 {offsets = [0, 0], sizes = [2, 32], strides = [1, 1]} : vector<2x96xf32> to vector<2x32xf32>
    %410 = vector.extract_strided_slice %406 {offsets = [0, 32], sizes = [2, 32], strides = [1, 1]} : vector<2x96xf32> to vector<2x32xf32>
    %411 = vector.extract_strided_slice %406 {offsets = [0, 64], sizes = [2, 32], strides = [1, 1]} : vector<2x96xf32> to vector<2x32xf32>
    %412 = arith.mulf %410, %400 : vector<2x32xf32>
    %413 = arith.mulf %409, %408 : vector<2x32xf32>
    %414 = arith.addf %412, %413 : vector<2x32xf32>
    %415 = math.tanh %414 : vector<2x32xf32>
    %416 = arith.mulf %411, %415 : vector<2x32xf32>
    %c0_221 = arith.constant 0 : index
    %c0_222 = arith.constant 0 : index
    %c0_223 = arith.constant 0 : index
    %417 = vector.load %arg11[%c0_221, %c0_222, %c0_223] : memref<2x2x32xf32, #tpu.memory_space<vmem>>, vector<1x2x32xf32>
    %418 = vector.shape_cast %417 : vector<1x2x32xf32> to vector<2x32xf32>
    %419 = vector.shape_cast %416 : vector<2x32xf32> to vector<1x2x32xf32>
    tpu.vector_store %arg11[%c0_221, %c0_222, %c0_223], %419 {strides = array<i32>} : memref<2x2x32xf32, #tpu.memory_space<vmem>>, vector<1x2x32xf32>,
    %c0_224 = arith.constant 0 : index
    %c0_225 = arith.constant 0 : index
    %c0_226 = arith.constant 0 : index
    %420 = vector.load %arg12[%c0_224, %c0_225, %c0_226] : memref<2x2x32xf32, #tpu.memory_space<vmem>>, vector<1x2x32xf32>
    %421 = vector.shape_cast %420 : vector<1x2x32xf32> to vector<2x32xf32>
    %422 = vector.shape_cast %414 : vector<2x32xf32> to vector<1x2x32xf32>
    tpu.vector_store %arg12[%c0_224, %c0_225, %c0_226], %422 {strides = array<i32>} : memref<2x2x32xf32, #tpu.memory_space<vmem>>, vector<1x2x32xf32>,
    %c1_227 = arith.constant 1 : index
    %c0_228 = arith.constant 0 : index
    %c0_229 = arith.constant 0 : index
    %423 = vector.load %arg11[%c1_227, %c0_228, %c0_229] : memref<2x2x32xf32, #tpu.memory_space<vmem>>, vector<1x2x32xf32>
    %424 = vector.shape_cast %423 : vector<1x2x32xf32> to vector<2x32xf32>
    %425 = tpu.concatenate %416, %424 in 1 : vector<2x32xf32>, vector<2x32xf32> -> vector<2x64xf32>
    %cst_230 = arith.constant dense<0.000000e+00> : vector<2x128xf32>
    %426 = tpu.matmul %425, %5, %cst_230 {dimension_numbers = #tpu.dot_dimension_numbers<[1], [0], [0], [1], [0, 0, 1, 1], [], []>} : vector<2x64xf32>, vector<64x128xf32>, vector<2x128xf32> -> vector<2x128xf32>
    %427 = arith.addf %426, %9 : vector<2x128xf32>
    %c1_231 = arith.constant 1 : index
    %c0_232 = arith.constant 0 : index
    %c0_233 = arith.constant 0 : index
    %428 = vector.load %arg12[%c1_231, %c0_232, %c0_233] : memref<2x2x32xf32, #tpu.memory_space<vmem>>, vector<1x2x32xf32>
    %429 = vector.shape_cast %428 : vector<1x2x32xf32> to vector<2x32xf32>
    %430 = vector.extract_strided_slice %427 {offsets = [0, 0], sizes = [2, 96], strides = [1, 1]} : vector<2x128xf32> to vector<2x96xf32>
    %431 = arith.negf %430 : vector<2x96xf32>
    %432 = math.exp %431 : vector<2x96xf32>
    %cst_234 = arith.constant 1.000000e+00 : f32
    %433 = vector.broadcast %cst_234 : f32 to vector<2x96xf32>
    %434 = arith.addf %433, %432 : vector<2x96xf32>
    %435 = arith.divf %433, %434 : vector<2x96xf32>
    %436 = vector.extract_strided_slice %427 {offsets = [0, 96], sizes = [2, 32], strides = [1, 1]} : vector<2x128xf32> to vector<2x32xf32>
    %437 = math.tanh %436 : vector<2x32xf32>
    %438 = vector.extract_strided_slice %435 {offsets = [0, 0], sizes = [2, 32], strides = [1, 1]} : vector<2x96xf32> to vector<2x32xf32>
    %439 = vector.extract_strided_slice %435 {offsets = [0, 32], sizes = [2, 32], strides = [1, 1]} : vector<2x96xf32> to vector<2x32xf32>
    %440 = vector.extract_strided_slice %435 {offsets = [0, 64], sizes = [2, 32], strides = [1, 1]} : vector<2x96xf32> to vector<2x32xf32>
    %441 = arith.mulf %439, %429 : vector<2x32xf32>
    %442 = arith.mulf %438, %437 : vector<2x32xf32>
    %443 = arith.addf %441, %442 : vector<2x32xf32>
    %444 = math.tanh %443 : vector<2x32xf32>
    %445 = arith.mulf %440, %444 : vector<2x32xf32>
    %c1_235 = arith.constant 1 : index
    %c0_236 = arith.constant 0 : index
    %c0_237 = arith.constant 0 : index
    %446 = vector.load %arg11[%c1_235, %c0_236, %c0_237] : memref<2x2x32xf32, #tpu.memory_space<vmem>>, vector<1x2x32xf32>
    %447 = vector.shape_cast %446 : vector<1x2x32xf32> to vector<2x32xf32>
    %448 = vector.shape_cast %445 : vector<2x32xf32> to vector<1x2x32xf32>
    tpu.vector_store %arg11[%c1_235, %c0_236, %c0_237], %448 {strides = array<i32>} : memref<2x2x32xf32, #tpu.memory_space<vmem>>, vector<1x2x32xf32>,
    %c1_238 = arith.constant 1 : index
    %c0_239 = arith.constant 0 : index
    %c0_240 = arith.constant 0 : index
    %449 = vector.load %arg12[%c1_238, %c0_239, %c0_240] : memref<2x2x32xf32, #tpu.memory_space<vmem>>, vector<1x2x32xf32>
    %450 = vector.shape_cast %449 : vector<1x2x32xf32> to vector<2x32xf32>
    %451 = vector.shape_cast %443 : vector<2x32xf32> to vector<1x2x32xf32>
    tpu.vector_store %arg12[%c1_238, %c0_239, %c0_240], %451 {strides = array<i32>} : memref<2x2x32xf32, #tpu.memory_space<vmem>>, vector<1x2x32xf32>,
    %c7_i32 = arith.constant 7 : i32
    %c1_i32_241 = arith.constant 1 : i32
    %452 = arith.muli %c7_i32, %c1_i32_241 : i32
    %c0_i32_242 = arith.constant 0 : i32
    %453 = arith.addi %c0_i32_242, %452 : i32
    %c2_i32_243 = arith.constant 2 : i32
    %454 = arith.muli %453, %c2_i32_243 : i32
    %455 = arith.index_cast %454 : i32 to index
    %c0_244 = arith.constant 0 : index
    %456 = vector.load %arg13[%455, %c0_244] : memref<16x128xf32, #tpu.memory_space<vmem>>, vector<2x128xf32>
    %c0_245 = arith.constant 0 : index
    %c0_246 = arith.constant 0 : index
    %c0_247 = arith.constant 0 : index
    %457 = vector.load %arg11[%c0_245, %c0_246, %c0_247] : memref<2x2x32xf32, #tpu.memory_space<vmem>>, vector<1x2x32xf32>
    %458 = vector.shape_cast %457 : vector<1x2x32xf32> to vector<2x32xf32>
    %cst_248 = arith.constant dense<0.000000e+00> : vector<2x128xf32>
    %459 = tpu.matmul %458, %3, %cst_248 {dimension_numbers = #tpu.dot_dimension_numbers<[1], [0], [0], [1], [0, 0, 1, 1], [], []>} : vector<2x32xf32>, vector<32x128xf32>, vector<2x128xf32> -> vector<2x128xf32>
    %460 = arith.addf %456, %459 : vector<2x128xf32>
    %c0_249 = arith.constant 0 : index
    %c0_250 = arith.constant 0 : index
    %c0_251 = arith.constant 0 : index
    %461 = vector.load %arg12[%c0_249, %c0_250, %c0_251] : memref<2x2x32xf32, #tpu.memory_space<vmem>>, vector<1x2x32xf32>
    %462 = vector.shape_cast %461 : vector<1x2x32xf32> to vector<2x32xf32>
    %463 = vector.extract_strided_slice %460 {offsets = [0, 0], sizes = [2, 96], strides = [1, 1]} : vector<2x128xf32> to vector<2x96xf32>
    %464 = arith.negf %463 : vector<2x96xf32>
    %465 = math.exp %464 : vector<2x96xf32>
    %cst_252 = arith.constant 1.000000e+00 : f32
    %466 = vector.broadcast %cst_252 : f32 to vector<2x96xf32>
    %467 = arith.addf %466, %465 : vector<2x96xf32>
    %468 = arith.divf %466, %467 : vector<2x96xf32>
    %469 = vector.extract_strided_slice %460 {offsets = [0, 96], sizes = [2, 32], strides = [1, 1]} : vector<2x128xf32> to vector<2x32xf32>
    %470 = math.tanh %469 : vector<2x32xf32>
    %471 = vector.extract_strided_slice %468 {offsets = [0, 0], sizes = [2, 32], strides = [1, 1]} : vector<2x96xf32> to vector<2x32xf32>
    %472 = vector.extract_strided_slice %468 {offsets = [0, 32], sizes = [2, 32], strides = [1, 1]} : vector<2x96xf32> to vector<2x32xf32>
    %473 = vector.extract_strided_slice %468 {offsets = [0, 64], sizes = [2, 32], strides = [1, 1]} : vector<2x96xf32> to vector<2x32xf32>
    %474 = arith.mulf %472, %462 : vector<2x32xf32>
    %475 = arith.mulf %471, %470 : vector<2x32xf32>
    %476 = arith.addf %474, %475 : vector<2x32xf32>
    %477 = math.tanh %476 : vector<2x32xf32>
    %478 = arith.mulf %473, %477 : vector<2x32xf32>
    %c0_253 = arith.constant 0 : index
    %c0_254 = arith.constant 0 : index
    %c0_255 = arith.constant 0 : index
    %479 = vector.load %arg11[%c0_253, %c0_254, %c0_255] : memref<2x2x32xf32, #tpu.memory_space<vmem>>, vector<1x2x32xf32>
    %480 = vector.shape_cast %479 : vector<1x2x32xf32> to vector<2x32xf32>
    %481 = vector.shape_cast %478 : vector<2x32xf32> to vector<1x2x32xf32>
    tpu.vector_store %arg11[%c0_253, %c0_254, %c0_255], %481 {strides = array<i32>} : memref<2x2x32xf32, #tpu.memory_space<vmem>>, vector<1x2x32xf32>,
    %c0_256 = arith.constant 0 : index
    %c0_257 = arith.constant 0 : index
    %c0_258 = arith.constant 0 : index
    %482 = vector.load %arg12[%c0_256, %c0_257, %c0_258] : memref<2x2x32xf32, #tpu.memory_space<vmem>>, vector<1x2x32xf32>
    %483 = vector.shape_cast %482 : vector<1x2x32xf32> to vector<2x32xf32>
    %484 = vector.shape_cast %476 : vector<2x32xf32> to vector<1x2x32xf32>
    tpu.vector_store %arg12[%c0_256, %c0_257, %c0_258], %484 {strides = array<i32>} : memref<2x2x32xf32, #tpu.memory_space<vmem>>, vector<1x2x32xf32>,
    %c1_259 = arith.constant 1 : index
    %c0_260 = arith.constant 0 : index
    %c0_261 = arith.constant 0 : index
    %485 = vector.load %arg11[%c1_259, %c0_260, %c0_261] : memref<2x2x32xf32, #tpu.memory_space<vmem>>, vector<1x2x32xf32>
    %486 = vector.shape_cast %485 : vector<1x2x32xf32> to vector<2x32xf32>
    %487 = tpu.concatenate %478, %486 in 1 : vector<2x32xf32>, vector<2x32xf32> -> vector<2x64xf32>
    %cst_262 = arith.constant dense<0.000000e+00> : vector<2x128xf32>
    %488 = tpu.matmul %487, %5, %cst_262 {dimension_numbers = #tpu.dot_dimension_numbers<[1], [0], [0], [1], [0, 0, 1, 1], [], []>} : vector<2x64xf32>, vector<64x128xf32>, vector<2x128xf32> -> vector<2x128xf32>
    %489 = arith.addf %488, %9 : vector<2x128xf32>
    %c1_263 = arith.constant 1 : index
    %c0_264 = arith.constant 0 : index
    %c0_265 = arith.constant 0 : index
    %490 = vector.load %arg12[%c1_263, %c0_264, %c0_265] : memref<2x2x32xf32, #tpu.memory_space<vmem>>, vector<1x2x32xf32>
    %491 = vector.shape_cast %490 : vector<1x2x32xf32> to vector<2x32xf32>
    %492 = vector.extract_strided_slice %489 {offsets = [0, 0], sizes = [2, 96], strides = [1, 1]} : vector<2x128xf32> to vector<2x96xf32>
    %493 = arith.negf %492 : vector<2x96xf32>
    %494 = math.exp %493 : vector<2x96xf32>
    %cst_266 = arith.constant 1.000000e+00 : f32
    %495 = vector.broadcast %cst_266 : f32 to vector<2x96xf32>
    %496 = arith.addf %495, %494 : vector<2x96xf32>
    %497 = arith.divf %495, %496 : vector<2x96xf32>
    %498 = vector.extract_strided_slice %489 {offsets = [0, 96], sizes = [2, 32], strides = [1, 1]} : vector<2x128xf32> to vector<2x32xf32>
    %499 = math.tanh %498 : vector<2x32xf32>
    %500 = vector.extract_strided_slice %497 {offsets = [0, 0], sizes = [2, 32], strides = [1, 1]} : vector<2x96xf32> to vector<2x32xf32>
    %501 = vector.extract_strided_slice %497 {offsets = [0, 32], sizes = [2, 32], strides = [1, 1]} : vector<2x96xf32> to vector<2x32xf32>
    %502 = vector.extract_strided_slice %497 {offsets = [0, 64], sizes = [2, 32], strides = [1, 1]} : vector<2x96xf32> to vector<2x32xf32>
    %503 = arith.mulf %501, %491 : vector<2x32xf32>
    %504 = arith.mulf %500, %499 : vector<2x32xf32>
    %505 = arith.addf %503, %504 : vector<2x32xf32>
    %506 = math.tanh %505 : vector<2x32xf32>
    %507 = arith.mulf %502, %506 : vector<2x32xf32>
    %c1_267 = arith.constant 1 : index
    %c0_268 = arith.constant 0 : index
    %c0_269 = arith.constant 0 : index
    %508 = vector.load %arg11[%c1_267, %c0_268, %c0_269] : memref<2x2x32xf32, #tpu.memory_space<vmem>>, vector<1x2x32xf32>
    %509 = vector.shape_cast %508 : vector<1x2x32xf32> to vector<2x32xf32>
    %510 = vector.shape_cast %507 : vector<2x32xf32> to vector<1x2x32xf32>
    tpu.vector_store %arg11[%c1_267, %c0_268, %c0_269], %510 {strides = array<i32>} : memref<2x2x32xf32, #tpu.memory_space<vmem>>, vector<1x2x32xf32>,
    %c1_270 = arith.constant 1 : index
    %c0_271 = arith.constant 0 : index
    %c0_272 = arith.constant 0 : index
    %511 = vector.load %arg12[%c1_270, %c0_271, %c0_272] : memref<2x2x32xf32, #tpu.memory_space<vmem>>, vector<1x2x32xf32>
    %512 = vector.shape_cast %511 : vector<1x2x32xf32> to vector<2x32xf32>
    %513 = vector.shape_cast %505 : vector<2x32xf32> to vector<1x2x32xf32>
    tpu.vector_store %arg12[%c1_270, %c0_271, %c0_272], %513 {strides = array<i32>} : memref<2x2x32xf32, #tpu.memory_space<vmem>>, vector<1x2x32xf32>,
    %c8_i32 = arith.constant 8 : i32
    %c0_i32_273 = arith.constant 0 : i32
    %514 = arith.cmpi eq, %arg1, %c0_i32_273 : i32
    %515 = arith.extui %514 : i1 to i32
    %c0_i32_274 = arith.constant 0 : i32
    %516 = arith.cmpi ne, %515, %c0_i32_274 : i32
    scf.if %516 {
      %c1_275 = arith.constant 1 : index
      %c0_276 = arith.constant 0 : index
      %c0_277 = arith.constant 0 : index
      %517 = vector.load %arg11[%c1_275, %c0_276, %c0_277] : memref<2x2x32xf32, #tpu.memory_space<vmem>>, vector<1x2x32xf32>
      %518 = vector.shape_cast %517 : vector<1x2x32xf32> to vector<2x32xf32>
      %c0_278 = arith.constant 0 : index
      %c0_279 = arith.constant 0 : index
      %519 = vector.load %arg8[%c0_278, %c0_279] : memref<32x4xf32, #tpu.memory_space<vmem>>, vector<32x4xf32>
      %cst_280 = arith.constant dense<0.000000e+00> : vector<2x4xf32>
      %520 = tpu.matmul %518, %519, %cst_280 {dimension_numbers = #tpu.dot_dimension_numbers<[1], [0], [0], [1], [0, 0, 1, 1], [], []>} : vector<2x32xf32>, vector<32x4xf32>, vector<2x4xf32> -> vector<2x4xf32>
      %c0_281 = arith.constant 0 : index
      %c0_282 = arith.constant 0 : index
      %521 = vector.load %arg9[%c0_281, %c0_282] : memref<1x4xf32, #tpu.memory_space<vmem>>, vector<1x4xf32>
      %522 = vector.broadcast %521 : vector<1x4xf32> to vector<2x4xf32>
      %523 = arith.addf %520, %522 : vector<2x4xf32>
      %c0_283 = arith.constant 0 : index
      %c0_284 = arith.constant 0 : index
      %524 = vector.load %arg10[%c0_283, %c0_284] : memref<2x4xf32, #tpu.memory_space<vmem>>, vector<2x4xf32>
      tpu.vector_store %arg10[%c0_283, %c0_284], %523 {strides = array<i32>} : memref<2x4xf32, #tpu.memory_space<vmem>>, vector<2x4xf32>,
    } else {
    }
    return
  }
  func.func @transform_0(%arg0: i32, %arg1: i32) -> (i32, i32, i32) {
    %c0_i32 = arith.constant 0 : i32
    %c0_i32_0 = arith.constant 0 : i32
    return %arg0, %arg1, %c0_i32 : i32, i32, i32
  }
  func.func @transform_1(%arg0: i32, %arg1: i32) -> (i32, i32) {
    %c0_i32 = arith.constant 0 : i32
    %c0_i32_0 = arith.constant 0 : i32
    %c0_i32_1 = arith.constant 0 : i32
    return %c0_i32, %c0_i32_0 : i32, i32
  }
  func.func @transform_2(%arg0: i32, %arg1: i32) -> (i32, i32) {
    %c0_i32 = arith.constant 0 : i32
    %c0_i32_0 = arith.constant 0 : i32
    %c0_i32_1 = arith.constant 0 : i32
    return %c0_i32, %c0_i32_0 : i32, i32
  }
  func.func @transform_3(%arg0: i32, %arg1: i32) -> (i32, i32) {
    %c0_i32 = arith.constant 0 : i32
    %c0_i32_0 = arith.constant 0 : i32
    %c0_i32_1 = arith.constant 0 : i32
    return %c0_i32, %c0_i32_0 : i32, i32
  }
  func.func @transform_4(%arg0: i32, %arg1: i32) -> (i32, i32, i32) {
    %c0_i32 = arith.constant 0 : i32
    %c0_i32_0 = arith.constant 0 : i32
    %c0_i32_1 = arith.constant 0 : i32
    %c0_i32_2 = arith.constant 0 : i32
    return %c0_i32, %c0_i32_0, %c0_i32_1 : i32, i32, i32
  }
  func.func @transform_5(%arg0: i32, %arg1: i32) -> (i32, i32, i32) {
    %c0_i32 = arith.constant 0 : i32
    %c0_i32_0 = arith.constant 0 : i32
    %c0_i32_1 = arith.constant 0 : i32
    %c0_i32_2 = arith.constant 0 : i32
    return %c0_i32, %c0_i32_0, %c0_i32_1 : i32, i32, i32
  }
  func.func @transform_6(%arg0: i32, %arg1: i32) -> (i32, i32) {
    %c0_i32 = arith.constant 0 : i32
    %c0_i32_0 = arith.constant 0 : i32
    %c0_i32_1 = arith.constant 0 : i32
    return %c0_i32, %c0_i32_0 : i32, i32
  }
  func.func @transform_7(%arg0: i32, %arg1: i32) -> (i32, i32) {
    %c0_i32 = arith.constant 0 : i32
    %c0_i32_0 = arith.constant 0 : i32
    %c0_i32_1 = arith.constant 0 : i32
    return %c0_i32, %c0_i32_0 : i32, i32
  }
  func.func @transform_8(%arg0: i32, %arg1: i32) -> (i32, i32) {
    %c0_i32 = arith.constant 0 : i32
    %c0_i32_0 = arith.constant 0 : i32
    return %arg0, %c0_i32 : i32, i32
  }
}

</mosaic_0001>

<llo_original>
// kernel: tpu_custom_call.1
$region0: #{tpu_custom_call.1}
  #allocation0 [shape = 'u32[]', space=smem, size = 0x4, offset = 0x4, fixed_abs, tag = 'smem constant byte address 0x4 - core index']
  #allocation1 [shape = 'u32[144,128]{1,0:T(1,128)}', space=vmem, size = 0x12000, scoped, tag = 'internal scratch']
  #allocation2 [shape = 'f32[2,2,32]{2,1,0:T(2,128)}', space=vmem, size = 0x800, scoped, tag = 'scratch operand']
  #allocation3 [shape = 'f32[2,2,32]{2,1,0:T(2,128)}', space=vmem, size = 0x800, scoped, tag = 'scratch operand']
  #allocation4 [shape = 'f32[16,128]{1,0:T(8,128)}', space=vmem, size = 0x2000, scoped, tag = 'scratch operand']
  %s0 = inlined_call_operand.hbm [shape: f32[1,16,16], index: 0, kind: input, shape index: {}]
  %s1 = inlined_call_operand.hbm [shape: f32[16,128], index: 1, kind: input, shape index: {}]
  %s2 = inlined_call_operand.vmem [shape: f32[32,128], index: 2, kind: input, shape index: {}]
  %s3 = inlined_call_operand.vmem [shape: f32[1,128], index: 3, kind: input, shape index: {}]
  %s4 = inlined_call_operand.hbm [shape: f32[1,64,128], index: 4, kind: input, shape index: {}]
  %s5 = inlined_call_operand.vmem [shape: f32[1,1,128], index: 5, kind: input, shape index: {}]
  %s6 = inlined_call_operand.vmem [shape: f32[32,4], index: 6, kind: input, shape index: {}]
  %s7 = inlined_call_operand.vmem [shape: f32[1,4], index: 7, kind: input, shape index: {}]
  %s8 = inlined_call_operand.hbm [shape: f32[2,4], index: 8, kind: output, shape index: {}]
  %s9 = sld [smem:[#allocation0]]
  $region62: #{tpu_custom_call.1} parent=0
    _
  %s11 = ssub.s32 1, %s9
  %s12 = scalar_select 0, %s11, %s9
  $region1: #{tpu_custom_call.1} parent=0
    #allocation5 [shape = 'u8[8192]{0}', space=vmem, size = 0x2000, scoped, tag = 'input window, operand 0, single buffered']
    #allocation6 [shape = 's32[1]{0}', space=sflag, size = 0x4, scoped, tag = 'scoped memory for tpu_custom_call.1']
    #allocation7 [shape = 's32[1]{0}', space=sflag, size = 0x4, scoped, tag = 'scoped memory for tpu_custom_call.1']
    #allocation8 [shape = 'u8[8192]{0}', space=vmem, size = 0x2000, scoped, tag = 'input window, operand 1, single buffered']
    #allocation9 [shape = 's32[1]{0}', space=sflag, size = 0x4, scoped, tag = 'scoped memory for tpu_custom_call.1']
    #allocation10 [shape = 'u8[32768]{0}', space=vmem, size = 0x8000, scoped, tag = 'input window, operand 4, single buffered']
    #allocation11 [shape = 'u8[1024]{0}', space=vmem, size = 0x400, scoped, tag = 'output window, operand 0, single buffered']
    %13 = vsyncpa [#allocation6], 0
    %14 = vsyncpa [#allocation9], 0
    %15 = vsyncpa [#allocation7], 0
    // Predicated region
    $region2: #{tpu_custom_call.1} parent=1 // pred_check
      _
    $region3: #{tpu_custom_call.1} parent=1 // pred_check_branch
      %17 = sbr.rel (0) target = $region5
    $region4: #{tpu_custom_call.1} parent=1 // pred_region
      %s19 = ssub.s32 256, 256
      %20 = vsyncadd [#allocation6], %s19
      %s21 = sshll.u32 [#allocation5], 4
      %s22 = int_to_ptr.vmem [resolvable:$true] %s21
      %27 = dma.hbm_to_vmem [thread:$0]  %s0, 256, %s22, [#allocation6], 128, 128, 8
    $region5: #{tpu_custom_call.1} parent=1 // pred_fallthru
      _
    // Predicated region
    $region6: #{tpu_custom_call.1} parent=1 // pred_check
      _
    $region7: #{tpu_custom_call.1} parent=1 // pred_check_branch
      %29 = sbr.rel (0) target = $region9
    $region8: #{tpu_custom_call.1} parent=1 // pred_region
      %s31 = ssub.s32 256, 256
      %32 = vsyncadd [#allocation9], %s31
      %s33 = sshll.u32 [#allocation8], 4
      %s34 = int_to_ptr.vmem [resolvable:$true] %s33
      %39 = dma.hbm_to_vmem [thread:$0]  %s1, 256, %s34, [#allocation9], 128, 128, 8
    $region9: #{tpu_custom_call.1} parent=1 // pred_fallthru
      _
    // Predicated region
    $region10: #{tpu_custom_call.1} parent=1 // pred_check
      _
    $region11: #{tpu_custom_call.1} parent=1 // pred_check_branch
      %41 = sbr.rel (0) target = $region13
    $region12: #{tpu_custom_call.1} parent=1 // pred_region
      _
    $region13: #{tpu_custom_call.1} parent=1 // pred_fallthru
      _
    // Predicated region
    $region14: #{tpu_custom_call.1} parent=1 // pred_check
      _
    $region15: #{tpu_custom_call.1} parent=1 // pred_check_branch
      %43 = sbr.rel (0) target = $region17
    $region16: #{tpu_custom_call.1} parent=1 // pred_region
      _
    $region17: #{tpu_custom_call.1} parent=1 // pred_fallthru
      _
    // Predicated region
    $region18: #{tpu_custom_call.1} parent=1 // pred_check
      _
    $region19: #{tpu_custom_call.1} parent=1 // pred_check_branch
      %45 = sbr.rel (0) target = $region21
    $region20: #{tpu_custom_call.1} parent=1 // pred_region
      %s47 = ssub.s32 1024, 1024
      %48 = vsyncadd [#allocation9], %s47
      %s49 = sshll.u32 [#allocation10], 4
      %s50 = int_to_ptr.vmem [resolvable:$true] %s49
      %55 = dma.hbm_to_vmem [thread:$0]  %s4, 1024, %s50, [#allocation9], 128, 128, 8
    $region21: #{tpu_custom_call.1} parent=1 // pred_fallthru
      _
    // Predicated region
    $region22: #{tpu_custom_call.1} parent=1 // pred_check
      _
    $region23: #{tpu_custom_call.1} parent=1 // pred_check_branch
      %57 = sbr.rel (0) target = $region25
    $region24: #{tpu_custom_call.1} parent=1 // pred_region
      _
    $region25: #{tpu_custom_call.1} parent=1 // pred_fallthru
      _
    // Predicated region
    $region26: #{tpu_custom_call.1} parent=1 // pred_check
      _
    $region27: #{tpu_custom_call.1} parent=1 // pred_check_branch
      %59 = sbr.rel (0) target = $region29
    $region28: #{tpu_custom_call.1} parent=1 // pred_region
      _
    $region29: #{tpu_custom_call.1} parent=1 // pred_fallthru
      _
    // Predicated region
    $region30: #{tpu_custom_call.1} parent=1 // pred_check
      _
    $region31: #{tpu_custom_call.1} parent=1 // pred_check_branch
      %61 = sbr.rel (0) target = $region33
    $region32: #{tpu_custom_call.1} parent=1 // pred_region
      _
    $region33: #{tpu_custom_call.1} parent=1 // pred_fallthru
      _
    // Predicated region
    $region34: #{tpu_custom_call.1} parent=1 // pred_check
      _
    $region35: #{tpu_custom_call.1} parent=1 // pred_check_branch
      %63 = sbr.rel (0) target = $region37
    $region36: #{tpu_custom_call.1} parent=1 // pred_region
      %64 = dma.done [#allocation6], 256
    $region37: #{tpu_custom_call.1} parent=1 // pred_fallthru
      _
    // Predicated region
    $region38: #{tpu_custom_call.1} parent=1 // pred_check
      _
    $region39: #{tpu_custom_call.1} parent=1 // pred_check_branch
      %66 = sbr.rel (0) target = $region41
    $region40: #{tpu_custom_call.1} parent=1 // pred_region
      %67 = dma.done [#allocation9], 256
    $region41: #{tpu_custom_call.1} parent=1 // pred_fallthru
      _
    // Predicated region
    $region42: #{tpu_custom_call.1} parent=1 // pred_check
      _
    $region43: #{tpu_custom_call.1} parent=1 // pred_check_branch
      %69 = sbr.rel (0) target = $region45
    $region44: #{tpu_custom_call.1} parent=1 // pred_region
      %70 = dma.done [#allocation9], 1024
    $region45: #{tpu_custom_call.1} parent=1 // pred_fallthru
      _
    %p71 = scmp.eq.s32.totalorder 0, 0
    // Predicated region
    $region46: #{tpu_custom_call.1} parent=1 // pred_check
      %p72 = pneg %p71
    $region47: #{tpu_custom_call.1} parent=1 // pred_check_branch
      %74 = sbr.rel (%p72) target = $region49
    $region48: #{tpu_custom_call.1} parent=1 // pred_region
      %vm75 = vcmask 254976
      %76 = vst.msk [vmem:[#allocation2] sm:$0x3] %vm75, 0.0
      %77 = vst.msk [vmem:[#allocation2 + $0x2] sm:$0x3] %vm75, 0.0
      %78 = vst.msk [vmem:[#allocation3] sm:$0x3] %vm75, 0.0
      %79 = vst.msk [vmem:[#allocation3 + $0x2] sm:$0x3] %vm75, 0.0
    $region49: #{tpu_custom_call.1} parent=1 // pred_fallthru
      _
    %v80 = vld [vmem:[%s2] sm:$0xff]
    %v81 = vld [vmem:[%s2 + $0x8] sm:$0xff]
    %v82 = vld [vmem:[%s2 + $0x10] sm:$0xff]
    %v83 = vld [vmem:[%s2 + $0x18] sm:$0xff]
    %v84 = vld [vmem:[#allocation10] sm:$0xff]
    %v85 = vld [vmem:[#allocation10 + $0x8] sm:$0xff]
    %v86 = vld [vmem:[#allocation10 + $0x10] sm:$0xff]
    %v87 = vld [vmem:[#allocation10 + $0x18] sm:$0xff]
    %v88 = vld [vmem:[#allocation10 + $0x20] sm:$0xff]
    %v89 = vld [vmem:[#allocation10 + $0x28] sm:$0xff]
    %v90 = vld [vmem:[#allocation10 + $0x30] sm:$0xff]
    %v91 = vld [vmem:[#allocation10 + $0x38] sm:$0xff]
    %v92 = vld [vmem:[%s5] sm:$0x1]
    %v94 = vlaneseq
    %v95 = vshrl.u32 %v94, 7
    %v96 = vsub.s32 0, %v95
    %v97 = vrot.slane %v92, %v96
    %v99 = vld [vmem:[#allocation5] sm:$0xff]
    %v100 = vld [vmem:[#allocation5 + $0x8] sm:$0xff]
    %v101 = vld [vmem:[#allocation8] sm:$0xff]
    %v102 = vld [vmem:[#allocation8 + $0x8] sm:$0xff]
    %v103 = vld [vmem:[%s3] sm:$0x1]
    %v105 = vlaneseq
    %v106 = vshrl.u32 %v105, 7
    %v107 = vsub.s32 0, %v106
    %v108 = vrot.slane %v103, %v107
    %vm110 = vcmask 130048
    %v112 = vsel %vm110, %v99, 0
    %v115 = vsel %vm110, %v100, 0
    %117 = vmatprep.subr.mxu0 0.0
    %118 = vmatpush1.msra.mxu0 0.0
    %119 = vmatprep.subr.mxu0 0.0
    %120 = vmatpush1.msra.mxu0 0.0
    %121 = vmatprep.subr.mxu0 0.0
    %122 = vmatpush1.msra.mxu0 0.0
    %123 = vmatprep.subr.mxu0 0.0
    %124 = vmatpush1.msra.mxu0 0.0
    %125 = vmatprep.subr.mxu0 0.0
    %126 = vmatpush1.msra.mxu0 0.0
    %127 = vmatprep.subr.mxu0 0.0
    %128 = vmatpush1.msra.mxu0 0.0
    %129 = vmatprep.subr.mxu0 0.0
    %130 = vmatpush1.msra.mxu0 0.0
    %131 = vmatprep.subr.mxu0 0.0
    %132 = vmatpush1.msra.mxu0 0.0
    %133 = vmatprep.subr.mxu0 0.0
    %134 = vmatpush1.msra.mxu0 0.0
    %135 = vmatprep.subr.mxu0 0.0
    %136 = vmatpush1.msra.mxu0 0.0
    %137 = vmatprep.subr.mxu0 0.0
    %138 = vmatpush1.msra.mxu0 0.0
    %139 = vmatprep.subr.mxu0 0.0
    %140 = vmatpush1.msra.mxu0 0.0
    %141 = vmatprep.subr.mxu0 0.0
    %142 = vmatpush1.msra.mxu0 0.0
    %143 = vmatprep.subr.mxu0 0.0
    %144 = vmatpush1.msra.mxu0 0.0
    %145 = vmatprep.subr.mxu0 0.0
    %146 = vmatpush1.msra.mxu0 %v102
    %147 = vmatprep.subr.mxu0 0.0
    %148 = vmatpush1.msra.mxu0 %v101
    %149 = vmatprep.subr.mxu0 0.0
    %150 = vmatpush2.msra.mxu0 0.0
    %151 = vmatprep.subr.mxu0 0.0
    %152 = vmatpush2.msra.mxu0 0.0
    %153 = vmatprep.subr.mxu0 0.0
    %154 = vmatpush2.msra.mxu0 0.0
    %155 = vmatprep.subr.mxu0 0.0
    %156 = vmatpush2.msra.mxu0 0.0
    %157 = vmatprep.subr.mxu0 0.0
    %158 = vmatpush2.msra.mxu0 0.0
    %159 = vmatprep.subr.mxu0 0.0
    %160 = vmatpush2.msra.mxu0 0.0
    %161 = vmatprep.subr.mxu0 0.0
    %162 = vmatpush2.msra.mxu0 0.0
    %163 = vmatprep.subr.mxu0 0.0
    %164 = vmatpush2.msra.mxu0 0.0
    %165 = vmatprep.subr.mxu0 0.0
    %166 = vmatpush2.msra.mxu0 0.0
    %167 = vmatprep.subr.mxu0 0.0
    %168 = vmatpush2.msra.mxu0 0.0
    %169 = vmatprep.subr.mxu0 0.0
    %170 = vmatpush2.msra.mxu0 0.0
    %171 = vmatprep.subr.mxu0 0.0
    %172 = vmatpush2.msra.mxu0 0.0
    %173 = vmatprep.subr.mxu0 0.0
    %174 = vmatpush2.msra.mxu0 0.0
    %175 = vmatprep.subr.mxu0 0.0
    %176 = vmatpush2.msra.mxu0 0.0
    %177 = vmatprep.subr.mxu0 0.0
    %178 = vmatpush2.msra.mxu0 0.0
    %179 = vmatprep.subr.mxu0 0.0
    %180 = vmatpush2.msra.mxu0 0.0
    %181 = vmatprep.mubr.f32.mxu0 0.0
    %182 = vmatmul.mubr.f32.gmra.mxu0 %v112
    %v183 = vpop.f32.mrf.mxu0
    %v184 = vadd.f32 %v108, %v183
    %v185 = vpop.f32.mrf.mxu0
    %186 = vmatprep.mubr.f32.mxu0 0.0
    %187 = vmatmul.mubr.f32.gmra.mxu0 %v115
    %v188 = vpop.f32.mrf.mxu0
    %v189 = vadd.f32 %v108, %v188
    %v190 = vpop.f32.mrf.mxu0
    %191 = vdwg.mxu0
    %192 = vst [vmem:[#allocation4] sm:$0xff] %v184
    %193 = vst [vmem:[#allocation4 + $0x8] sm:$0xff] %v189
    %v194 = vld [vmem:[#allocation4] sm:$0x3]
    %v195 = vld [vmem:[#allocation2] sm:$0x3]
    %vm196 = vcmask 261120
    %v198 = vsel %vm196, %v195, 0
    %200 = vmatprep.subr.mxu0 0.0
    %201 = vmatpush1.msra.mxu0 0.0
    %202 = vmatprep.subr.mxu0 0.0
    %203 = vmatpush1.msra.mxu0 0.0
    %204 = vmatprep.subr.mxu0 0.0
    %205 = vmatpush1.msra.mxu0 0.0
    %206 = vmatprep.subr.mxu0 0.0
    %207 = vmatpush1.msra.mxu0 0.0
    %208 = vmatprep.subr.mxu0 0.0
    %209 = vmatpush1.msra.mxu0 0.0
    %210 = vmatprep.subr.mxu0 0.0
    %211 = vmatpush1.msra.mxu0 0.0
    %212 = vmatprep.subr.mxu0 0.0
    %213 = vmatpush1.msra.mxu0 0.0
    %214 = vmatprep.subr.mxu0 0.0
    %215 = vmatpush1.msra.mxu0 0.0
    %216 = vmatprep.subr.mxu0 0.0
    %217 = vmatpush1.msra.mxu0 0.0
    %218 = vmatprep.subr.mxu0 0.0
    %219 = vmatpush1.msra.mxu0 0.0
    %220 = vmatprep.subr.mxu0 0.0
    %221 = vmatpush1.msra.mxu0 0.0
    %222 = vmatprep.subr.mxu0 0.0
    %223 = vmatpush1.msra.mxu0 0.0
    %224 = vmatprep.subr.mxu0 0.0
    %225 = vmatpush1.msra.mxu0 %v83
    %226 = vmatprep.subr.mxu0 0.0
    %227 = vmatpush1.msra.mxu0 %v82
    %228 = vmatprep.subr.mxu0 0.0
    %229 = vmatpush1.msra.mxu0 %v81
    %230 = vmatprep.subr.mxu0 0.0
    %231 = vmatpush1.msra.mxu0 %v80
    %232 = vmatprep.subr.mxu0 0.0
    %233 = vmatpush2.msra.mxu0 0.0
    %234 = vmatprep.subr.mxu0 0.0
    %235 = vmatpush2.msra.mxu0 0.0
    %236 = vmatprep.subr.mxu0 0.0
    %237 = vmatpush2.msra.mxu0 0.0
    %238 = vmatprep.subr.mxu0 0.0
    %239 = vmatpush2.msra.mxu0 0.0
    %240 = vmatprep.subr.mxu0 0.0
    %241 = vmatpush2.msra.mxu0 0.0
    %242 = vmatprep.subr.mxu0 0.0
    %243 = vmatpush2.msra.mxu0 0.0
    %244 = vmatprep.subr.mxu0 0.0
    %245 = vmatpush2.msra.mxu0 0.0
    %246 = vmatprep.subr.mxu0 0.0
    %247 = vmatpush2.msra.mxu0 0.0
    %248 = vmatprep.subr.mxu0 0.0
    %249 = vmatpush2.msra.mxu0 0.0
    %250 = vmatprep.subr.mxu0 0.0
    %251 = vmatpush2.msra.mxu0 0.0
    %252 = vmatprep.subr.mxu0 0.0
    %253 = vmatpush2.msra.mxu0 0.0
    %254 = vmatprep.subr.mxu0 0.0
    %255 = vmatpush2.msra.mxu0 0.0
    %256 = vmatprep.subr.mxu0 0.0
    %257 = vmatpush2.msra.mxu0 0.0
    %258 = vmatprep.subr.mxu0 0.0
    %259 = vmatpush2.msra.mxu0 0.0
    %260 = vmatprep.subr.mxu0 0.0
    %261 = vmatpush2.msra.mxu0 0.0
    %262 = vmatprep.subr.mxu0 0.0
    %263 = vmatpush2.msra.mxu0 0.0
    %264 = vmatprep.mubr.f32.mxu0 0.0
    %265 = vmatmul.mubr.f32.gmra.mxu0 %v198
    %v266 = vpop.f32.mrf.mxu0
    %v267 = vadd.f32 0.0, %v266
    %v268 = vpop.f32.mrf.mxu0
    %269 = vdwg.mxu0
    %v270 = vadd.f32 %v194, %v267
    %v271 = vld [vmem:[#allocation3] sm:$0x3]
    %v272 = vxor.u32 %v270, 2147483648
    %v273 = vmul.f32 %v272, 1.442695
    %v274 = vpow.pop %v273
    %v275 = vadd.f32 %v274, 1.0
    %v276 = vrcp.pop %v275
    %v277 = vmul.f32 1.0, %v276
    %v278 = vtanh.pop %v270
    %280 = vrot.lane.b32.xlu0 %v271, 32
    %v281 = vpop.permute.xlu0 %280
    %v283 = vmul.f32 %v277, %v281
    %285 = vrot.lane.b32.xlu0 %v278, 32
    %v286 = vpop.permute.xlu0 %285
    %v288 = vmul.f32 %v277, %v286
    %290 = vrot.lane.b32.xlu0 %v288, 32
    %v291 = vpop.permute.xlu0 %290
    %v293 = vadd.f32 %v283, %v291
    %v294 = vtanh.pop %v293
    %296 = vrot.lane.b32.xlu0 %v294, 32
    %v297 = vpop.permute.xlu0 %296
    %v299 = vmul.f32 %v277, %v297
    %301 = vrot.lane.b32.xlu0 %v299, 64
    %v302 = vpop.permute.xlu0 %301
    %vm304 = vcmask 254976
    %305 = vst.msk [vmem:[#allocation2] sm:$0x3] %vm304, %v302
    %307 = vrot.lane.b32.xlu0 %v293, 96
    %v308 = vpop.permute.xlu0 %307
    %310 = vst.msk [vmem:[#allocation3] sm:$0x3] %vm304, %v308
    %s311 = scalar_lea.vmem [#allocation2], 2
    %v312 = vld [vmem:[%s311] sm:$0x3]
    %314 = vrot.lane.b32.xlu0 %v312, 32
    %v315 = vpop.permute.xlu0 %314
    %v317 = vsel %vm196, %v302, %v315
    %vm318 = vcmask 523264
    %v320 = vsel %vm318, %v317, 0
    %322 = vmatprep.subr.mxu0 0.0
    %323 = vmatpush1.msra.mxu0 0.0
    %324 = vmatprep.subr.mxu0 0.0
    %325 = vmatpush1.msra.mxu0 0.0
    %326 = vmatprep.subr.mxu0 0.0
    %327 = vmatpush1.msra.mxu0 0.0
    %328 = vmatprep.subr.mxu0 0.0
    %329 = vmatpush1.msra.mxu0 0.0
    %330 = vmatprep.subr.mxu0 0.0
    %331 = vmatpush1.msra.mxu0 0.0
    %332 = vmatprep.subr.mxu0 0.0
    %333 = vmatpush1.msra.mxu0 0.0
    %334 = vmatprep.subr.mxu0 0.0
    %335 = vmatpush1.msra.mxu0 0.0
    %336 = vmatprep.subr.mxu0 0.0
    %337 = vmatpush1.msra.mxu0 0.0
    %338 = vmatprep.subr.mxu0 0.0
    %339 = vmatpush1.msra.mxu0 %v91
    %340 = vmatprep.subr.mxu0 0.0
    %341 = vmatpush1.msra.mxu0 %v90
    %342 = vmatprep.subr.mxu0 0.0
    %343 = vmatpush1.msra.mxu0 %v89
    %344 = vmatprep.subr.mxu0 0.0
    %345 = vmatpush1.msra.mxu0 %v88
    %346 = vmatprep.subr.mxu0 0.0
    %347 = vmatpush1.msra.mxu0 %v87
    %348 = vmatprep.subr.mxu0 0.0
    %349 = vmatpush1.msra.mxu0 %v86
    %350 = vmatprep.subr.mxu0 0.0
    %351 = vmatpush1.msra.mxu0 %v85
    %352 = vmatprep.subr.mxu0 0.0
    %353 = vmatpush1.msra.mxu0 %v84
    %354 = vmatprep.subr.mxu0 0.0
    %355 = vmatpush2.msra.mxu0 0.0
    %356 = vmatprep.subr.mxu0 0.0
    %357 = vmatpush2.msra.mxu0 0.0
    %358 = vmatprep.subr.mxu0 0.0
    %359 = vmatpush2.msra.mxu0 0.0
    %360 = vmatprep.subr.mxu0 0.0
    %361 = vmatpush2.msra.mxu0 0.0
    %362 = vmatprep.subr.mxu0 0.0
    %363 = vmatpush2.msra.mxu0 0.0
    %364 = vmatprep.subr.mxu0 0.0
    %365 = vmatpush2.msra.mxu0 0.0
    %366 = vmatprep.subr.mxu0 0.0
    %367 = vmatpush2.msra.mxu0 0.0
    %368 = vmatprep.subr.mxu0 0.0
    %369 = vmatpush2.msra.mxu0 0.0
    %370 = vmatprep.subr.mxu0 0.0
    %371 = vmatpush2.msra.mxu0 0.0
    %372 = vmatprep.subr.mxu0 0.0
    %373 = vmatpush2.msra.mxu0 0.0
    %374 = vmatprep.subr.mxu0 0.0
    %375 = vmatpush2.msra.mxu0 0.0
    %376 = vmatprep.subr.mxu0 0.0
    %377 = vmatpush2.msra.mxu0 0.0
    %378 = vmatprep.subr.mxu0 0.0
    %379 = vmatpush2.msra.mxu0 0.0
    %380 = vmatprep.subr.mxu0 0.0
    %381 = vmatpush2.msra.mxu0 0.0
    %382 = vmatprep.subr.mxu0 0.0
    %383 = vmatpush2.msra.mxu0 0.0
    %384 = vmatprep.subr.mxu0 0.0
    %385 = vmatpush2.msra.mxu0 0.0
    %386 = vmatprep.mubr.f32.mxu0 0.0
    %387 = vmatmul.mubr.f32.gmra.mxu0 %v320
    %v388 = vpop.f32.mrf.mxu0
    %v389 = vadd.f32 %v97, %v388
    %v390 = vpop.f32.mrf.mxu0
    %391 = vdwg.mxu0
    %s392 = scalar_lea.vmem [#allocation3], 2
    %v393 = vld [vmem:[%s392] sm:$0x3]
    %v394 = vxor.u32 %v389, 2147483648
    %v395 = vmul.f32 %v394, 1.442695
    %v396 = vpow.pop %v395
    %v397 = vadd.f32 %v396, 1.0
    %v398 = vrcp.pop %v397
    %v399 = vmul.f32 1.0, %v398
    %v400 = vtanh.pop %v389
    %402 = vrot.lane.b32.xlu0 %v393, 32
    %v403 = vpop.permute.xlu0 %402
    %v405 = vmul.f32 %v399, %v403
    %407 = vrot.lane.b32.xlu0 %v400, 32
    %v408 = vpop.permute.xlu0 %407
    %v410 = vmul.f32 %v399, %v408
    %412 = vrot.lane.b32.xlu0 %v410, 32
    %v413 = vpop.permute.xlu0 %412
    %v415 = vadd.f32 %v405, %v413
    %v416 = vtanh.pop %v415
    %418 = vrot.lane.b32.xlu0 %v416, 32
    %v419 = vpop.permute.xlu0 %418
    %v421 = vmul.f32 %v399, %v419
    %423 = vrot.lane.b32.xlu0 %v421, 64
    %v424 = vpop.permute.xlu0 %423
    %426 = vst.msk [vmem:[%s311] sm:$0x3] %vm304, %v424
    %428 = vrot.lane.b32.xlu0 %v415, 96
    %v429 = vpop.permute.xlu0 %428
    %431 = vst.msk [vmem:[%s392] sm:$0x3] %vm304, %v429
    %v432 = vld [vmem:[#allocation4 + $0x2] sm:$0x3]
    %v433 = vld [vmem:[#allocation2] sm:$0x3]
    %v435 = vsel %vm196, %v433, 0
    %437 = vmatprep.subr.mxu0 0.0
    %438 = vmatpush1.msra.mxu0 0.0
    %439 = vmatprep.subr.mxu0 0.0
    %440 = vmatpush1.msra.mxu0 0.0
    %441 = vmatprep.subr.mxu0 0.0
    %442 = vmatpush1.msra.mxu0 0.0
    %443 = vmatprep.subr.mxu0 0.0
    %444 = vmatpush1.msra.mxu0 0.0
    %445 = vmatprep.subr.mxu0 0.0
    %446 = vmatpush1.msra.mxu0 0.0
    %447 = vmatprep.subr.mxu0 0.0
    %448 = vmatpush1.msra.mxu0 0.0
    %449 = vmatprep.subr.mxu0 0.0
    %450 = vmatpush1.msra.mxu0 0.0
    %451 = vmatprep.subr.mxu0 0.0
    %452 = vmatpush1.msra.mxu0 0.0
    %453 = vmatprep.subr.mxu0 0.0
    %454 = vmatpush1.msra.mxu0 0.0
    %455 = vmatprep.subr.mxu0 0.0
    %456 = vmatpush1.msra.mxu0 0.0
    %457 = vmatprep.subr.mxu0 0.0
    %458 = vmatpush1.msra.mxu0 0.0
    %459 = vmatprep.subr.mxu0 0.0
    %460 = vmatpush1.msra.mxu0 0.0
    %461 = vmatprep.subr.mxu0 0.0
    %462 = vmatpush1.msra.mxu0 %v83
    %463 = vmatprep.subr.mxu0 0.0
    %464 = vmatpush1.msra.mxu0 %v82
    %465 = vmatprep.subr.mxu0 0.0
    %466 = vmatpush1.msra.mxu0 %v81
    %467 = vmatprep.subr.mxu0 0.0
    %468 = vmatpush1.msra.mxu0 %v80
    %469 = vmatprep.subr.mxu0 0.0
    %470 = vmatpush2.msra.mxu0 0.0
    %471 = vmatprep.subr.mxu0 0.0
    %472 = vmatpush2.msra.mxu0 0.0
    %473 = vmatprep.subr.mxu0 0.0
    %474 = vmatpush2.msra.mxu0 0.0
    %475 = vmatprep.subr.mxu0 0.0
    %476 = vmatpush2.msra.mxu0 0.0
    %477 = vmatprep.subr.mxu0 0.0
    %478 = vmatpush2.msra.mxu0 0.0
    %479 = vmatprep.subr.mxu0 0.0
    %480 = vmatpush2.msra.mxu0 0.0
    %481 = vmatprep.subr.mxu0 0.0
    %482 = vmatpush2.msra.mxu0 0.0
    %483 = vmatprep.subr.mxu0 0.0
    %484 = vmatpush2.msra.mxu0 0.0
    %485 = vmatprep.subr.mxu0 0.0
    %486 = vmatpush2.msra.mxu0 0.0
    %487 = vmatprep.subr.mxu0 0.0
    %488 = vmatpush2.msra.mxu0 0.0
    %489 = vmatprep.subr.mxu0 0.0
    %490 = vmatpush2.msra.mxu0 0.0
    %491 = vmatprep.subr.mxu0 0.0
    %492 = vmatpush2.msra.mxu0 0.0
    %493 = vmatprep.subr.mxu0 0.0
    %494 = vmatpush2.msra.mxu0 0.0
    %495 = vmatprep.subr.mxu0 0.0
    %496 = vmatpush2.msra.mxu0 0.0
    %497 = vmatprep.subr.mxu0 0.0
    %498 = vmatpush2.msra.mxu0 0.0
    %499 = vmatprep.subr.mxu0 0.0
    %500 = vmatpush2.msra.mxu0 0.0
    %501 = vmatprep.mubr.f32.mxu0 0.0
    %502 = vmatmul.mubr.f32.gmra.mxu0 %v435
    %v503 = vpop.f32.mrf.mxu0
    %v504 = vadd.f32 0.0, %v503
    %v505 = vpop.f32.mrf.mxu0
    %506 = vdwg.mxu0
    %v507 = vadd.f32 %v432, %v504
    %v508 = vld [vmem:[#allocation3] sm:$0x3]
    %v509 = vxor.u32 %v507, 2147483648
    %v510 = vmul.f32 %v509, 1.442695
    %v511 = vpow.pop %v510
    %v512 = vadd.f32 %v511, 1.0
    %v513 = vrcp.pop %v512
    %v514 = vmul.f32 1.0, %v513
    %v515 = vtanh.pop %v507
    %517 = vrot.lane.b32.xlu0 %v508, 32
    %v518 = vpop.permute.xlu0 %517
    %v520 = vmul.f32 %v514, %v518
    %522 = vrot.lane.b32.xlu0 %v515, 32
    %v523 = vpop.permute.xlu0 %522
    %v525 = vmul.f32 %v514, %v523
    %527 = vrot.lane.b32.xlu0 %v525, 32
    %v528 = vpop.permute.xlu0 %527
    %v530 = vadd.f32 %v520, %v528
    %v531 = vtanh.pop %v530
    %533 = vrot.lane.b32.xlu0 %v531, 32
    %v534 = vpop.permute.xlu0 %533
    %v536 = vmul.f32 %v514, %v534
    %538 = vrot.lane.b32.xlu0 %v536, 64
    %v539 = vpop.permute.xlu0 %538
    %541 = vst.msk [vmem:[#allocation2] sm:$0x3] %vm304, %v539
    %543 = vrot.lane.b32.xlu0 %v530, 96
    %v544 = vpop.permute.xlu0 %543
    %546 = vst.msk [vmem:[#allocation3] sm:$0x3] %vm304, %v544
    %v547 = vld [vmem:[%s311] sm:$0x3]
    %549 = vrot.lane.b32.xlu0 %v547, 32
    %v550 = vpop.permute.xlu0 %549
    %v552 = vsel %vm196, %v539, %v550
    %v554 = vsel %vm318, %v552, 0
    %556 = vmatprep.subr.mxu0 0.0
    %557 = vmatpush1.msra.mxu0 0.0
    %558 = vmatprep.subr.mxu0 0.0
    %559 = vmatpush1.msra.mxu0 0.0
    %560 = vmatprep.subr.mxu0 0.0
    %561 = vmatpush1.msra.mxu0 0.0
    %562 = vmatprep.subr.mxu0 0.0
    %563 = vmatpush1.msra.mxu0 0.0
    %564 = vmatprep.subr.mxu0 0.0
    %565 = vmatpush1.msra.mxu0 0.0
    %566 = vmatprep.subr.mxu0 0.0
    %567 = vmatpush1.msra.mxu0 0.0
    %568 = vmatprep.subr.mxu0 0.0
    %569 = vmatpush1.msra.mxu0 0.0
    %570 = vmatprep.subr.mxu0 0.0
    %571 = vmatpush1.msra.mxu0 0.0
    %572 = vmatprep.subr.mxu0 0.0
    %573 = vmatpush1.msra.mxu0 %v91
    %574 = vmatprep.subr.mxu0 0.0
    %575 = vmatpush1.msra.mxu0 %v90
    %576 = vmatprep.subr.mxu0 0.0
    %577 = vmatpush1.msra.mxu0 %v89
    %578 = vmatprep.subr.mxu0 0.0
    %579 = vmatpush1.msra.mxu0 %v88
    %580 = vmatprep.subr.mxu0 0.0
    %581 = vmatpush1.msra.mxu0 %v87
    %582 = vmatprep.subr.mxu0 0.0
    %583 = vmatpush1.msra.mxu0 %v86
    %584 = vmatprep.subr.mxu0 0.0
    %585 = vmatpush1.msra.mxu0 %v85
    %586 = vmatprep.subr.mxu0 0.0
    %587 = vmatpush1.msra.mxu0 %v84
    %588 = vmatprep.subr.mxu0 0.0
    %589 = vmatpush2.msra.mxu0 0.0
    %590 = vmatprep.subr.mxu0 0.0
    %591 = vmatpush2.msra.mxu0 0.0
    %592 = vmatprep.subr.mxu0 0.0
    %593 = vmatpush2.msra.mxu0 0.0
    %594 = vmatprep.subr.mxu0 0.0
    %595 = vmatpush2.msra.mxu0 0.0
    %596 = vmatprep.subr.mxu0 0.0
    %597 = vmatpush2.msra.mxu0 0.0
    %598 = vmatprep.subr.mxu0 0.0
    %599 = vmatpush2.msra.mxu0 0.0
    %600 = vmatprep.subr.mxu0 0.0
    %601 = vmatpush2.msra.mxu0 0.0
    %602 = vmatprep.subr.mxu0 0.0
    %603 = vmatpush2.msra.mxu0 0.0
    %604 = vmatprep.subr.mxu0 0.0
    %605 = vmatpush2.msra.mxu0 0.0
    %606 = vmatprep.subr.mxu0 0.0
    %607 = vmatpush2.msra.mxu0 0.0
    %608 = vmatprep.subr.mxu0 0.0
    %609 = vmatpush2.msra.mxu0 0.0
    %610 = vmatprep.subr.mxu0 0.0
    %611 = vmatpush2.msra.mxu0 0.0
    %612 = vmatprep.subr.mxu0 0.0
    %613 = vmatpush2.msra.mxu0 0.0
    %614 = vmatprep.subr.mxu0 0.0
    %615 = vmatpush2.msra.mxu0 0.0
    %616 = vmatprep.subr.mxu0 0.0
    %617 = vmatpush2.msra.mxu0 0.0
    %618 = vmatprep.subr.mxu0 0.0
    %619 = vmatpush2.msra.mxu0 0.0
    %620 = vmatprep.mubr.f32.mxu0 0.0
    %621 = vmatmul.mubr.f32.gmra.mxu0 %v554
    %v622 = vpop.f32.mrf.mxu0
    %v623 = vadd.f32 %v97, %v622
    %v624 = vpop.f32.mrf.mxu0
    %625 = vdwg.mxu0
    %v626 = vld [vmem:[%s392] sm:$0x3]
    %v627 = vxor.u32 %v623, 2147483648
    %v628 = vmul.f32 %v627, 1.442695
    %v629 = vpow.pop %v628
    %v630 = vadd.f32 %v629, 1.0
    %v631 = vrcp.pop %v630
    %v632 = vmul.f32 1.0, %v631
    %v633 = vtanh.pop %v623
    %635 = vrot.lane.b32.xlu0 %v626, 32
    %v636 = vpop.permute.xlu0 %635
    %v638 = vmul.f32 %v632, %v636
    %640 = vrot.lane.b32.xlu0 %v633, 32
    %v641 = vpop.permute.xlu0 %640
    %v643 = vmul.f32 %v632, %v641
    %645 = vrot.lane.b32.xlu0 %v643, 32
    %v646 = vpop.permute.xlu0 %645
    %v648 = vadd.f32 %v638, %v646
    %v649 = vtanh.pop %v648
    %651 = vrot.lane.b32.xlu0 %v649, 32
    %v652 = vpop.permute.xlu0 %651
    %v654 = vmul.f32 %v632, %v652
    %656 = vrot.lane.b32.xlu0 %v654, 64
    %v657 = vpop.permute.xlu0 %656
    %659 = vst.msk [vmem:[%s311] sm:$0x3] %vm304, %v657
    %661 = vrot.lane.b32.xlu0 %v648, 96
    %v662 = vpop.permute.xlu0 %661
    %664 = vst.msk [vmem:[%s392] sm:$0x3] %vm304, %v662
    %v665 = vld [vmem:[#allocation4 + $0x4] sm:$0x3]
    %v666 = vld [vmem:[#allocation2] sm:$0x3]
    %v668 = vsel %vm196, %v666, 0
    %670 = vmatprep.subr.mxu0 0.0
    %671 = vmatpush1.msra.mxu0 0.0
    %672 = vmatprep.subr.mxu0 0.0
    %673 = vmatpush1.msra.mxu0 0.0
    %674 = vmatprep.subr.mxu0 0.0
    %675 = vmatpush1.msra.mxu0 0.0
    %676 = vmatprep.subr.mxu0 0.0
    %677 = vmatpush1.msra.mxu0 0.0
    %678 = vmatprep.subr.mxu0 0.0
    %679 = vmatpush1.msra.mxu0 0.0
    %680 = vmatprep.subr.mxu0 0.0
    %681 = vmatpush1.msra.mxu0 0.0
    %682 = vmatprep.subr.mxu0 0.0
    %683 = vmatpush1.msra.mxu0 0.0
    %684 = vmatprep.subr.mxu0 0.0
    %685 = vmatpush1.msra.mxu0 0.0
    %686 = vmatprep.subr.mxu0 0.0
    %687 = vmatpush1.msra.mxu0 0.0
    %688 = vmatprep.subr.mxu0 0.0
    %689 = vmatpush1.msra.mxu0 0.0
    %690 = vmatprep.subr.mxu0 0.0
    %691 = vmatpush1.msra.mxu0 0.0
    %692 = vmatprep.subr.mxu0 0.0
    %693 = vmatpush1.msra.mxu0 0.0
    %694 = vmatprep.subr.mxu0 0.0
    %695 = vmatpush1.msra.mxu0 %v83
    %696 = vmatprep.subr.mxu0 0.0
    %697 = vmatpush1.msra.mxu0 %v82
    %698 = vmatprep.subr.mxu0 0.0
    %699 = vmatpush1.msra.mxu0 %v81
    %700 = vmatprep.subr.mxu0 0.0
    %701 = vmatpush1.msra.mxu0 %v80
    %702 = vmatprep.subr.mxu0 0.0
    %703 = vmatpush2.msra.mxu0 0.0
    %704 = vmatprep.subr.mxu0 0.0
    %705 = vmatpush2.msra.mxu0 0.0
    %706 = vmatprep.subr.mxu0 0.0
    %707 = vmatpush2.msra.mxu0 0.0
    %708 = vmatprep.subr.mxu0 0.0
    %709 = vmatpush2.msra.mxu0 0.0
    %710 = vmatprep.subr.mxu0 0.0
    %711 = vmatpush2.msra.mxu0 0.0
    %712 = vmatprep.subr.mxu0 0.0
    %713 = vmatpush2.msra.mxu0 0.0
    %714 = vmatprep.subr.mxu0 0.0
    %715 = vmatpush2.msra.mxu0 0.0
    %716 = vmatprep.subr.mxu0 0.0
    %717 = vmatpush2.msra.mxu0 0.0
    %718 = vmatprep.subr.mxu0 0.0
    %719 = vmatpush2.msra.mxu0 0.0
    %720 = vmatprep.subr.mxu0 0.0
    %721 = vmatpush2.msra.mxu0 0.0
    %722 = vmatprep.subr.mxu0 0.0
    %723 = vmatpush2.msra.mxu0 0.0
    %724 = vmatprep.subr.mxu0 0.0
    %725 = vmatpush2.msra.mxu0 0.0
    %726 = vmatprep.subr.mxu0 0.0
    %727 = vmatpush2.msra.mxu0 0.0
    %728 = vmatprep.subr.mxu0 0.0
    %729 = vmatpush2.msra.mxu0 0.0
    %730 = vmatprep.subr.mxu0 0.0
    %731 = vmatpush2.msra.mxu0 0.0
    %732 = vmatprep.subr.mxu0 0.0
    %733 = vmatpush2.msra.mxu0 0.0
    %734 = vmatprep.mubr.f32.mxu0 0.0
    %735 = vmatmul.mubr.f32.gmra.mxu0 %v668
    %v736 = vpop.f32.mrf.mxu0
    %v737 = vadd.f32 0.0, %v736
    %v738 = vpop.f32.mrf.mxu0
    %739 = vdwg.mxu0
    %v740 = vadd.f32 %v665, %v737
    %v741 = vld [vmem:[#allocation3] sm:$0x3]
    %v742 = vxor.u32 %v740, 2147483648
    %v743 = vmul.f32 %v742, 1.442695
    %v744 = vpow.pop %v743
    %v745 = vadd.f32 %v744, 1.0
    %v746 = vrcp.pop %v745
    %v747 = vmul.f32 1.0, %v746
    %v748 = vtanh.pop %v740
    %750 = vrot.lane.b32.xlu0 %v741, 32
    %v751 = vpop.permute.xlu0 %750
    %v753 = vmul.f32 %v747, %v751
    %755 = vrot.lane.b32.xlu0 %v748, 32
    %v756 = vpop.permute.xlu0 %755
    %v758 = vmul.f32 %v747, %v756
    %760 = vrot.lane.b32.xlu0 %v758, 32
    %v761 = vpop.permute.xlu0 %760
    %v763 = vadd.f32 %v753, %v761
    %v764 = vtanh.pop %v763
    %766 = vrot.lane.b32.xlu0 %v764, 32
    %v767 = vpop.permute.xlu0 %766
    %v769 = vmul.f32 %v747, %v767
    %771 = vrot.lane.b32.xlu0 %v769, 64
    %v772 = vpop.permute.xlu0 %771
    %774 = vst.msk [vmem:[#allocation2] sm:$0x3] %vm304, %v772
    %776 = vrot.lane.b32.xlu0 %v763, 96
    %v777 = vpop.permute.xlu0 %776
    %779 = vst.msk [vmem:[#allocation3] sm:$0x3] %vm304, %v777
    %v780 = vld [vmem:[%s311] sm:$0x3]
    %782 = vrot.lane.b32.xlu0 %v780, 32
    %v783 = vpop.permute.xlu0 %782
    %v785 = vsel %vm196, %v772, %v783
    %v787 = vsel %vm318, %v785, 0
    %789 = vmatprep.subr.mxu0 0.0
    %790 = vmatpush1.msra.mxu0 0.0
    %791 = vmatprep.subr.mxu0 0.0
    %792 = vmatpush1.msra.mxu0 0.0
    %793 = vmatprep.subr.mxu0 0.0
    %794 = vmatpush1.msra.mxu0 0.0
    %795 = vmatprep.subr.mxu0 0.0
    %796 = vmatpush1.msra.mxu0 0.0
    %797 = vmatprep.subr.mxu0 0.0
    %798 = vmatpush1.msra.mxu0 0.0
    %799 = vmatprep.subr.mxu0 0.0
    %800 = vmatpush1.msra.mxu0 0.0
    %801 = vmatprep.subr.mxu0 0.0
    %802 = vmatpush1.msra.mxu0 0.0
    %803 = vmatprep.subr.mxu0 0.0
    %804 = vmatpush1.msra.mxu0 0.0
    %805 = vmatprep.subr.mxu0 0.0
    %806 = vmatpush1.msra.mxu0 %v91
    %807 = vmatprep.subr.mxu0 0.0
    %808 = vmatpush1.msra.mxu0 %v90
    %809 = vmatprep.subr.mxu0 0.0
    %810 = vmatpush1.msra.mxu0 %v89
    %811 = vmatprep.subr.mxu0 0.0
    %812 = vmatpush1.msra.mxu0 %v88
    %813 = vmatprep.subr.mxu0 0.0
    %814 = vmatpush1.msra.mxu0 %v87
    %815 = vmatprep.subr.mxu0 0.0
    %816 = vmatpush1.msra.mxu0 %v86
    %817 = vmatprep.subr.mxu0 0.0
    %818 = vmatpush1.msra.mxu0 %v85
    %819 = vmatprep.subr.mxu0 0.0
    %820 = vmatpush1.msra.mxu0 %v84
    %821 = vmatprep.subr.mxu0 0.0
    %822 = vmatpush2.msra.mxu0 0.0
    %823 = vmatprep.subr.mxu0 0.0
    %824 = vmatpush2.msra.mxu0 0.0
    %825 = vmatprep.subr.mxu0 0.0
    %826 = vmatpush2.msra.mxu0 0.0
    %827 = vmatprep.subr.mxu0 0.0
    %828 = vmatpush2.msra.mxu0 0.0
    %829 = vmatprep.subr.mxu0 0.0
    %830 = vmatpush2.msra.mxu0 0.0
    %831 = vmatprep.subr.mxu0 0.0
    %832 = vmatpush2.msra.mxu0 0.0
    %833 = vmatprep.subr.mxu0 0.0
    %834 = vmatpush2.msra.mxu0 0.0
    %835 = vmatprep.subr.mxu0 0.0
    %836 = vmatpush2.msra.mxu0 0.0
    %837 = vmatprep.subr.mxu0 0.0
    %838 = vmatpush2.msra.mxu0 0.0
    %839 = vmatprep.subr.mxu0 0.0
    %840 = vmatpush2.msra.mxu0 0.0
    %841 = vmatprep.subr.mxu0 0.0
    %842 = vmatpush2.msra.mxu0 0.0
    %843 = vmatprep.subr.mxu0 0.0
    %844 = vmatpush2.msra.mxu0 0.0
    %845 = vmatprep.subr.mxu0 0.0
    %846 = vmatpush2.msra.mxu0 0.0
    %847 = vmatprep.subr.mxu0 0.0
    %848 = vmatpush2.msra.mxu0 0.0
    %849 = vmatprep.subr.mxu0 0.0
    %850 = vmatpush2.msra.mxu0 0.0
    %851 = vmatprep.subr.mxu0 0.0
    %852 = vmatpush2.msra.mxu0 0.0
    %853 = vmatprep.mubr.f32.mxu0 0.0
    %854 = vmatmul.mubr.f32.gmra.mxu0 %v787
    %v855 = vpop.f32.mrf.mxu0
    %v856 = vadd.f32 %v97, %v855
    %v857 = vpop.f32.mrf.mxu0
    %858 = vdwg.mxu0
    %v859 = vld [vmem:[%s392] sm:$0x3]
    %v860 = vxor.u32 %v856, 2147483648
    %v861 = vmul.f32 %v860, 1.442695
    %v862 = vpow.pop %v861
    %v863 = vadd.f32 %v862, 1.0
    %v864 = vrcp.pop %v863
    %v865 = vmul.f32 1.0, %v864
    %v866 = vtanh.pop %v856
    %868 = vrot.lane.b32.xlu0 %v859, 32
    %v869 = vpop.permute.xlu0 %868
    %v871 = vmul.f32 %v865, %v869
    %873 = vrot.lane.b32.xlu0 %v866, 32
    %v874 = vpop.permute.xlu0 %873
    %v876 = vmul.f32 %v865, %v874
    %878 = vrot.lane.b32.xlu0 %v876, 32
    %v879 = vpop.permute.xlu0 %878
    %v881 = vadd.f32 %v871, %v879
    %v882 = vtanh.pop %v881
    %884 = vrot.lane.b32.xlu0 %v882, 32
    %v885 = vpop.permute.xlu0 %884
    %v887 = vmul.f32 %v865, %v885
    %889 = vrot.lane.b32.xlu0 %v887, 64
    %v890 = vpop.permute.xlu0 %889
    %892 = vst.msk [vmem:[%s311] sm:$0x3] %vm304, %v890
    %894 = vrot.lane.b32.xlu0 %v881, 96
    %v895 = vpop.permute.xlu0 %894
    %897 = vst.msk [vmem:[%s392] sm:$0x3] %vm304, %v895
    %v898 = vld [vmem:[#allocation4 + $0x6] sm:$0x3]
    %v899 = vld [vmem:[#allocation2] sm:$0x3]
    %v901 = vsel %vm196, %v899, 0
    %903 = vmatprep.subr.mxu0 0.0
    %904 = vmatpush1.msra.mxu0 0.0
    %905 = vmatprep.subr.mxu0 0.0
    %906 = vmatpush1.msra.mxu0 0.0
    %907 = vmatprep.subr.mxu0 0.0
    %908 = vmatpush1.msra.mxu0 0.0
    %909 = vmatprep.subr.mxu0 0.0
    %910 = vmatpush1.msra.mxu0 0.0
    %911 = vmatprep.subr.mxu0 0.0
    %912 = vmatpush1.msra.mxu0 0.0
    %913 = vmatprep.subr.mxu0 0.0
    %914 = vmatpush1.msra.mxu0 0.0
    %915 = vmatprep.subr.mxu0 0.0
    %916 = vmatpush1.msra.mxu0 0.0
    %917 = vmatprep.subr.mxu0 0.0
    %918 = vmatpush1.msra.mxu0 0.0
    %919 = vmatprep.subr.mxu0 0.0
    %920 = vmatpush1.msra.mxu0 0.0
    %921 = vmatprep.subr.mxu0 0.0
    %922 = vmatpush1.msra.mxu0 0.0
    %923 = vmatprep.subr.mxu0 0.0
    %924 = vmatpush1.msra.mxu0 0.0
    %925 = vmatprep.subr.mxu0 0.0
    %926 = vmatpush1.msra.mxu0 0.0
    %927 = vmatprep.subr.mxu0 0.0
    %928 = vmatpush1.msra.mxu0 %v83
    %929 = vmatprep.subr.mxu0 0.0
    %930 = vmatpush1.msra.mxu0 %v82
    %931 = vmatprep.subr.mxu0 0.0
    %932 = vmatpush1.msra.mxu0 %v81
    %933 = vmatprep.subr.mxu0 0.0
    %934 = vmatpush1.msra.mxu0 %v80
    %935 = vmatprep.subr.mxu0 0.0
    %936 = vmatpush2.msra.mxu0 0.0
    %937 = vmatprep.subr.mxu0 0.0
    %938 = vmatpush2.msra.mxu0 0.0
    %939 = vmatprep.subr.mxu0 0.0
    %940 = vmatpush2.msra.mxu0 0.0
    %941 = vmatprep.subr.mxu0 0.0
    %942 = vmatpush2.msra.mxu0 0.0
    %943 = vmatprep.subr.mxu0 0.0
    %944 = vmatpush2.msra.mxu0 0.0
    %945 = vmatprep.subr.mxu0 0.0
    %946 = vmatpush2.msra.mxu0 0.0
    %947 = vmatprep.subr.mxu0 0.0
    %948 = vmatpush2.msra.mxu0 0.0
    %949 = vmatprep.subr.mxu0 0.0
    %950 = vmatpush2.msra.mxu0 0.0
    %951 = vmatprep.subr.mxu0 0.0
    %952 = vmatpush2.msra.mxu0 0.0
    %953 = vmatprep.subr.mxu0 0.0
    %954 = vmatpush2.msra.mxu0 0.0
    %955 = vmatprep.subr.mxu0 0.0
    %956 = vmatpush2.msra.mxu0 0.0
    %957 = vmatprep.subr.mxu0 0.0
    %958 = vmatpush2.msra.mxu0 0.0
    %959 = vmatprep.subr.mxu0 0.0
    %960 = vmatpush2.msra.mxu0 0.0
    %961 = vmatprep.subr.mxu0 0.0
    %962 = vmatpush2.msra.mxu0 0.0
    %963 = vmatprep.subr.mxu0 0.0
    %964 = vmatpush2.msra.mxu0 0.0
    %965 = vmatprep.subr.mxu0 0.0
    %966 = vmatpush2.msra.mxu0 0.0
    %967 = vmatprep.mubr.f32.mxu0 0.0
    %968 = vmatmul.mubr.f32.gmra.mxu0 %v901
    %v969 = vpop.f32.mrf.mxu0
    %v970 = vadd.f32 0.0, %v969
    %v971 = vpop.f32.mrf.mxu0
    %972 = vdwg.mxu0
    %v973 = vadd.f32 %v898, %v970
    %v974 = vld [vmem:[#allocation3] sm:$0x3]
    %v975 = vxor.u32 %v973, 2147483648
    %v976 = vmul.f32 %v975, 1.442695
    %v977 = vpow.pop %v976
    %v978 = vadd.f32 %v977, 1.0
    %v979 = vrcp.pop %v978
    %v980 = vmul.f32 1.0, %v979
    %v981 = vtanh.pop %v973
    %983 = vrot.lane.b32.xlu0 %v974, 32
    %v984 = vpop.permute.xlu0 %983
    %v986 = vmul.f32 %v980, %v984
    %988 = vrot.lane.b32.xlu0 %v981, 32
    %v989 = vpop.permute.xlu0 %988
    %v991 = vmul.f32 %v980, %v989
    %993 = vrot.lane.b32.xlu0 %v991, 32
    %v994 = vpop.permute.xlu0 %993
    %v996 = vadd.f32 %v986, %v994
    %v997 = vtanh.pop %v996
    %999 = vrot.lane.b32.xlu0 %v997, 32
    %v1000 = vpop.permute.xlu0 %999
    %v1002 = vmul.f32 %v980, %v1000
    %1004 = vrot.lane.b32.xlu0 %v1002, 64
    %v1005 = vpop.permute.xlu0 %1004
    %1007 = vst.msk [vmem:[#allocation2] sm:$0x3] %vm304, %v1005
    %1009 = vrot.lane.b32.xlu0 %v996, 96
    %v1010 = vpop.permute.xlu0 %1009
    %1012 = vst.msk [vmem:[#allocation3] sm:$0x3] %vm304, %v1010
    %v1013 = vld [vmem:[%s311] sm:$0x3]
    %1015 = vrot.lane.b32.xlu0 %v1013, 32
    %v1016 = vpop.permute.xlu0 %1015
    %v1018 = vsel %vm196, %v1005, %v1016
    %v1020 = vsel %vm318, %v1018, 0
    %1022 = vmatprep.subr.mxu0 0.0
    %1023 = vmatpush1.msra.mxu0 0.0
    %1024 = vmatprep.subr.mxu0 0.0
    %1025 = vmatpush1.msra.mxu0 0.0
    %1026 = vmatprep.subr.mxu0 0.0
    %1027 = vmatpush1.msra.mxu0 0.0
    %1028 = vmatprep.subr.mxu0 0.0
    %1029 = vmatpush1.msra.mxu0 0.0
    %1030 = vmatprep.subr.mxu0 0.0
    %1031 = vmatpush1.msra.mxu0 0.0
    %1032 = vmatprep.subr.mxu0 0.0
    %1033 = vmatpush1.msra.mxu0 0.0
    %1034 = vmatprep.subr.mxu0 0.0
    %1035 = vmatpush1.msra.mxu0 0.0
    %1036 = vmatprep.subr.mxu0 0.0
    %1037 = vmatpush1.msra.mxu0 0.0
    %1038 = vmatprep.subr.mxu0 0.0
    %1039 = vmatpush1.msra.mxu0 %v91
    %1040 = vmatprep.subr.mxu0 0.0
    %1041 = vmatpush1.msra.mxu0 %v90
    %1042 = vmatprep.subr.mxu0 0.0
    %1043 = vmatpush1.msra.mxu0 %v89
    %1044 = vmatprep.subr.mxu0 0.0
    %1045 = vmatpush1.msra.mxu0 %v88
    %1046 = vmatprep.subr.mxu0 0.0
    %1047 = vmatpush1.msra.mxu0 %v87
    %1048 = vmatprep.subr.mxu0 0.0
    %1049 = vmatpush1.msra.mxu0 %v86
    %1050 = vmatprep.subr.mxu0 0.0
    %1051 = vmatpush1.msra.mxu0 %v85
    %1052 = vmatprep.subr.mxu0 0.0
    %1053 = vmatpush1.msra.mxu0 %v84
    %1054 = vmatprep.subr.mxu0 0.0
    %1055 = vmatpush2.msra.mxu0 0.0
    %1056 = vmatprep.subr.mxu0 0.0
    %1057 = vmatpush2.msra.mxu0 0.0
    %1058 = vmatprep.subr.mxu0 0.0
    %1059 = vmatpush2.msra.mxu0 0.0
    %1060 = vmatprep.subr.mxu0 0.0
    %1061 = vmatpush2.msra.mxu0 0.0
    %1062 = vmatprep.subr.mxu0 0.0
    %1063 = vmatpush2.msra.mxu0 0.0
    %1064 = vmatprep.subr.mxu0 0.0
    %1065 = vmatpush2.msra.mxu0 0.0
    %1066 = vmatprep.subr.mxu0 0.0
    %1067 = vmatpush2.msra.mxu0 0.0
    %1068 = vmatprep.subr.mxu0 0.0
    %1069 = vmatpush2.msra.mxu0 0.0
    %1070 = vmatprep.subr.mxu0 0.0
    %1071 = vmatpush2.msra.mxu0 0.0
    %1072 = vmatprep.subr.mxu0 0.0
    %1073 = vmatpush2.msra.mxu0 0.0
    %1074 = vmatprep.subr.mxu0 0.0
    %1075 = vmatpush2.msra.mxu0 0.0
    %1076 = vmatprep.subr.mxu0 0.0
    %1077 = vmatpush2.msra.mxu0 0.0
    %1078 = vmatprep.subr.mxu0 0.0
    %1079 = vmatpush2.msra.mxu0 0.0
    %1080 = vmatprep.subr.mxu0 0.0
    %1081 = vmatpush2.msra.mxu0 0.0
    %1082 = vmatprep.subr.mxu0 0.0
    %1083 = vmatpush2.msra.mxu0 0.0
    %1084 = vmatprep.subr.mxu0 0.0
    %1085 = vmatpush2.msra.mxu0 0.0
    %1086 = vmatprep.mubr.f32.mxu0 0.0
    %1087 = vmatmul.mubr.f32.gmra.mxu0 %v1020
    %v1088 = vpop.f32.mrf.mxu0
    %v1089 = vadd.f32 %v97, %v1088
    %v1090 = vpop.f32.mrf.mxu0
    %1091 = vdwg.mxu0
    %v1092 = vld [vmem:[%s392] sm:$0x3]
    %v1093 = vxor.u32 %v1089, 2147483648
    %v1094 = vmul.f32 %v1093, 1.442695
    %v1095 = vpow.pop %v1094
    %v1096 = vadd.f32 %v1095, 1.0
    %v1097 = vrcp.pop %v1096
    %v1098 = vmul.f32 1.0, %v1097
    %v1099 = vtanh.pop %v1089
    %1101 = vrot.lane.b32.xlu0 %v1092, 32
    %v1102 = vpop.permute.xlu0 %1101
    %v1104 = vmul.f32 %v1098, %v1102
    %1106 = vrot.lane.b32.xlu0 %v1099, 32
    %v1107 = vpop.permute.xlu0 %1106
    %v1109 = vmul.f32 %v1098, %v1107
    %1111 = vrot.lane.b32.xlu0 %v1109, 32
    %v1112 = vpop.permute.xlu0 %1111
    %v1114 = vadd.f32 %v1104, %v1112
    %v1115 = vtanh.pop %v1114
    %1117 = vrot.lane.b32.xlu0 %v1115, 32
    %v1118 = vpop.permute.xlu0 %1117
    %v1120 = vmul.f32 %v1098, %v1118
    %1122 = vrot.lane.b32.xlu0 %v1120, 64
    %v1123 = vpop.permute.xlu0 %1122
    %1125 = vst.msk [vmem:[%s311] sm:$0x3] %vm304, %v1123
    %1127 = vrot.lane.b32.xlu0 %v1114, 96
    %v1128 = vpop.permute.xlu0 %1127
    %1130 = vst.msk [vmem:[%s392] sm:$0x3] %vm304, %v1128
    %v1131 = vld [vmem:[#allocation4 + $0x8] sm:$0x3]
    %v1132 = vld [vmem:[#allocation2] sm:$0x3]
    %v1134 = vsel %vm196, %v1132, 0
    %1136 = vmatprep.subr.mxu0 0.0
    %1137 = vmatpush1.msra.mxu0 0.0
    %1138 = vmatprep.subr.mxu0 0.0
    %1139 = vmatpush1.msra.mxu0 0.0
    %1140 = vmatprep.subr.mxu0 0.0
    %1141 = vmatpush1.msra.mxu0 0.0
    %1142 = vmatprep.subr.mxu0 0.0
    %1143 = vmatpush1.msra.mxu0 0.0
    %1144 = vmatprep.subr.mxu0 0.0
    %1145 = vmatpush1.msra.mxu0 0.0
    %1146 = vmatprep.subr.mxu0 0.0
    %1147 = vmatpush1.msra.mxu0 0.0
    %1148 = vmatprep.subr.mxu0 0.0
    %1149 = vmatpush1.msra.mxu0 0.0
    %1150 = vmatprep.subr.mxu0 0.0
    %1151 = vmatpush1.msra.mxu0 0.0
    %1152 = vmatprep.subr.mxu0 0.0
    %1153 = vmatpush1.msra.mxu0 0.0
    %1154 = vmatprep.subr.mxu0 0.0
    %1155 = vmatpush1.msra.mxu0 0.0
    %1156 = vmatprep.subr.mxu0 0.0
    %1157 = vmatpush1.msra.mxu0 0.0
    %1158 = vmatprep.subr.mxu0 0.0
    %1159 = vmatpush1.msra.mxu0 0.0
    %1160 = vmatprep.subr.mxu0 0.0
    %1161 = vmatpush1.msra.mxu0 %v83
    %1162 = vmatprep.subr.mxu0 0.0
    %1163 = vmatpush1.msra.mxu0 %v82
    %1164 = vmatprep.subr.mxu0 0.0
    %1165 = vmatpush1.msra.mxu0 %v81
    %1166 = vmatprep.subr.mxu0 0.0
    %1167 = vmatpush1.msra.mxu0 %v80
    %1168 = vmatprep.subr.mxu0 0.0
    %1169 = vmatpush2.msra.mxu0 0.0
    %1170 = vmatprep.subr.mxu0 0.0
    %1171 = vmatpush2.msra.mxu0 0.0
    %1172 = vmatprep.subr.mxu0 0.0
    %1173 = vmatpush2.msra.mxu0 0.0
    %1174 = vmatprep.subr.mxu0 0.0
    %1175 = vmatpush2.msra.mxu0 0.0
    %1176 = vmatprep.subr.mxu0 0.0
    %1177 = vmatpush2.msra.mxu0 0.0
    %1178 = vmatprep.subr.mxu0 0.0
    %1179 = vmatpush2.msra.mxu0 0.0
    %1180 = vmatprep.subr.mxu0 0.0
    %1181 = vmatpush2.msra.mxu0 0.0
    %1182 = vmatprep.subr.mxu0 0.0
    %1183 = vmatpush2.msra.mxu0 0.0
    %1184 = vmatprep.subr.mxu0 0.0
    %1185 = vmatpush2.msra.mxu0 0.0
    %1186 = vmatprep.subr.mxu0 0.0
    %1187 = vmatpush2.msra.mxu0 0.0
    %1188 = vmatprep.subr.mxu0 0.0
    %1189 = vmatpush2.msra.mxu0 0.0
    %1190 = vmatprep.subr.mxu0 0.0
    %1191 = vmatpush2.msra.mxu0 0.0
    %1192 = vmatprep.subr.mxu0 0.0
    %1193 = vmatpush2.msra.mxu0 0.0
    %1194 = vmatprep.subr.mxu0 0.0
    %1195 = vmatpush2.msra.mxu0 0.0
    %1196 = vmatprep.subr.mxu0 0.0
    %1197 = vmatpush2.msra.mxu0 0.0
    %1198 = vmatprep.subr.mxu0 0.0
    %1199 = vmatpush2.msra.mxu0 0.0
    %1200 = vmatprep.mubr.f32.mxu0 0.0
    %1201 = vmatmul.mubr.f32.gmra.mxu0 %v1134
    %v1202 = vpop.f32.mrf.mxu0
    %v1203 = vadd.f32 0.0, %v1202
    %v1204 = vpop.f32.mrf.mxu0
    %1205 = vdwg.mxu0
    %v1206 = vadd.f32 %v1131, %v1203
    %v1207 = vld [vmem:[#allocation3] sm:$0x3]
    %v1208 = vxor.u32 %v1206, 2147483648
    %v1209 = vmul.f32 %v1208, 1.442695
    %v1210 = vpow.pop %v1209
    %v1211 = vadd.f32 %v1210, 1.0
    %v1212 = vrcp.pop %v1211
    %v1213 = vmul.f32 1.0, %v1212
    %v1214 = vtanh.pop %v1206
    %1216 = vrot.lane.b32.xlu0 %v1207, 32
    %v1217 = vpop.permute.xlu0 %1216
    %v1219 = vmul.f32 %v1213, %v1217
    %1221 = vrot.lane.b32.xlu0 %v1214, 32
    %v1222 = vpop.permute.xlu0 %1221
    %v1224 = vmul.f32 %v1213, %v1222
    %1226 = vrot.lane.b32.xlu0 %v1224, 32
    %v1227 = vpop.permute.xlu0 %1226
    %v1229 = vadd.f32 %v1219, %v1227
    %v1230 = vtanh.pop %v1229
    %1232 = vrot.lane.b32.xlu0 %v1230, 32
    %v1233 = vpop.permute.xlu0 %1232
    %v1235 = vmul.f32 %v1213, %v1233
    %1237 = vrot.lane.b32.xlu0 %v1235, 64
    %v1238 = vpop.permute.xlu0 %1237
    %1240 = vst.msk [vmem:[#allocation2] sm:$0x3] %vm304, %v1238
    %1242 = vrot.lane.b32.xlu0 %v1229, 96
    %v1243 = vpop.permute.xlu0 %1242
    %1245 = vst.msk [vmem:[#allocation3] sm:$0x3] %vm304, %v1243
    %v1246 = vld [vmem:[%s311] sm:$0x3]
    %1248 = vrot.lane.b32.xlu0 %v1246, 32
    %v1249 = vpop.permute.xlu0 %1248
    %v1251 = vsel %vm196, %v1238, %v1249
    %v1253 = vsel %vm318, %v1251, 0
    %1255 = vmatprep.subr.mxu0 0.0
    %1256 = vmatpush1.msra.mxu0 0.0
    %1257 = vmatprep.subr.mxu0 0.0
    %1258 = vmatpush1.msra.mxu0 0.0
    %1259 = vmatprep.subr.mxu0 0.0
    %1260 = vmatpush1.msra.mxu0 0.0
    %1261 = vmatprep.subr.mxu0 0.0
    %1262 = vmatpush1.msra.mxu0 0.0
    %1263 = vmatprep.subr.mxu0 0.0
    %1264 = vmatpush1.msra.mxu0 0.0
    %1265 = vmatprep.subr.mxu0 0.0
    %1266 = vmatpush1.msra.mxu0 0.0
    %1267 = vmatprep.subr.mxu0 0.0
    %1268 = vmatpush1.msra.mxu0 0.0
    %1269 = vmatprep.subr.mxu0 0.0
    %1270 = vmatpush1.msra.mxu0 0.0
    %1271 = vmatprep.subr.mxu0 0.0
    %1272 = vmatpush1.msra.mxu0 %v91
    %1273 = vmatprep.subr.mxu0 0.0
    %1274 = vmatpush1.msra.mxu0 %v90
    %1275 = vmatprep.subr.mxu0 0.0
    %1276 = vmatpush1.msra.mxu0 %v89
    %1277 = vmatprep.subr.mxu0 0.0
    %1278 = vmatpush1.msra.mxu0 %v88
    %1279 = vmatprep.subr.mxu0 0.0
    %1280 = vmatpush1.msra.mxu0 %v87
    %1281 = vmatprep.subr.mxu0 0.0
    %1282 = vmatpush1.msra.mxu0 %v86
    %1283 = vmatprep.subr.mxu0 0.0
    %1284 = vmatpush1.msra.mxu0 %v85
    %1285 = vmatprep.subr.mxu0 0.0
    %1286 = vmatpush1.msra.mxu0 %v84
    %1287 = vmatprep.subr.mxu0 0.0
    %1288 = vmatpush2.msra.mxu0 0.0
    %1289 = vmatprep.subr.mxu0 0.0
    %1290 = vmatpush2.msra.mxu0 0.0
    %1291 = vmatprep.subr.mxu0 0.0
    %1292 = vmatpush2.msra.mxu0 0.0
    %1293 = vmatprep.subr.mxu0 0.0
    %1294 = vmatpush2.msra.mxu0 0.0
    %1295 = vmatprep.subr.mxu0 0.0
    %1296 = vmatpush2.msra.mxu0 0.0
    %1297 = vmatprep.subr.mxu0 0.0
    %1298 = vmatpush2.msra.mxu0 0.0
    %1299 = vmatprep.subr.mxu0 0.0
    %1300 = vmatpush2.msra.mxu0 0.0
    %1301 = vmatprep.subr.mxu0 0.0
    %1302 = vmatpush2.msra.mxu0 0.0
    %1303 = vmatprep.subr.mxu0 0.0
    %1304 = vmatpush2.msra.mxu0 0.0
    %1305 = vmatprep.subr.mxu0 0.0
    %1306 = vmatpush2.msra.mxu0 0.0
    %1307 = vmatprep.subr.mxu0 0.0
    %1308 = vmatpush2.msra.mxu0 0.0
    %1309 = vmatprep.subr.mxu0 0.0
    %1310 = vmatpush2.msra.mxu0 0.0
    %1311 = vmatprep.subr.mxu0 0.0
    %1312 = vmatpush2.msra.mxu0 0.0
    %1313 = vmatprep.subr.mxu0 0.0
    %1314 = vmatpush2.msra.mxu0 0.0
    %1315 = vmatprep.subr.mxu0 0.0
    %1316 = vmatpush2.msra.mxu0 0.0
    %1317 = vmatprep.subr.mxu0 0.0
    %1318 = vmatpush2.msra.mxu0 0.0
    %1319 = vmatprep.mubr.f32.mxu0 0.0
    %1320 = vmatmul.mubr.f32.gmra.mxu0 %v1253
    %v1321 = vpop.f32.mrf.mxu0
    %v1322 = vadd.f32 %v97, %v1321
    %v1323 = vpop.f32.mrf.mxu0
    %1324 = vdwg.mxu0
    %v1325 = vld [vmem:[%s392] sm:$0x3]
    %v1326 = vxor.u32 %v1322, 2147483648
    %v1327 = vmul.f32 %v1326, 1.442695
    %v1328 = vpow.pop %v1327
    %v1329 = vadd.f32 %v1328, 1.0
    %v1330 = vrcp.pop %v1329
    %v1331 = vmul.f32 1.0, %v1330
    %v1332 = vtanh.pop %v1322
    %1334 = vrot.lane.b32.xlu0 %v1325, 32
    %v1335 = vpop.permute.xlu0 %1334
    %v1337 = vmul.f32 %v1331, %v1335
    %1339 = vrot.lane.b32.xlu0 %v1332, 32
    %v1340 = vpop.permute.xlu0 %1339
    %v1342 = vmul.f32 %v1331, %v1340
    %1344 = vrot.lane.b32.xlu0 %v1342, 32
    %v1345 = vpop.permute.xlu0 %1344
    %v1347 = vadd.f32 %v1337, %v1345
    %v1348 = vtanh.pop %v1347
    %1350 = vrot.lane.b32.xlu0 %v1348, 32
    %v1351 = vpop.permute.xlu0 %1350
    %v1353 = vmul.f32 %v1331, %v1351
    %1355 = vrot.lane.b32.xlu0 %v1353, 64
    %v1356 = vpop.permute.xlu0 %1355
    %1358 = vst.msk [vmem:[%s311] sm:$0x3] %vm304, %v1356
    %1360 = vrot.lane.b32.xlu0 %v1347, 96
    %v1361 = vpop.permute.xlu0 %1360
    %1363 = vst.msk [vmem:[%s392] sm:$0x3] %vm304, %v1361
    %v1364 = vld [vmem:[#allocation4 + $0xa] sm:$0x3]
    %v1365 = vld [vmem:[#allocation2] sm:$0x3]
    %v1367 = vsel %vm196, %v1365, 0
    %1369 = vmatprep.subr.mxu0 0.0
    %1370 = vmatpush1.msra.mxu0 0.0
    %1371 = vmatprep.subr.mxu0 0.0
    %1372 = vmatpush1.msra.mxu0 0.0
    %1373 = vmatprep.subr.mxu0 0.0
    %1374 = vmatpush1.msra.mxu0 0.0
    %1375 = vmatprep.subr.mxu0 0.0
    %1376 = vmatpush1.msra.mxu0 0.0
    %1377 = vmatprep.subr.mxu0 0.0
    %1378 = vmatpush1.msra.mxu0 0.0
    %1379 = vmatprep.subr.mxu0 0.0
    %1380 = vmatpush1.msra.mxu0 0.0
    %1381 = vmatprep.subr.mxu0 0.0
    %1382 = vmatpush1.msra.mxu0 0.0
    %1383 = vmatprep.subr.mxu0 0.0
    %1384 = vmatpush1.msra.mxu0 0.0
    %1385 = vmatprep.subr.mxu0 0.0
    %1386 = vmatpush1.msra.mxu0 0.0
    %1387 = vmatprep.subr.mxu0 0.0
    %1388 = vmatpush1.msra.mxu0 0.0
    %1389 = vmatprep.subr.mxu0 0.0
    %1390 = vmatpush1.msra.mxu0 0.0
    %1391 = vmatprep.subr.mxu0 0.0
    %1392 = vmatpush1.msra.mxu0 0.0
    %1393 = vmatprep.subr.mxu0 0.0
    %1394 = vmatpush1.msra.mxu0 %v83
    %1395 = vmatprep.subr.mxu0 0.0
    %1396 = vmatpush1.msra.mxu0 %v82
    %1397 = vmatprep.subr.mxu0 0.0
    %1398 = vmatpush1.msra.mxu0 %v81
    %1399 = vmatprep.subr.mxu0 0.0
    %1400 = vmatpush1.msra.mxu0 %v80
    %1401 = vmatprep.subr.mxu0 0.0
    %1402 = vmatpush2.msra.mxu0 0.0
    %1403 = vmatprep.subr.mxu0 0.0
    %1404 = vmatpush2.msra.mxu0 0.0
    %1405 = vmatprep.subr.mxu0 0.0
    %1406 = vmatpush2.msra.mxu0 0.0
    %1407 = vmatprep.subr.mxu0 0.0
    %1408 = vmatpush2.msra.mxu0 0.0
    %1409 = vmatprep.subr.mxu0 0.0
    %1410 = vmatpush2.msra.mxu0 0.0
    %1411 = vmatprep.subr.mxu0 0.0
    %1412 = vmatpush2.msra.mxu0 0.0
    %1413 = vmatprep.subr.mxu0 0.0
    %1414 = vmatpush2.msra.mxu0 0.0
    %1415 = vmatprep.subr.mxu0 0.0
    %1416 = vmatpush2.msra.mxu0 0.0
    %1417 = vmatprep.subr.mxu0 0.0
    %1418 = vmatpush2.msra.mxu0 0.0
    %1419 = vmatprep.subr.mxu0 0.0
    %1420 = vmatpush2.msra.mxu0 0.0
    %1421 = vmatprep.subr.mxu0 0.0
    %1422 = vmatpush2.msra.mxu0 0.0
    %1423 = vmatprep.subr.mxu0 0.0
    %1424 = vmatpush2.msra.mxu0 0.0
    %1425 = vmatprep.subr.mxu0 0.0
    %1426 = vmatpush2.msra.mxu0 0.0
    %1427 = vmatprep.subr.mxu0 0.0
    %1428 = vmatpush2.msra.mxu0 0.0
    %1429 = vmatprep.subr.mxu0 0.0
    %1430 = vmatpush2.msra.mxu0 0.0
    %1431 = vmatprep.subr.mxu0 0.0
    %1432 = vmatpush2.msra.mxu0 0.0
    %1433 = vmatprep.mubr.f32.mxu0 0.0
    %1434 = vmatmul.mubr.f32.gmra.mxu0 %v1367
    %v1435 = vpop.f32.mrf.mxu0
    %v1436 = vadd.f32 0.0, %v1435
    %v1437 = vpop.f32.mrf.mxu0
    %1438 = vdwg.mxu0
    %v1439 = vadd.f32 %v1364, %v1436
    %v1440 = vld [vmem:[#allocation3] sm:$0x3]
    %v1441 = vxor.u32 %v1439, 2147483648
    %v1442 = vmul.f32 %v1441, 1.442695
    %v1443 = vpow.pop %v1442
    %v1444 = vadd.f32 %v1443, 1.0
    %v1445 = vrcp.pop %v1444
    %v1446 = vmul.f32 1.0, %v1445
    %v1447 = vtanh.pop %v1439
    %1449 = vrot.lane.b32.xlu0 %v1440, 32
    %v1450 = vpop.permute.xlu0 %1449
    %v1452 = vmul.f32 %v1446, %v1450
    %1454 = vrot.lane.b32.xlu0 %v1447, 32
    %v1455 = vpop.permute.xlu0 %1454
    %v1457 = vmul.f32 %v1446, %v1455
    %1459 = vrot.lane.b32.xlu0 %v1457, 32
    %v1460 = vpop.permute.xlu0 %1459
    %v1462 = vadd.f32 %v1452, %v1460
    %v1463 = vtanh.pop %v1462
    %1465 = vrot.lane.b32.xlu0 %v1463, 32
    %v1466 = vpop.permute.xlu0 %1465
    %v1468 = vmul.f32 %v1446, %v1466
    %1470 = vrot.lane.b32.xlu0 %v1468, 64
    %v1471 = vpop.permute.xlu0 %1470
    %1473 = vst.msk [vmem:[#allocation2] sm:$0x3] %vm304, %v1471
    %1475 = vrot.lane.b32.xlu0 %v1462, 96
    %v1476 = vpop.permute.xlu0 %1475
    %1478 = vst.msk [vmem:[#allocation3] sm:$0x3] %vm304, %v1476
    %v1479 = vld [vmem:[%s311] sm:$0x3]
    %1481 = vrot.lane.b32.xlu0 %v1479, 32
    %v1482 = vpop.permute.xlu0 %1481
    %v1484 = vsel %vm196, %v1471, %v1482
    %v1486 = vsel %vm318, %v1484, 0
    %1488 = vmatprep.subr.mxu0 0.0
    %1489 = vmatpush1.msra.mxu0 0.0
    %1490 = vmatprep.subr.mxu0 0.0
    %1491 = vmatpush1.msra.mxu0 0.0
    %1492 = vmatprep.subr.mxu0 0.0
    %1493 = vmatpush1.msra.mxu0 0.0
    %1494 = vmatprep.subr.mxu0 0.0
    %1495 = vmatpush1.msra.mxu0 0.0
    %1496 = vmatprep.subr.mxu0 0.0
    %1497 = vmatpush1.msra.mxu0 0.0
    %1498 = vmatprep.subr.mxu0 0.0
    %1499 = vmatpush1.msra.mxu0 0.0
    %1500 = vmatprep.subr.mxu0 0.0
    %1501 = vmatpush1.msra.mxu0 0.0
    %1502 = vmatprep.subr.mxu0 0.0
    %1503 = vmatpush1.msra.mxu0 0.0
    %1504 = vmatprep.subr.mxu0 0.0
    %1505 = vmatpush1.msra.mxu0 %v91
    %1506 = vmatprep.subr.mxu0 0.0
    %1507 = vmatpush1.msra.mxu0 %v90
    %1508 = vmatprep.subr.mxu0 0.0
    %1509 = vmatpush1.msra.mxu0 %v89
    %1510 = vmatprep.subr.mxu0 0.0
    %1511 = vmatpush1.msra.mxu0 %v88
    %1512 = vmatprep.subr.mxu0 0.0
    %1513 = vmatpush1.msra.mxu0 %v87
    %1514 = vmatprep.subr.mxu0 0.0
    %1515 = vmatpush1.msra.mxu0 %v86
    %1516 = vmatprep.subr.mxu0 0.0
    %1517 = vmatpush1.msra.mxu0 %v85
    %1518 = vmatprep.subr.mxu0 0.0
    %1519 = vmatpush1.msra.mxu0 %v84
    %1520 = vmatprep.subr.mxu0 0.0
    %1521 = vmatpush2.msra.mxu0 0.0
    %1522 = vmatprep.subr.mxu0 0.0
    %1523 = vmatpush2.msra.mxu0 0.0
    %1524 = vmatprep.subr.mxu0 0.0
    %1525 = vmatpush2.msra.mxu0 0.0
    %1526 = vmatprep.subr.mxu0 0.0
    %1527 = vmatpush2.msra.mxu0 0.0
    %1528 = vmatprep.subr.mxu0 0.0
    %1529 = vmatpush2.msra.mxu0 0.0
    %1530 = vmatprep.subr.mxu0 0.0
    %1531 = vmatpush2.msra.mxu0 0.0
    %1532 = vmatprep.subr.mxu0 0.0
    %1533 = vmatpush2.msra.mxu0 0.0
    %1534 = vmatprep.subr.mxu0 0.0
    %1535 = vmatpush2.msra.mxu0 0.0
    %1536 = vmatprep.subr.mxu0 0.0
    %1537 = vmatpush2.msra.mxu0 0.0
    %1538 = vmatprep.subr.mxu0 0.0
    %1539 = vmatpush2.msra.mxu0 0.0
    %1540 = vmatprep.subr.mxu0 0.0
    %1541 = vmatpush2.msra.mxu0 0.0
    %1542 = vmatprep.subr.mxu0 0.0
    %1543 = vmatpush2.msra.mxu0 0.0
    %1544 = vmatprep.subr.mxu0 0.0
    %1545 = vmatpush2.msra.mxu0 0.0
    %1546 = vmatprep.subr.mxu0 0.0
    %1547 = vmatpush2.msra.mxu0 0.0
    %1548 = vmatprep.subr.mxu0 0.0
    %1549 = vmatpush2.msra.mxu0 0.0
    %1550 = vmatprep.subr.mxu0 0.0
    %1551 = vmatpush2.msra.mxu0 0.0
    %1552 = vmatprep.mubr.f32.mxu0 0.0
    %1553 = vmatmul.mubr.f32.gmra.mxu0 %v1486
    %v1554 = vpop.f32.mrf.mxu0
    %v1555 = vadd.f32 %v97, %v1554
    %v1556 = vpop.f32.mrf.mxu0
    %1557 = vdwg.mxu0
    %v1558 = vld [vmem:[%s392] sm:$0x3]
    %v1559 = vxor.u32 %v1555, 2147483648
    %v1560 = vmul.f32 %v1559, 1.442695
    %v1561 = vpow.pop %v1560
    %v1562 = vadd.f32 %v1561, 1.0
    %v1563 = vrcp.pop %v1562
    %v1564 = vmul.f32 1.0, %v1563
    %v1565 = vtanh.pop %v1555
    %1567 = vrot.lane.b32.xlu0 %v1558, 32
    %v1568 = vpop.permute.xlu0 %1567
    %v1570 = vmul.f32 %v1564, %v1568
    %1572 = vrot.lane.b32.xlu0 %v1565, 32
    %v1573 = vpop.permute.xlu0 %1572
    %v1575 = vmul.f32 %v1564, %v1573
    %1577 = vrot.lane.b32.xlu0 %v1575, 32
    %v1578 = vpop.permute.xlu0 %1577
    %v1580 = vadd.f32 %v1570, %v1578
    %v1581 = vtanh.pop %v1580
    %1583 = vrot.lane.b32.xlu0 %v1581, 32
    %v1584 = vpop.permute.xlu0 %1583
    %v1586 = vmul.f32 %v1564, %v1584
    %1588 = vrot.lane.b32.xlu0 %v1586, 64
    %v1589 = vpop.permute.xlu0 %1588
    %1591 = vst.msk [vmem:[%s311] sm:$0x3] %vm304, %v1589
    %1593 = vrot.lane.b32.xlu0 %v1580, 96
    %v1594 = vpop.permute.xlu0 %1593
    %1596 = vst.msk [vmem:[%s392] sm:$0x3] %vm304, %v1594
    %v1597 = vld [vmem:[#allocation4 + $0xc] sm:$0x3]
    %v1598 = vld [vmem:[#allocation2] sm:$0x3]
    %v1600 = vsel %vm196, %v1598, 0
    %1602 = vmatprep.subr.mxu0 0.0
    %1603 = vmatpush1.msra.mxu0 0.0
    %1604 = vmatprep.subr.mxu0 0.0
    %1605 = vmatpush1.msra.mxu0 0.0
    %1606 = vmatprep.subr.mxu0 0.0
    %1607 = vmatpush1.msra.mxu0 0.0
    %1608 = vmatprep.subr.mxu0 0.0
    %1609 = vmatpush1.msra.mxu0 0.0
    %1610 = vmatprep.subr.mxu0 0.0
    %1611 = vmatpush1.msra.mxu0 0.0
    %1612 = vmatprep.subr.mxu0 0.0
    %1613 = vmatpush1.msra.mxu0 0.0
    %1614 = vmatprep.subr.mxu0 0.0
    %1615 = vmatpush1.msra.mxu0 0.0
    %1616 = vmatprep.subr.mxu0 0.0
    %1617 = vmatpush1.msra.mxu0 0.0
    %1618 = vmatprep.subr.mxu0 0.0
    %1619 = vmatpush1.msra.mxu0 0.0
    %1620 = vmatprep.subr.mxu0 0.0
    %1621 = vmatpush1.msra.mxu0 0.0
    %1622 = vmatprep.subr.mxu0 0.0
    %1623 = vmatpush1.msra.mxu0 0.0
    %1624 = vmatprep.subr.mxu0 0.0
    %1625 = vmatpush1.msra.mxu0 0.0
    %1626 = vmatprep.subr.mxu0 0.0
    %1627 = vmatpush1.msra.mxu0 %v83
    %1628 = vmatprep.subr.mxu0 0.0
    %1629 = vmatpush1.msra.mxu0 %v82
    %1630 = vmatprep.subr.mxu0 0.0
    %1631 = vmatpush1.msra.mxu0 %v81
    %1632 = vmatprep.subr.mxu0 0.0
    %1633 = vmatpush1.msra.mxu0 %v80
    %1634 = vmatprep.subr.mxu0 0.0
    %1635 = vmatpush2.msra.mxu0 0.0
    %1636 = vmatprep.subr.mxu0 0.0
    %1637 = vmatpush2.msra.mxu0 0.0
    %1638 = vmatprep.subr.mxu0 0.0
    %1639 = vmatpush2.msra.mxu0 0.0
    %1640 = vmatprep.subr.mxu0 0.0
    %1641 = vmatpush2.msra.mxu0 0.0
    %1642 = vmatprep.subr.mxu0 0.0
    %1643 = vmatpush2.msra.mxu0 0.0
    %1644 = vmatprep.subr.mxu0 0.0
    %1645 = vmatpush2.msra.mxu0 0.0
    %1646 = vmatprep.subr.mxu0 0.0
    %1647 = vmatpush2.msra.mxu0 0.0
    %1648 = vmatprep.subr.mxu0 0.0
    %1649 = vmatpush2.msra.mxu0 0.0
    %1650 = vmatprep.subr.mxu0 0.0
    %1651 = vmatpush2.msra.mxu0 0.0
    %1652 = vmatprep.subr.mxu0 0.0
    %1653 = vmatpush2.msra.mxu0 0.0
    %1654 = vmatprep.subr.mxu0 0.0
    %1655 = vmatpush2.msra.mxu0 0.0
    %1656 = vmatprep.subr.mxu0 0.0
    %1657 = vmatpush2.msra.mxu0 0.0
    %1658 = vmatprep.subr.mxu0 0.0
    %1659 = vmatpush2.msra.mxu0 0.0
    %1660 = vmatprep.subr.mxu0 0.0
    %1661 = vmatpush2.msra.mxu0 0.0
    %1662 = vmatprep.subr.mxu0 0.0
    %1663 = vmatpush2.msra.mxu0 0.0
    %1664 = vmatprep.subr.mxu0 0.0
    %1665 = vmatpush2.msra.mxu0 0.0
    %1666 = vmatprep.mubr.f32.mxu0 0.0
    %1667 = vmatmul.mubr.f32.gmra.mxu0 %v1600
    %v1668 = vpop.f32.mrf.mxu0
    %v1669 = vadd.f32 0.0, %v1668
    %v1670 = vpop.f32.mrf.mxu0
    %1671 = vdwg.mxu0
    %v1672 = vadd.f32 %v1597, %v1669
    %v1673 = vld [vmem:[#allocation3] sm:$0x3]
    %v1674 = vxor.u32 %v1672, 2147483648
    %v1675 = vmul.f32 %v1674, 1.442695
    %v1676 = vpow.pop %v1675
    %v1677 = vadd.f32 %v1676, 1.0
    %v1678 = vrcp.pop %v1677
    %v1679 = vmul.f32 1.0, %v1678
    %v1680 = vtanh.pop %v1672
    %1682 = vrot.lane.b32.xlu0 %v1673, 32
    %v1683 = vpop.permute.xlu0 %1682
    %v1685 = vmul.f32 %v1679, %v1683
    %1687 = vrot.lane.b32.xlu0 %v1680, 32
    %v1688 = vpop.permute.xlu0 %1687
    %v1690 = vmul.f32 %v1679, %v1688
    %1692 = vrot.lane.b32.xlu0 %v1690, 32
    %v1693 = vpop.permute.xlu0 %1692
    %v1695 = vadd.f32 %v1685, %v1693
    %v1696 = vtanh.pop %v1695
    %1698 = vrot.lane.b32.xlu0 %v1696, 32
    %v1699 = vpop.permute.xlu0 %1698
    %v1701 = vmul.f32 %v1679, %v1699
    %1703 = vrot.lane.b32.xlu0 %v1701, 64
    %v1704 = vpop.permute.xlu0 %1703
    %1706 = vst.msk [vmem:[#allocation2] sm:$0x3] %vm304, %v1704
    %1708 = vrot.lane.b32.xlu0 %v1695, 96
    %v1709 = vpop.permute.xlu0 %1708
    %1711 = vst.msk [vmem:[#allocation3] sm:$0x3] %vm304, %v1709
    %v1712 = vld [vmem:[%s311] sm:$0x3]
    %1714 = vrot.lane.b32.xlu0 %v1712, 32
    %v1715 = vpop.permute.xlu0 %1714
    %v1717 = vsel %vm196, %v1704, %v1715
    %v1719 = vsel %vm318, %v1717, 0
    %1721 = vmatprep.subr.mxu0 0.0
    %1722 = vmatpush1.msra.mxu0 0.0
    %1723 = vmatprep.subr.mxu0 0.0
    %1724 = vmatpush1.msra.mxu0 0.0
    %1725 = vmatprep.subr.mxu0 0.0
    %1726 = vmatpush1.msra.mxu0 0.0
    %1727 = vmatprep.subr.mxu0 0.0
    %1728 = vmatpush1.msra.mxu0 0.0
    %1729 = vmatprep.subr.mxu0 0.0
    %1730 = vmatpush1.msra.mxu0 0.0
    %1731 = vmatprep.subr.mxu0 0.0
    %1732 = vmatpush1.msra.mxu0 0.0
    %1733 = vmatprep.subr.mxu0 0.0
    %1734 = vmatpush1.msra.mxu0 0.0
    %1735 = vmatprep.subr.mxu0 0.0
    %1736 = vmatpush1.msra.mxu0 0.0
    %1737 = vmatprep.subr.mxu0 0.0
    %1738 = vmatpush1.msra.mxu0 %v91
    %1739 = vmatprep.subr.mxu0 0.0
    %1740 = vmatpush1.msra.mxu0 %v90
    %1741 = vmatprep.subr.mxu0 0.0
    %1742 = vmatpush1.msra.mxu0 %v89
    %1743 = vmatprep.subr.mxu0 0.0
    %1744 = vmatpush1.msra.mxu0 %v88
    %1745 = vmatprep.subr.mxu0 0.0
    %1746 = vmatpush1.msra.mxu0 %v87
    %1747 = vmatprep.subr.mxu0 0.0
    %1748 = vmatpush1.msra.mxu0 %v86
    %1749 = vmatprep.subr.mxu0 0.0
    %1750 = vmatpush1.msra.mxu0 %v85
    %1751 = vmatprep.subr.mxu0 0.0
    %1752 = vmatpush1.msra.mxu0 %v84
    %1753 = vmatprep.subr.mxu0 0.0
    %1754 = vmatpush2.msra.mxu0 0.0
    %1755 = vmatprep.subr.mxu0 0.0
    %1756 = vmatpush2.msra.mxu0 0.0
    %1757 = vmatprep.subr.mxu0 0.0
    %1758 = vmatpush2.msra.mxu0 0.0
    %1759 = vmatprep.subr.mxu0 0.0
    %1760 = vmatpush2.msra.mxu0 0.0
    %1761 = vmatprep.subr.mxu0 0.0
    %1762 = vmatpush2.msra.mxu0 0.0
    %1763 = vmatprep.subr.mxu0 0.0
    %1764 = vmatpush2.msra.mxu0 0.0
    %1765 = vmatprep.subr.mxu0 0.0
    %1766 = vmatpush2.msra.mxu0 0.0
    %1767 = vmatprep.subr.mxu0 0.0
    %1768 = vmatpush2.msra.mxu0 0.0
    %1769 = vmatprep.subr.mxu0 0.0
    %1770 = vmatpush2.msra.mxu0 0.0
    %1771 = vmatprep.subr.mxu0 0.0
    %1772 = vmatpush2.msra.mxu0 0.0
    %1773 = vmatprep.subr.mxu0 0.0
    %1774 = vmatpush2.msra.mxu0 0.0
    %1775 = vmatprep.subr.mxu0 0.0
    %1776 = vmatpush2.msra.mxu0 0.0
    %1777 = vmatprep.subr.mxu0 0.0
    %1778 = vmatpush2.msra.mxu0 0.0
    %1779 = vmatprep.subr.mxu0 0.0
    %1780 = vmatpush2.msra.mxu0 0.0
    %1781 = vmatprep.subr.mxu0 0.0
    %1782 = vmatpush2.msra.mxu0 0.0
    %1783 = vmatprep.subr.mxu0 0.0
    %1784 = vmatpush2.msra.mxu0 0.0
    %1785 = vmatprep.mubr.f32.mxu0 0.0
    %1786 = vmatmul.mubr.f32.gmra.mxu0 %v1719
    %v1787 = vpop.f32.mrf.mxu0
    %v1788 = vadd.f32 %v97, %v1787
    %v1789 = vpop.f32.mrf.mxu0
    %1790 = vdwg.mxu0
    %v1791 = vld [vmem:[%s392] sm:$0x3]
    %v1792 = vxor.u32 %v1788, 2147483648
    %v1793 = vmul.f32 %v1792, 1.442695
    %v1794 = vpow.pop %v1793
    %v1795 = vadd.f32 %v1794, 1.0
    %v1796 = vrcp.pop %v1795
    %v1797 = vmul.f32 1.0, %v1796
    %v1798 = vtanh.pop %v1788
    %1800 = vrot.lane.b32.xlu0 %v1791, 32
    %v1801 = vpop.permute.xlu0 %1800
    %v1803 = vmul.f32 %v1797, %v1801
    %1805 = vrot.lane.b32.xlu0 %v1798, 32
    %v1806 = vpop.permute.xlu0 %1805
    %v1808 = vmul.f32 %v1797, %v1806
    %1810 = vrot.lane.b32.xlu0 %v1808, 32
    %v1811 = vpop.permute.xlu0 %1810
    %v1813 = vadd.f32 %v1803, %v1811
    %v1814 = vtanh.pop %v1813
    %1816 = vrot.lane.b32.xlu0 %v1814, 32
    %v1817 = vpop.permute.xlu0 %1816
    %v1819 = vmul.f32 %v1797, %v1817
    %1821 = vrot.lane.b32.xlu0 %v1819, 64
    %v1822 = vpop.permute.xlu0 %1821
    %1824 = vst.msk [vmem:[%s311] sm:$0x3] %vm304, %v1822
    %1826 = vrot.lane.b32.xlu0 %v1813, 96
    %v1827 = vpop.permute.xlu0 %1826
    %1829 = vst.msk [vmem:[%s392] sm:$0x3] %vm304, %v1827
    %v1830 = vld [vmem:[#allocation4 + $0xe] sm:$0x3]
    %v1831 = vld [vmem:[#allocation2] sm:$0x3]
    %v1833 = vsel %vm196, %v1831, 0
    %1835 = vmatprep.subr.mxu0 0.0
    %1836 = vmatpush1.msra.mxu0 0.0
    %1837 = vmatprep.subr.mxu0 0.0
    %1838 = vmatpush1.msra.mxu0 0.0
    %1839 = vmatprep.subr.mxu0 0.0
    %1840 = vmatpush1.msra.mxu0 0.0
    %1841 = vmatprep.subr.mxu0 0.0
    %1842 = vmatpush1.msra.mxu0 0.0
    %1843 = vmatprep.subr.mxu0 0.0
    %1844 = vmatpush1.msra.mxu0 0.0
    %1845 = vmatprep.subr.mxu0 0.0
    %1846 = vmatpush1.msra.mxu0 0.0
    %1847 = vmatprep.subr.mxu0 0.0
    %1848 = vmatpush1.msra.mxu0 0.0
    %1849 = vmatprep.subr.mxu0 0.0
    %1850 = vmatpush1.msra.mxu0 0.0
    %1851 = vmatprep.subr.mxu0 0.0
    %1852 = vmatpush1.msra.mxu0 0.0
    %1853 = vmatprep.subr.mxu0 0.0
    %1854 = vmatpush1.msra.mxu0 0.0
    %1855 = vmatprep.subr.mxu0 0.0
    %1856 = vmatpush1.msra.mxu0 0.0
    %1857 = vmatprep.subr.mxu0 0.0
    %1858 = vmatpush1.msra.mxu0 0.0
    %1859 = vmatprep.subr.mxu0 0.0
    %1860 = vmatpush1.msra.mxu0 %v83
    %1861 = vmatprep.subr.mxu0 0.0
    %1862 = vmatpush1.msra.mxu0 %v82
    %1863 = vmatprep.subr.mxu0 0.0
    %1864 = vmatpush1.msra.mxu0 %v81
    %1865 = vmatprep.subr.mxu0 0.0
    %1866 = vmatpush1.msra.mxu0 %v80
    %1867 = vmatprep.subr.mxu0 0.0
    %1868 = vmatpush2.msra.mxu0 0.0
    %1869 = vmatprep.subr.mxu0 0.0
    %1870 = vmatpush2.msra.mxu0 0.0
    %1871 = vmatprep.subr.mxu0 0.0
    %1872 = vmatpush2.msra.mxu0 0.0
    %1873 = vmatprep.subr.mxu0 0.0
    %1874 = vmatpush2.msra.mxu0 0.0
    %1875 = vmatprep.subr.mxu0 0.0
    %1876 = vmatpush2.msra.mxu0 0.0
    %1877 = vmatprep.subr.mxu0 0.0
    %1878 = vmatpush2.msra.mxu0 0.0
    %1879 = vmatprep.subr.mxu0 0.0
    %1880 = vmatpush2.msra.mxu0 0.0
    %1881 = vmatprep.subr.mxu0 0.0
    %1882 = vmatpush2.msra.mxu0 0.0
    %1883 = vmatprep.subr.mxu0 0.0
    %1884 = vmatpush2.msra.mxu0 0.0
    %1885 = vmatprep.subr.mxu0 0.0
    %1886 = vmatpush2.msra.mxu0 0.0
    %1887 = vmatprep.subr.mxu0 0.0
    %1888 = vmatpush2.msra.mxu0 0.0
    %1889 = vmatprep.subr.mxu0 0.0
    %1890 = vmatpush2.msra.mxu0 0.0
    %1891 = vmatprep.subr.mxu0 0.0
    %1892 = vmatpush2.msra.mxu0 0.0
    %1893 = vmatprep.subr.mxu0 0.0
    %1894 = vmatpush2.msra.mxu0 0.0
    %1895 = vmatprep.subr.mxu0 0.0
    %1896 = vmatpush2.msra.mxu0 0.0
    %1897 = vmatprep.subr.mxu0 0.0
    %1898 = vmatpush2.msra.mxu0 0.0
    %1899 = vmatprep.mubr.f32.mxu0 0.0
    %1900 = vmatmul.mubr.f32.gmra.mxu0 %v1833
    %v1901 = vpop.f32.mrf.mxu0
    %v1902 = vadd.f32 0.0, %v1901
    %v1903 = vpop.f32.mrf.mxu0
    %1904 = vdwg.mxu0
    %v1905 = vadd.f32 %v1830, %v1902
    %v1906 = vld [vmem:[#allocation3] sm:$0x3]
    %v1907 = vxor.u32 %v1905, 2147483648
    %v1908 = vmul.f32 %v1907, 1.442695
    %v1909 = vpow.pop %v1908
    %v1910 = vadd.f32 %v1909, 1.0
    %v1911 = vrcp.pop %v1910
    %v1912 = vmul.f32 1.0, %v1911
    %v1913 = vtanh.pop %v1905
    %1915 = vrot.lane.b32.xlu0 %v1906, 32
    %v1916 = vpop.permute.xlu0 %1915
    %v1918 = vmul.f32 %v1912, %v1916
    %1920 = vrot.lane.b32.xlu0 %v1913, 32
    %v1921 = vpop.permute.xlu0 %1920
    %v1923 = vmul.f32 %v1912, %v1921
    %1925 = vrot.lane.b32.xlu0 %v1923, 32
    %v1926 = vpop.permute.xlu0 %1925
    %v1928 = vadd.f32 %v1918, %v1926
    %v1929 = vtanh.pop %v1928
    %1931 = vrot.lane.b32.xlu0 %v1929, 32
    %v1932 = vpop.permute.xlu0 %1931
    %v1934 = vmul.f32 %v1912, %v1932
    %1936 = vrot.lane.b32.xlu0 %v1934, 64
    %v1937 = vpop.permute.xlu0 %1936
    %1939 = vst.msk [vmem:[#allocation2] sm:$0x3] %vm304, %v1937
    %1941 = vrot.lane.b32.xlu0 %v1928, 96
    %v1942 = vpop.permute.xlu0 %1941
    %1944 = vst.msk [vmem:[#allocation3] sm:$0x3] %vm304, %v1942
    %v1945 = vld [vmem:[%s311] sm:$0x3]
    %1947 = vrot.lane.b32.xlu0 %v1945, 32
    %v1948 = vpop.permute.xlu0 %1947
    %v1950 = vsel %vm196, %v1937, %v1948
    %v1952 = vsel %vm318, %v1950, 0
    %1954 = vmatprep.subr.mxu0 0.0
    %1955 = vmatpush1.msra.mxu0 0.0
    %1956 = vmatprep.subr.mxu0 0.0
    %1957 = vmatpush1.msra.mxu0 0.0
    %1958 = vmatprep.subr.mxu0 0.0
    %1959 = vmatpush1.msra.mxu0 0.0
    %1960 = vmatprep.subr.mxu0 0.0
    %1961 = vmatpush1.msra.mxu0 0.0
    %1962 = vmatprep.subr.mxu0 0.0
    %1963 = vmatpush1.msra.mxu0 0.0
    %1964 = vmatprep.subr.mxu0 0.0
    %1965 = vmatpush1.msra.mxu0 0.0
    %1966 = vmatprep.subr.mxu0 0.0
    %1967 = vmatpush1.msra.mxu0 0.0
    %1968 = vmatprep.subr.mxu0 0.0
    %1969 = vmatpush1.msra.mxu0 0.0
    %1970 = vmatprep.subr.mxu0 0.0
    %1971 = vmatpush1.msra.mxu0 %v91
    %1972 = vmatprep.subr.mxu0 0.0
    %1973 = vmatpush1.msra.mxu0 %v90
    %1974 = vmatprep.subr.mxu0 0.0
    %1975 = vmatpush1.msra.mxu0 %v89
    %1976 = vmatprep.subr.mxu0 0.0
    %1977 = vmatpush1.msra.mxu0 %v88
    %1978 = vmatprep.subr.mxu0 0.0
    %1979 = vmatpush1.msra.mxu0 %v87
    %1980 = vmatprep.subr.mxu0 0.0
    %1981 = vmatpush1.msra.mxu0 %v86
    %1982 = vmatprep.subr.mxu0 0.0
    %1983 = vmatpush1.msra.mxu0 %v85
    %1984 = vmatprep.subr.mxu0 0.0
    %1985 = vmatpush1.msra.mxu0 %v84
    %1986 = vmatprep.subr.mxu0 0.0
    %1987 = vmatpush2.msra.mxu0 0.0
    %1988 = vmatprep.subr.mxu0 0.0
    %1989 = vmatpush2.msra.mxu0 0.0
    %1990 = vmatprep.subr.mxu0 0.0
    %1991 = vmatpush2.msra.mxu0 0.0
    %1992 = vmatprep.subr.mxu0 0.0
    %1993 = vmatpush2.msra.mxu0 0.0
    %1994 = vmatprep.subr.mxu0 0.0
    %1995 = vmatpush2.msra.mxu0 0.0
    %1996 = vmatprep.subr.mxu0 0.0
    %1997 = vmatpush2.msra.mxu0 0.0
    %1998 = vmatprep.subr.mxu0 0.0
    %1999 = vmatpush2.msra.mxu0 0.0
    %2000 = vmatprep.subr.mxu0 0.0
    %2001 = vmatpush2.msra.mxu0 0.0
    %2002 = vmatprep.subr.mxu0 0.0
    %2003 = vmatpush2.msra.mxu0 0.0
    %2004 = vmatprep.subr.mxu0 0.0
    %2005 = vmatpush2.msra.mxu0 0.0
    %2006 = vmatprep.subr.mxu0 0.0
    %2007 = vmatpush2.msra.mxu0 0.0
    %2008 = vmatprep.subr.mxu0 0.0
    %2009 = vmatpush2.msra.mxu0 0.0
    %2010 = vmatprep.subr.mxu0 0.0
    %2011 = vmatpush2.msra.mxu0 0.0
    %2012 = vmatprep.subr.mxu0 0.0
    %2013 = vmatpush2.msra.mxu0 0.0
    %2014 = vmatprep.subr.mxu0 0.0
    %2015 = vmatpush2.msra.mxu0 0.0
    %2016 = vmatprep.subr.mxu0 0.0
    %2017 = vmatpush2.msra.mxu0 0.0
    %2018 = vmatprep.mubr.f32.mxu0 0.0
    %2019 = vmatmul.mubr.f32.gmra.mxu0 %v1952
    %v2020 = vpop.f32.mrf.mxu0
    %v2021 = vadd.f32 %v97, %v2020
    %v2022 = vpop.f32.mrf.mxu0
    %2023 = vdwg.mxu0
    %v2024 = vld [vmem:[%s392] sm:$0x3]
    %v2025 = vxor.u32 %v2021, 2147483648
    %v2026 = vmul.f32 %v2025, 1.442695
    %v2027 = vpow.pop %v2026
    %v2028 = vadd.f32 %v2027, 1.0
    %v2029 = vrcp.pop %v2028
    %v2030 = vmul.f32 1.0, %v2029
    %v2031 = vtanh.pop %v2021
    %2033 = vrot.lane.b32.xlu0 %v2024, 32
    %v2034 = vpop.permute.xlu0 %2033
    %v2036 = vmul.f32 %v2030, %v2034
    %2038 = vrot.lane.b32.xlu0 %v2031, 32
    %v2039 = vpop.permute.xlu0 %2038
    %v2041 = vmul.f32 %v2030, %v2039
    %2043 = vrot.lane.b32.xlu0 %v2041, 32
    %v2044 = vpop.permute.xlu0 %2043
    %v2046 = vadd.f32 %v2036, %v2044
    %v2047 = vtanh.pop %v2046
    %2049 = vrot.lane.b32.xlu0 %v2047, 32
    %v2050 = vpop.permute.xlu0 %2049
    %v2052 = vmul.f32 %v2030, %v2050
    %2054 = vrot.lane.b32.xlu0 %v2052, 64
    %v2055 = vpop.permute.xlu0 %2054
    %2057 = vst.msk [vmem:[%s311] sm:$0x3] %vm304, %v2055
    %2059 = vrot.lane.b32.xlu0 %v2046, 96
    %v2060 = vpop.permute.xlu0 %2059
    %2062 = vst.msk [vmem:[%s392] sm:$0x3] %vm304, %v2060
    // Predicated region
    $region50: #{tpu_custom_call.1} parent=1 // pred_check
      %p2063 = pneg %p71
    $region51: #{tpu_custom_call.1} parent=1 // pred_check_branch
      %2065 = sbr.rel (%p2063) target = $region53
    $region52: #{tpu_custom_call.1} parent=1 // pred_region
      %v2066 = vld [vmem:[%s311] sm:$0x3]
      %v2067 = vld [vmem:[%s6] sm:$0xff]
      %v2068 = vld [vmem:[%s6 + $0x8] sm:$0xff]
      %v2069 = vld [vmem:[%s6 + $0x10] sm:$0xff]
      %v2070 = vld [vmem:[%s6 + $0x18] sm:$0xff]
      %v2071 = vld [vmem:[%s7] sm:$0x1]
      %v2073 = vlaneseq
      %v2074 = vshrl.u32 %v2073, 7
      %v2075 = vsub.s32 0, %v2074
      %v2076 = vrot.slane %v2071, %v2075
      %v2079 = vsel %vm196, %v2066, 0
      %2081 = vmatprep.subr.mxu0 0.0
      %2082 = vmatpush1.msra.mxu0 0.0
      %2083 = vmatprep.subr.mxu0 0.0
      %2084 = vmatpush1.msra.mxu0 0.0
      %2085 = vmatprep.subr.mxu0 0.0
      %2086 = vmatpush1.msra.mxu0 0.0
      %2087 = vmatprep.subr.mxu0 0.0
      %2088 = vmatpush1.msra.mxu0 0.0
      %2089 = vmatprep.subr.mxu0 0.0
      %2090 = vmatpush1.msra.mxu0 0.0
      %2091 = vmatprep.subr.mxu0 0.0
      %2092 = vmatpush1.msra.mxu0 0.0
      %2093 = vmatprep.subr.mxu0 0.0
      %2094 = vmatpush1.msra.mxu0 0.0
      %2095 = vmatprep.subr.mxu0 0.0
      %2096 = vmatpush1.msra.mxu0 0.0
      %2097 = vmatprep.subr.mxu0 0.0
      %2098 = vmatpush1.msra.mxu0 0.0
      %2099 = vmatprep.subr.mxu0 0.0
      %2100 = vmatpush1.msra.mxu0 0.0
      %2101 = vmatprep.subr.mxu0 0.0
      %2102 = vmatpush1.msra.mxu0 0.0
      %2103 = vmatprep.subr.mxu0 0.0
      %2104 = vmatpush1.msra.mxu0 0.0
      %2105 = vmatprep.subr.mxu0 0.0
      %2106 = vmatpush1.msra.mxu0 %v2070
      %2107 = vmatprep.subr.mxu0 0.0
      %2108 = vmatpush1.msra.mxu0 %v2069
      %2109 = vmatprep.subr.mxu0 0.0
      %2110 = vmatpush1.msra.mxu0 %v2068
      %2111 = vmatprep.subr.mxu0 0.0
      %2112 = vmatpush1.msra.mxu0 %v2067
      %2113 = vmatprep.subr.mxu0 0.0
      %2114 = vmatpush2.msra.mxu0 0.0
      %2115 = vmatprep.subr.mxu0 0.0
      %2116 = vmatpush2.msra.mxu0 0.0
      %2117 = vmatprep.subr.mxu0 0.0
      %2118 = vmatpush2.msra.mxu0 0.0
      %2119 = vmatprep.subr.mxu0 0.0
      %2120 = vmatpush2.msra.mxu0 0.0
      %2121 = vmatprep.subr.mxu0 0.0
      %2122 = vmatpush2.msra.mxu0 0.0
      %2123 = vmatprep.subr.mxu0 0.0
      %2124 = vmatpush2.msra.mxu0 0.0
      %2125 = vmatprep.subr.mxu0 0.0
      %2126 = vmatpush2.msra.mxu0 0.0
      %2127 = vmatprep.subr.mxu0 0.0
      %2128 = vmatpush2.msra.mxu0 0.0
      %2129 = vmatprep.subr.mxu0 0.0
      %2130 = vmatpush2.msra.mxu0 0.0
      %2131 = vmatprep.subr.mxu0 0.0
      %2132 = vmatpush2.msra.mxu0 0.0
      %2133 = vmatprep.subr.mxu0 0.0
      %2134 = vmatpush2.msra.mxu0 0.0
      %2135 = vmatprep.subr.mxu0 0.0
      %2136 = vmatpush2.msra.mxu0 0.0
      %2137 = vmatprep.subr.mxu0 0.0
      %2138 = vmatpush2.msra.mxu0 0.0
      %2139 = vmatprep.subr.mxu0 0.0
      %2140 = vmatpush2.msra.mxu0 0.0
      %2141 = vmatprep.subr.mxu0 0.0
      %2142 = vmatpush2.msra.mxu0 0.0
      %2143 = vmatprep.subr.mxu0 0.0
      %2144 = vmatpush2.msra.mxu0 0.0
      %2145 = vmatprep.mubr.f32.mxu0 0.0
      %2146 = vmatmul.mubr.f32.gmra.mxu0 %v2079
      %v2147 = vpop.f32.mrf.mxu0
      %v2148 = vadd.f32 %v2076, %v2147
      %v2149 = vpop.f32.mrf.mxu0
      %2150 = vdwg.mxu0
      %vm2151 = vcmask 25600
      %2152 = vst.msk [vmem:[#allocation11] sm:$0x3] %vm2151, %v2148
    $region53: #{tpu_custom_call.1} parent=1 // pred_fallthru
      _
    // Predicated region
    $region54: #{tpu_custom_call.1} parent=1 // pred_check
      _
    $region55: #{tpu_custom_call.1} parent=1 // pred_check_branch
      %2154 = sbr.rel (0) target = $region57
    $region56: #{tpu_custom_call.1} parent=1 // pred_region
      %s2156 = ssub.s32 32, 32
      %2157 = vsyncadd [#allocation7], %s2156
      %s2159 = sshll.u32 [#allocation11], 4
      %s2160 = int_to_ptr.vmem [resolvable:$true] %s2159
      %2162 = dma.vmem_to_hbm [thread:$0]  %s2160, 32, %s8, [#allocation7]
    $region57: #{tpu_custom_call.1} parent=1 // pred_fallthru
      _
    // Predicated region
    $region58: #{tpu_custom_call.1} parent=1 // pred_check
      _
    $region59: #{tpu_custom_call.1} parent=1 // pred_check_branch
      %2164 = sbr.rel (0) target = $region61
    $region60: #{tpu_custom_call.1} parent=1 // pred_region
      %2165 = dma.done [#allocation7], 32
    $region61: #{tpu_custom_call.1} parent=1 // pred_fallthru
      _
    %2166 = vsyncpa [#allocation6], 1
    %2167 = vsyncpa [#allocation9], 1
    %2168 = vsyncpa [#allocation7], 1

</llo_original>
